<compile_context>
chip_gen: v6e
topology: v6e:2x2x1
jax: 0.10.0
libtpu: 0.0.40
codegen_flags: <defaults>
</compile_context>

<pallas_src>
import math

import jax
import jax.numpy as jnp
from jax.experimental import pallas as pl
from jax.experimental.pallas import tpu as pltpu


def _make_gru_kernel(t_actual, t_blk, hp, needs_mask, unroll):
    hp3 = 3 * hp

    def kernel(x_ref, wih_ref, bi_ref, whh_ref, bhn_ref, h_ref):
        # x_ref  : (t_blk, b_blk, F)   raw inputs (time-major)
        # wih_ref: (F, 3*Hp)           padded input->hidden weights, gate order r|z|n
        # bi_ref : (1, 3*Hp)           b_ih (all gates) + b_hh (r,z gates) folded
        # whh_ref: (Hp, 3*Hp)          padded hidden->hidden weights
        # bhn_ref: (1, Hp)             b_hn (stays inside r * (W_hn h + b_hn))
        # h_ref  : (b_blk, Hp)         resident output block == carried hidden state
        ti = pl.program_id(1)

        @pl.when(ti == 0)
        def _init():
            h_ref[...] = jnp.zeros_like(h_ref)

        h0 = h_ref[...]
        b_blk = h0.shape[0]
        # Hoisted broadcasts (JAX does not CSE broadcast_in_dim inside the loop).
        bias_i = jnp.broadcast_to(bi_ref[...], (b_blk, hp3))
        bias_hn = jnp.broadcast_to(bhn_ref[...], (b_blk, hp))

        def step(i, h):
            x_t = x_ref[i]                                          # (b_blk, F)
            # Fused input projection: independent of h, so it pipelines off the
            # serial recurrence path; the MXU is otherwise idle.
            gi = jnp.dot(x_t, wih_ref[...],
                         preferred_element_type=jnp.float32) + bias_i
            gh = jnp.dot(h.astype(whh_ref.dtype), whh_ref[...],
                         preferred_element_type=jnp.float32)
            # 128-aligned per-gate slices -> zero-cost vreg selection.
            r = jax.nn.sigmoid(gi[:, :hp] + gh[:, :hp])
            z = jax.nn.sigmoid(gi[:, hp:2 * hp] + gh[:, hp:2 * hp])
            n = jnp.tanh(gi[:, 2 * hp:] + r * (gh[:, 2 * hp:] + bias_hn))
            h_new = n + z * (h - n)                                 # == (1-z)*n + z*h
            if needs_mask:
                # Only emitted when T was padded up to a multiple of t_blk.
                h_new = jnp.where(ti * t_blk + i < t_actual, h_new, h)
            return h_new

        h_ref[...] = jax.lax.fori_loop(0, t_blk, step, h0, unroll=unroll)

    return kernel


def gru_net_forward(x, w_ih, w_hh, b_ih, b_hh, *, t_blk=32,
                    split_batch_across_cores=False,
                    storage_dtype=jnp.float32):
    """Equivalent of GRUNet.forward (unidirectional): returns h_n.squeeze(0).

    x    : (B, T, F)  any float dtype (cast to f32, as in the module)
    w_ih : (3H, F)    PyTorch layout, gate order r|z|n
    w_hh : (3H, H)
    b_ih : (3H,)
    b_hh : (3H,)
    split_batch_across_cores: enable only on v7x (2 TensorCores per chip).
    storage_dtype: jnp.bfloat16 halves x/W HBM+VMEM traffic (f32 accumulation is
                   kept); default f32 for exact parity with the reference.
    """
    x = x.astype(jnp.float32)
    B, T, F = x.shape
    H = w_hh.shape[1]
    if T == 0:  # empty sequence -> torch returns the zero initial state
        return jnp.zeros((B, H), jnp.float32)

    Hp = 128 * pl.cdiv(H, 128)          # lane-dense per-gate width
    B_pad = 8 * pl.cdiv(B, 8)           # sublane-dense batch

    # Batch split only helps on 2-TC chips (v7x); on v5e/v6e it just serializes
    # with worse MXU M-dim and doubled grid overhead.
    if split_batch_across_cores and B_pad >= 16 and B_pad % 16 == 0:
        b_blk = B_pad // 2
    else:
        b_blk = B_pad
    nb = B_pad // b_blk

    t_blk = max(1, min(t_blk, T))
    itemsize = jnp.dtype(storage_dtype).itemsize

    def _vmem_need(tb):
        bb8 = 8 * pl.cdiv(b_blk, 8)
        f_lanes = 128 * pl.cdiv(F, 128)
        x_tile = tb * bb8 * f_lanes * itemsize            # one x pipeline buffer
        wih_t = 8 * pl.cdiv(F, 8) * 3 * Hp * itemsize
        whh_t = Hp * 3 * Hp * itemsize
        bias_t = 8 * (3 * Hp + Hp) * 4
        h_t = bb8 * Hp * 4
        # x double-buffered; grid-invariant weights/biases counted twice to be
        # safe about default pipelining; h resident (+1 writeback buffer).
        return 2 * x_tile + 2 * (wih_t + whh_t + bias_t) + 2 * h_t

    VMEM_BUDGET = 44 * 2**20                               # fits v7x's 64 MiB VMEM
    while _vmem_need(t_blk) > VMEM_BUDGET and t_blk > 8:
        t_blk = max(8, t_blk // 2)
    nt = pl.cdiv(T, t_blk)
    T_pad = nt * t_blk
    vmem_limit = int(min(64 * 2**20, max(2 * _vmem_need(t_blk), 16 * 2**20)))

    # ---- parameter prep (tiny, one-time) ----
    w_ih_g = w_ih.reshape(3, H, F).astype(jnp.float32)
    w_hh_g = w_hh.reshape(3, H, H).astype(jnp.float32)
    b_ih_g = b_ih.reshape(3, H).astype(jnp.float32)
    b_hh_g = b_hh.reshape(3, H).astype(jnp.float32)

    # Gate g occupies lanes [g*Hp, g*Hp+H); padded lanes are zero, so the padded
    # lanes of h provably stay zero throughout the recurrence.
    wih_p = jnp.zeros((F, 3 * Hp), jnp.float32)
    whh_p = jnp.zeros((Hp, 3 * Hp), jnp.float32)
    for g in range(3):
        wih_p = wih_p.at[:, g * Hp:g * Hp + H].set(w_ih_g[g].T)
        whh_p = whh_p.at[:H, g * Hp:g * Hp + H].set(w_hh_g[g].T)

    # Fold b_ih (all gates) + b_hh (r, z gates) into one per-step additive row;
    # b_hn stays separate (it sits inside r * (W_hn h + b_hn)).
    bsum = b_ih_g + b_hh_g.at[2].set(0.0)
    bias_i = jnp.zeros((1, 3 * Hp), jnp.float32)
    for g in range(3):
        bias_i = bias_i.at[0, g * Hp:g * Hp + H].set(bsum[g])
    bhh_n = jnp.zeros((1, Hp), jnp.float32).at[0, :H].set(b_hh_g[2])

    # ---- x: (B, T, F) -> time-major (T_pad, B_pad, F), zero-padded ----
    x_tm = jnp.transpose(x, (1, 0, 2))
    x_tm = jnp.pad(x_tm, ((0, T_pad - T), (0, B_pad - B), (0, 0)))

    x_tm = x_tm.astype(storage_dtype)
    wih_p = wih_p.astype(storage_dtype)
    whh_p = whh_p.astype(storage_dtype)

    needs_mask = (T_pad != T)
    # Full unroll only while h + per-step intermediates comfortably fit the
    # 64-vreg file; otherwise unroll 8 to avoid spills on the serial chain.
    unroll = True if (b_blk * Hp <= 8192 and t_blk <= 64) else 8
    kernel = _make_gru_kernel(T, t_blk, Hp, needs_mask, unroll)

    # TODO(synk): on v7x, pipeline_mode=pl.Buffered(1) on the four grid-invariant
    # weight/bias specs would reclaim their second pipeline buffer (matters for
    # large Hp); omitted here to keep the call maximally portable.
    h_pad = pl.pallas_call(
        kernel,
        out_shape=jax.ShapeDtypeStruct((B_pad, Hp), jnp.float32),
        grid_spec=pltpu.PrefetchScalarGridSpec(
            num_scalar_prefetch=0,
            grid=(nb, nt),
            in_specs=[
                pl.BlockSpec((t_blk, b_blk, F), lambda b, t: (t, b, 0)),   # x
                pl.BlockSpec((F, 3 * Hp), lambda b, t: (0, 0)),            # W_ih^T
                pl.BlockSpec((1, 3 * Hp), lambda b, t: (0, 0)),            # bias_i
                pl.BlockSpec((Hp, 3 * Hp), lambda b, t: (0, 0)),           # W_hh^T
                pl.BlockSpec((1, Hp), lambda b, t: (0, 0)),                # b_hn
            ],
            out_specs=pl.BlockSpec((b_blk, Hp), lambda b, t: (b, 0)),
        ),
        compiler_params=pltpu.CompilerParams(
            dimension_semantics=("parallel", "arbitrary"),
            vmem_limit_bytes=vmem_limit,
        ),
    )(x_tm, wih_p, bias_i, whh_p, bhh_n)
    # TODO(synk): bidirectional branch (is_bidirectional=True, h_n.mean(0)) not
    # implemented; module default is unidirectional.
    return h_pad[:B, :H]


def _reference_gru(x, w_ih, w_hh, b_ih, b_hh):
    """Pure-JAX reference (matches torch.nn.GRU semantics)."""
    x = x.astype(jnp.float32)
    B, T, F = x.shape
    H = w_hh.shape[1]
    h = jnp.zeros((B, H), jnp.float32)
    for t in range(T):
        x_t = x[:, t, :]
        gi = x_t @ w_ih.T + b_ih
        gh = h @ w_hh.T + b_hh
        r = jax.nn.sigmoid(gi[:, :H] + gh[:, :H])
        z = jax.nn.sigmoid(gi[:, H:2 * H] + gh[:, H:2 * H])
        n = jnp.tanh(gi[:, 2 * H:] + r * gh[:, 2 * H:])
        h = (1.0 - z) * n + z * h
    return h


if __name__ == "__main__":
    B, T, F, H = 2, 8, 4, 32

    key = jax.random.PRNGKey(0)
    k_x, k_wih, k_whh, k_bih, k_bhh, k_x2 = jax.random.split(key, 6)

    # Deterministic parameter init, mimicking PyTorch's U(-1/sqrt(H), 1/sqrt(H)).
    bound = 1.0 / math.sqrt(H)
    w_ih = jax.random.uniform(k_wih, (3 * H, F), jnp.float32, -bound, bound)
    w_hh = jax.random.uniform(k_whh, (3 * H, H), jnp.float32, -bound, bound)
    b_ih = jax.random.uniform(k_bih, (3 * H,), jnp.float32, -bound, bound)
    b_hh = jax.random.uniform(k_bhh, (3 * H,), jnp.float32, -bound, bound)

    # Main case: B=2, T=8, F=4, H=32 (no time padding, batch padded 2->8).
    x = jax.random.normal(k_x, (B, T, F), jnp.float32)
    h_n = gru_net_forward(x, w_ih, w_hh, b_ih, b_hh)
    jax.block_until_ready(h_n)
    ref = _reference_gru(x, w_ih, w_hh, b_ih, b_hh)
    assert h_n.shape == (B, H)
    assert jnp.allclose(h_n, ref, atol=1e-4, rtol=1e-4), "mismatch vs reference"

    # Second case: exercises multi-block recurrence (resident h across grid steps)
    # and the T-padding mask path (T=11, t_blk=4 -> T_pad=12).
    x2 = jax.random.normal(k_x2, (B, 11, F), jnp.float32)
    h_n2 = gru_net_forward(x2, w_ih, w_hh, b_ih, b_hh, t_blk=4)
    jax.block_until_ready(h_n2)
    ref2 = _reference_gru(x2, w_ih, w_hh, b_ih, b_hh)
    assert jnp.allclose(h_n2, ref2, atol=1e-4, rtol=1e-4), "mismatch vs reference (padded T)"

    print("KERNEL_OK")
</pallas_src>

<mosaic_0001>
module attributes {stable_mosaic.version = 11 : i64} {
  func.func @kernel(%arg0: i32, %arg1: i32, %arg2: memref<8x8x4xf32, #tpu.memory_space<vmem>>, %arg3: memref<4x384xf32, #tpu.memory_space<vmem>>, %arg4: memref<1x384xf32, #tpu.memory_space<vmem>>, %arg5: memref<128x384xf32, #tpu.memory_space<vmem>>, %arg6: memref<1x128xf32, #tpu.memory_space<vmem>>, %arg7: memref<8x128xf32, #tpu.memory_space<vmem>>) attributes {dimension_semantics = [#tpu.dimension_semantics<parallel>, #tpu.dimension_semantics<arbitrary>], iteration_bounds = array<i64: 1, 1>, scalar_prefetch = 0 : i64, scratch_operands = 0 : i64, tpu.core_type = #tpu.core_type<tc>, window_params = [{transform_indices = @transform_0, window_bounds = array<i64: 8, 8, 4>}, {pipeline_mode = #tpu.pipeline_mode<synchronous>, transform_indices = @transform_1, window_bounds = array<i64: 4, 384>}, {pipeline_mode = #tpu.pipeline_mode<synchronous>, transform_indices = @transform_2, window_bounds = array<i64: 1, 384>}, {pipeline_mode = #tpu.pipeline_mode<synchronous>, transform_indices = @transform_3, window_bounds = array<i64: 128, 384>}, {pipeline_mode = #tpu.pipeline_mode<synchronous>, transform_indices = @transform_4, window_bounds = array<i64: 1, 128>}, {transform_indices = @transform_5, window_bounds = array<i64: 8, 128>}]} {
    %c0_i32 = arith.constant 0 : i32
    %0 = arith.cmpi eq, %arg1, %c0_i32 : i32
    %1 = arith.extui %0 : i1 to i32
    %c0_i32_0 = arith.constant 0 : i32
    %2 = arith.cmpi ne, %1, %c0_i32_0 : i32
    scf.if %2 {
      %cst_88 = arith.constant 0.000000e+00 : f32
      %275 = vector.broadcast %cst_88 : f32 to vector<8x128xf32>
      %c0_89 = arith.constant 0 : index
      %c0_90 = arith.constant 0 : index
      %276 = vector.load %arg7[%c0_89, %c0_90] : memref<8x128xf32, #tpu.memory_space<vmem>>, vector<8x128xf32>
      tpu.vector_store %arg7[%c0_89, %c0_90], %275 {strides = array<i32>} : memref<8x128xf32, #tpu.memory_space<vmem>>, vector<8x128xf32>,
    } else {
    }
    %c0 = arith.constant 0 : index
    %c0_1 = arith.constant 0 : index
    %3 = vector.load %arg7[%c0, %c0_1] : memref<8x128xf32, #tpu.memory_space<vmem>>, vector<8x128xf32>
    %c0_2 = arith.constant 0 : index
    %c0_3 = arith.constant 0 : index
    %4 = vector.load %arg4[%c0_2, %c0_3] : memref<1x384xf32, #tpu.memory_space<vmem>>, vector<1x384xf32>
    %5 = vector.shape_cast %4 : vector<1x384xf32> to vector<1x384xf32>
    %6 = vector.broadcast %5 : vector<1x384xf32> to vector<8x384xf32>
    %c0_4 = arith.constant 0 : index
    %c0_5 = arith.constant 0 : index
    %7 = vector.load %arg6[%c0_4, %c0_5] : memref<1x128xf32, #tpu.memory_space<vmem>>, vector<1x128xf32>
    %8 = vector.shape_cast %7 : vector<1x128xf32> to vector<1x128xf32>
    %9 = vector.broadcast %8 : vector<1x128xf32> to vector<8x128xf32>
    %c0_i32_6 = arith.constant 0 : i32
    %10 = arith.index_cast %c0_i32_6 : i32 to index
    %c0_7 = arith.constant 0 : index
    %c0_8 = arith.constant 0 : index
    %11 = vector.load %arg2[%10, %c0_7, %c0_8] : memref<8x8x4xf32, #tpu.memory_space<vmem>>, vector<1x8x4xf32>
    %12 = vector.shape_cast %11 : vector<1x8x4xf32> to vector<8x4xf32>
    %c0_9 = arith.constant 0 : index
    %c0_10 = arith.constant 0 : index
    %13 = vector.load %arg3[%c0_9, %c0_10] : memref<4x384xf32, #tpu.memory_space<vmem>>, vector<4x384xf32>
    %cst = arith.constant dense<0.000000e+00> : vector<8x384xf32>
    %14 = tpu.matmul %12, %13, %cst {dimension_numbers = #tpu.dot_dimension_numbers<[1], [0], [0], [1], [0, 0, 1, 1], [], []>} : vector<8x4xf32>, vector<4x384xf32>, vector<8x384xf32> -> vector<8x384xf32>
    %15 = arith.addf %14, %6 : vector<8x384xf32>
    %c0_11 = arith.constant 0 : index
    %c0_12 = arith.constant 0 : index
    %16 = vector.load %arg5[%c0_11, %c0_12] : memref<128x384xf32, #tpu.memory_space<vmem>>, vector<128x384xf32>
    %cst_13 = arith.constant dense<0.000000e+00> : vector<8x384xf32>
    %17 = tpu.matmul %3, %16, %cst_13 {dimension_numbers = #tpu.dot_dimension_numbers<[1], [0], [0], [1], [0, 0, 1, 1], [], []>} : vector<8x128xf32>, vector<128x384xf32>, vector<8x384xf32> -> vector<8x384xf32>
    %18 = vector.extract_strided_slice %15 {offsets = [0, 0], sizes = [8, 128], strides = [1, 1]} : vector<8x384xf32> to vector<8x128xf32>
    %19 = vector.extract_strided_slice %17 {offsets = [0, 0], sizes = [8, 128], strides = [1, 1]} : vector<8x384xf32> to vector<8x128xf32>
    %20 = arith.addf %18, %19 : vector<8x128xf32>
    %21 = arith.negf %20 : vector<8x128xf32>
    %22 = math.exp %21 : vector<8x128xf32>
    %cst_14 = arith.constant 1.000000e+00 : f32
    %23 = vector.broadcast %cst_14 : f32 to vector<8x128xf32>
    %24 = arith.addf %23, %22 : vector<8x128xf32>
    %25 = arith.divf %23, %24 : vector<8x128xf32>
    %26 = vector.extract_strided_slice %15 {offsets = [0, 128], sizes = [8, 128], strides = [1, 1]} : vector<8x384xf32> to vector<8x128xf32>
    %27 = vector.extract_strided_slice %17 {offsets = [0, 128], sizes = [8, 128], strides = [1, 1]} : vector<8x384xf32> to vector<8x128xf32>
    %28 = arith.addf %26, %27 : vector<8x128xf32>
    %29 = arith.negf %28 : vector<8x128xf32>
    %30 = math.exp %29 : vector<8x128xf32>
    %cst_15 = arith.constant 1.000000e+00 : f32
    %31 = vector.broadcast %cst_15 : f32 to vector<8x128xf32>
    %32 = arith.addf %31, %30 : vector<8x128xf32>
    %33 = arith.divf %31, %32 : vector<8x128xf32>
    %34 = vector.extract_strided_slice %15 {offsets = [0, 256], sizes = [8, 128], strides = [1, 1]} : vector<8x384xf32> to vector<8x128xf32>
    %35 = vector.extract_strided_slice %17 {offsets = [0, 256], sizes = [8, 128], strides = [1, 1]} : vector<8x384xf32> to vector<8x128xf32>
    %36 = arith.addf %35, %9 : vector<8x128xf32>
    %37 = arith.mulf %25, %36 : vector<8x128xf32>
    %38 = arith.addf %34, %37 : vector<8x128xf32>
    %39 = math.tanh %38 : vector<8x128xf32>
    %40 = arith.subf %3, %39 : vector<8x128xf32>
    %41 = arith.mulf %33, %40 : vector<8x128xf32>
    %42 = arith.addf %39, %41 : vector<8x128xf32>
    %c1_i32 = arith.constant 1 : i32
    %43 = arith.index_cast %c1_i32 : i32 to index
    %c0_16 = arith.constant 0 : index
    %c0_17 = arith.constant 0 : index
    %44 = vector.load %arg2[%43, %c0_16, %c0_17] : memref<8x8x4xf32, #tpu.memory_space<vmem>>, vector<1x8x4xf32>
    %45 = vector.shape_cast %44 : vector<1x8x4xf32> to vector<8x4xf32>
    %c0_18 = arith.constant 0 : index
    %c0_19 = arith.constant 0 : index
    %46 = vector.load %arg3[%c0_18, %c0_19] : memref<4x384xf32, #tpu.memory_space<vmem>>, vector<4x384xf32>
    %cst_20 = arith.constant dense<0.000000e+00> : vector<8x384xf32>
    %47 = tpu.matmul %45, %46, %cst_20 {dimension_numbers = #tpu.dot_dimension_numbers<[1], [0], [0], [1], [0, 0, 1, 1], [], []>} : vector<8x4xf32>, vector<4x384xf32>, vector<8x384xf32> -> vector<8x384xf32>
    %48 = arith.addf %47, %6 : vector<8x384xf32>
    %c0_21 = arith.constant 0 : index
    %c0_22 = arith.constant 0 : index
    %49 = vector.load %arg5[%c0_21, %c0_22] : memref<128x384xf32, #tpu.memory_space<vmem>>, vector<128x384xf32>
    %cst_23 = arith.constant dense<0.000000e+00> : vector<8x384xf32>
    %50 = tpu.matmul %42, %49, %cst_23 {dimension_numbers = #tpu.dot_dimension_numbers<[1], [0], [0], [1], [0, 0, 1, 1], [], []>} : vector<8x128xf32>, vector<128x384xf32>, vector<8x384xf32> -> vector<8x384xf32>
    %51 = vector.extract_strided_slice %48 {offsets = [0, 0], sizes = [8, 128], strides = [1, 1]} : vector<8x384xf32> to vector<8x128xf32>
    %52 = vector.extract_strided_slice %50 {offsets = [0, 0], sizes = [8, 128], strides = [1, 1]} : vector<8x384xf32> to vector<8x128xf32>
    %53 = arith.addf %51, %52 : vector<8x128xf32>
    %54 = arith.negf %53 : vector<8x128xf32>
    %55 = math.exp %54 : vector<8x128xf32>
    %cst_24 = arith.constant 1.000000e+00 : f32
    %56 = vector.broadcast %cst_24 : f32 to vector<8x128xf32>
    %57 = arith.addf %56, %55 : vector<8x128xf32>
    %58 = arith.divf %56, %57 : vector<8x128xf32>
    %59 = vector.extract_strided_slice %48 {offsets = [0, 128], sizes = [8, 128], strides = [1, 1]} : vector<8x384xf32> to vector<8x128xf32>
    %60 = vector.extract_strided_slice %50 {offsets = [0, 128], sizes = [8, 128], strides = [1, 1]} : vector<8x384xf32> to vector<8x128xf32>
    %61 = arith.addf %59, %60 : vector<8x128xf32>
    %62 = arith.negf %61 : vector<8x128xf32>
    %63 = math.exp %62 : vector<8x128xf32>
    %cst_25 = arith.constant 1.000000e+00 : f32
    %64 = vector.broadcast %cst_25 : f32 to vector<8x128xf32>
    %65 = arith.addf %64, %63 : vector<8x128xf32>
    %66 = arith.divf %64, %65 : vector<8x128xf32>
    %67 = vector.extract_strided_slice %48 {offsets = [0, 256], sizes = [8, 128], strides = [1, 1]} : vector<8x384xf32> to vector<8x128xf32>
    %68 = vector.extract_strided_slice %50 {offsets = [0, 256], sizes = [8, 128], strides = [1, 1]} : vector<8x384xf32> to vector<8x128xf32>
    %69 = arith.addf %68, %9 : vector<8x128xf32>
    %70 = arith.mulf %58, %69 : vector<8x128xf32>
    %71 = arith.addf %67, %70 : vector<8x128xf32>
    %72 = math.tanh %71 : vector<8x128xf32>
    %73 = arith.subf %42, %72 : vector<8x128xf32>
    %74 = arith.mulf %66, %73 : vector<8x128xf32>
    %75 = arith.addf %72, %74 : vector<8x128xf32>
    %c2_i32 = arith.constant 2 : i32
    %76 = arith.index_cast %c2_i32 : i32 to index
    %c0_26 = arith.constant 0 : index
    %c0_27 = arith.constant 0 : index
    %77 = vector.load %arg2[%76, %c0_26, %c0_27] : memref<8x8x4xf32, #tpu.memory_space<vmem>>, vector<1x8x4xf32>
    %78 = vector.shape_cast %77 : vector<1x8x4xf32> to vector<8x4xf32>
    %c0_28 = arith.constant 0 : index
    %c0_29 = arith.constant 0 : index
    %79 = vector.load %arg3[%c0_28, %c0_29] : memref<4x384xf32, #tpu.memory_space<vmem>>, vector<4x384xf32>
    %cst_30 = arith.constant dense<0.000000e+00> : vector<8x384xf32>
    %80 = tpu.matmul %78, %79, %cst_30 {dimension_numbers = #tpu.dot_dimension_numbers<[1], [0], [0], [1], [0, 0, 1, 1], [], []>} : vector<8x4xf32>, vector<4x384xf32>, vector<8x384xf32> -> vector<8x384xf32>
    %81 = arith.addf %80, %6 : vector<8x384xf32>
    %c0_31 = arith.constant 0 : index
    %c0_32 = arith.constant 0 : index
    %82 = vector.load %arg5[%c0_31, %c0_32] : memref<128x384xf32, #tpu.memory_space<vmem>>, vector<128x384xf32>
    %cst_33 = arith.constant dense<0.000000e+00> : vector<8x384xf32>
    %83 = tpu.matmul %75, %82, %cst_33 {dimension_numbers = #tpu.dot_dimension_numbers<[1], [0], [0], [1], [0, 0, 1, 1], [], []>} : vector<8x128xf32>, vector<128x384xf32>, vector<8x384xf32> -> vector<8x384xf32>
    %84 = vector.extract_strided_slice %81 {offsets = [0, 0], sizes = [8, 128], strides = [1, 1]} : vector<8x384xf32> to vector<8x128xf32>
    %85 = vector.extract_strided_slice %83 {offsets = [0, 0], sizes = [8, 128], strides = [1, 1]} : vector<8x384xf32> to vector<8x128xf32>
    %86 = arith.addf %84, %85 : vector<8x128xf32>
    %87 = arith.negf %86 : vector<8x128xf32>
    %88 = math.exp %87 : vector<8x128xf32>
    %cst_34 = arith.constant 1.000000e+00 : f32
    %89 = vector.broadcast %cst_34 : f32 to vector<8x128xf32>
    %90 = arith.addf %89, %88 : vector<8x128xf32>
    %91 = arith.divf %89, %90 : vector<8x128xf32>
    %92 = vector.extract_strided_slice %81 {offsets = [0, 128], sizes = [8, 128], strides = [1, 1]} : vector<8x384xf32> to vector<8x128xf32>
    %93 = vector.extract_strided_slice %83 {offsets = [0, 128], sizes = [8, 128], strides = [1, 1]} : vector<8x384xf32> to vector<8x128xf32>
    %94 = arith.addf %92, %93 : vector<8x128xf32>
    %95 = arith.negf %94 : vector<8x128xf32>
    %96 = math.exp %95 : vector<8x128xf32>
    %cst_35 = arith.constant 1.000000e+00 : f32
    %97 = vector.broadcast %cst_35 : f32 to vector<8x128xf32>
    %98 = arith.addf %97, %96 : vector<8x128xf32>
    %99 = arith.divf %97, %98 : vector<8x128xf32>
    %100 = vector.extract_strided_slice %81 {offsets = [0, 256], sizes = [8, 128], strides = [1, 1]} : vector<8x384xf32> to vector<8x128xf32>
    %101 = vector.extract_strided_slice %83 {offsets = [0, 256], sizes = [8, 128], strides = [1, 1]} : vector<8x384xf32> to vector<8x128xf32>
    %102 = arith.addf %101, %9 : vector<8x128xf32>
    %103 = arith.mulf %91, %102 : vector<8x128xf32>
    %104 = arith.addf %100, %103 : vector<8x128xf32>
    %105 = math.tanh %104 : vector<8x128xf32>
    %106 = arith.subf %75, %105 : vector<8x128xf32>
    %107 = arith.mulf %99, %106 : vector<8x128xf32>
    %108 = arith.addf %105, %107 : vector<8x128xf32>
    %c3_i32 = arith.constant 3 : i32
    %109 = arith.index_cast %c3_i32 : i32 to index
    %c0_36 = arith.constant 0 : index
    %c0_37 = arith.constant 0 : index
    %110 = vector.load %arg2[%109, %c0_36, %c0_37] : memref<8x8x4xf32, #tpu.memory_space<vmem>>, vector<1x8x4xf32>
    %111 = vector.shape_cast %110 : vector<1x8x4xf32> to vector<8x4xf32>
    %c0_38 = arith.constant 0 : index
    %c0_39 = arith.constant 0 : index
    %112 = vector.load %arg3[%c0_38, %c0_39] : memref<4x384xf32, #tpu.memory_space<vmem>>, vector<4x384xf32>
    %cst_40 = arith.constant dense<0.000000e+00> : vector<8x384xf32>
    %113 = tpu.matmul %111, %112, %cst_40 {dimension_numbers = #tpu.dot_dimension_numbers<[1], [0], [0], [1], [0, 0, 1, 1], [], []>} : vector<8x4xf32>, vector<4x384xf32>, vector<8x384xf32> -> vector<8x384xf32>
    %114 = arith.addf %113, %6 : vector<8x384xf32>
    %c0_41 = arith.constant 0 : index
    %c0_42 = arith.constant 0 : index
    %115 = vector.load %arg5[%c0_41, %c0_42] : memref<128x384xf32, #tpu.memory_space<vmem>>, vector<128x384xf32>
    %cst_43 = arith.constant dense<0.000000e+00> : vector<8x384xf32>
    %116 = tpu.matmul %108, %115, %cst_43 {dimension_numbers = #tpu.dot_dimension_numbers<[1], [0], [0], [1], [0, 0, 1, 1], [], []>} : vector<8x128xf32>, vector<128x384xf32>, vector<8x384xf32> -> vector<8x384xf32>
    %117 = vector.extract_strided_slice %114 {offsets = [0, 0], sizes = [8, 128], strides = [1, 1]} : vector<8x384xf32> to vector<8x128xf32>
    %118 = vector.extract_strided_slice %116 {offsets = [0, 0], sizes = [8, 128], strides = [1, 1]} : vector<8x384xf32> to vector<8x128xf32>
    %119 = arith.addf %117, %118 : vector<8x128xf32>
    %120 = arith.negf %119 : vector<8x128xf32>
    %121 = math.exp %120 : vector<8x128xf32>
    %cst_44 = arith.constant 1.000000e+00 : f32
    %122 = vector.broadcast %cst_44 : f32 to vector<8x128xf32>
    %123 = arith.addf %122, %121 : vector<8x128xf32>
    %124 = arith.divf %122, %123 : vector<8x128xf32>
    %125 = vector.extract_strided_slice %114 {offsets = [0, 128], sizes = [8, 128], strides = [1, 1]} : vector<8x384xf32> to vector<8x128xf32>
    %126 = vector.extract_strided_slice %116 {offsets = [0, 128], sizes = [8, 128], strides = [1, 1]} : vector<8x384xf32> to vector<8x128xf32>
    %127 = arith.addf %125, %126 : vector<8x128xf32>
    %128 = arith.negf %127 : vector<8x128xf32>
    %129 = math.exp %128 : vector<8x128xf32>
    %cst_45 = arith.constant 1.000000e+00 : f32
    %130 = vector.broadcast %cst_45 : f32 to vector<8x128xf32>
    %131 = arith.addf %130, %129 : vector<8x128xf32>
    %132 = arith.divf %130, %131 : vector<8x128xf32>
    %133 = vector.extract_strided_slice %114 {offsets = [0, 256], sizes = [8, 128], strides = [1, 1]} : vector<8x384xf32> to vector<8x128xf32>
    %134 = vector.extract_strided_slice %116 {offsets = [0, 256], sizes = [8, 128], strides = [1, 1]} : vector<8x384xf32> to vector<8x128xf32>
    %135 = arith.addf %134, %9 : vector<8x128xf32>
    %136 = arith.mulf %124, %135 : vector<8x128xf32>
    %137 = arith.addf %133, %136 : vector<8x128xf32>
    %138 = math.tanh %137 : vector<8x128xf32>
    %139 = arith.subf %108, %138 : vector<8x128xf32>
    %140 = arith.mulf %132, %139 : vector<8x128xf32>
    %141 = arith.addf %138, %140 : vector<8x128xf32>
    %c4_i32 = arith.constant 4 : i32
    %142 = arith.index_cast %c4_i32 : i32 to index
    %c0_46 = arith.constant 0 : index
    %c0_47 = arith.constant 0 : index
    %143 = vector.load %arg2[%142, %c0_46, %c0_47] : memref<8x8x4xf32, #tpu.memory_space<vmem>>, vector<1x8x4xf32>
    %144 = vector.shape_cast %143 : vector<1x8x4xf32> to vector<8x4xf32>
    %c0_48 = arith.constant 0 : index
    %c0_49 = arith.constant 0 : index
    %145 = vector.load %arg3[%c0_48, %c0_49] : memref<4x384xf32, #tpu.memory_space<vmem>>, vector<4x384xf32>
    %cst_50 = arith.constant dense<0.000000e+00> : vector<8x384xf32>
    %146 = tpu.matmul %144, %145, %cst_50 {dimension_numbers = #tpu.dot_dimension_numbers<[1], [0], [0], [1], [0, 0, 1, 1], [], []>} : vector<8x4xf32>, vector<4x384xf32>, vector<8x384xf32> -> vector<8x384xf32>
    %147 = arith.addf %146, %6 : vector<8x384xf32>
    %c0_51 = arith.constant 0 : index
    %c0_52 = arith.constant 0 : index
    %148 = vector.load %arg5[%c0_51, %c0_52] : memref<128x384xf32, #tpu.memory_space<vmem>>, vector<128x384xf32>
    %cst_53 = arith.constant dense<0.000000e+00> : vector<8x384xf32>
    %149 = tpu.matmul %141, %148, %cst_53 {dimension_numbers = #tpu.dot_dimension_numbers<[1], [0], [0], [1], [0, 0, 1, 1], [], []>} : vector<8x128xf32>, vector<128x384xf32>, vector<8x384xf32> -> vector<8x384xf32>
    %150 = vector.extract_strided_slice %147 {offsets = [0, 0], sizes = [8, 128], strides = [1, 1]} : vector<8x384xf32> to vector<8x128xf32>
    %151 = vector.extract_strided_slice %149 {offsets = [0, 0], sizes = [8, 128], strides = [1, 1]} : vector<8x384xf32> to vector<8x128xf32>
    %152 = arith.addf %150, %151 : vector<8x128xf32>
    %153 = arith.negf %152 : vector<8x128xf32>
    %154 = math.exp %153 : vector<8x128xf32>
    %cst_54 = arith.constant 1.000000e+00 : f32
    %155 = vector.broadcast %cst_54 : f32 to vector<8x128xf32>
    %156 = arith.addf %155, %154 : vector<8x128xf32>
    %157 = arith.divf %155, %156 : vector<8x128xf32>
    %158 = vector.extract_strided_slice %147 {offsets = [0, 128], sizes = [8, 128], strides = [1, 1]} : vector<8x384xf32> to vector<8x128xf32>
    %159 = vector.extract_strided_slice %149 {offsets = [0, 128], sizes = [8, 128], strides = [1, 1]} : vector<8x384xf32> to vector<8x128xf32>
    %160 = arith.addf %158, %159 : vector<8x128xf32>
    %161 = arith.negf %160 : vector<8x128xf32>
    %162 = math.exp %161 : vector<8x128xf32>
    %cst_55 = arith.constant 1.000000e+00 : f32
    %163 = vector.broadcast %cst_55 : f32 to vector<8x128xf32>
    %164 = arith.addf %163, %162 : vector<8x128xf32>
    %165 = arith.divf %163, %164 : vector<8x128xf32>
    %166 = vector.extract_strided_slice %147 {offsets = [0, 256], sizes = [8, 128], strides = [1, 1]} : vector<8x384xf32> to vector<8x128xf32>
    %167 = vector.extract_strided_slice %149 {offsets = [0, 256], sizes = [8, 128], strides = [1, 1]} : vector<8x384xf32> to vector<8x128xf32>
    %168 = arith.addf %167, %9 : vector<8x128xf32>
    %169 = arith.mulf %157, %168 : vector<8x128xf32>
    %170 = arith.addf %166, %169 : vector<8x128xf32>
    %171 = math.tanh %170 : vector<8x128xf32>
    %172 = arith.subf %141, %171 : vector<8x128xf32>
    %173 = arith.mulf %165, %172 : vector<8x128xf32>
    %174 = arith.addf %171, %173 : vector<8x128xf32>
    %c5_i32 = arith.constant 5 : i32
    %175 = arith.index_cast %c5_i32 : i32 to index
    %c0_56 = arith.constant 0 : index
    %c0_57 = arith.constant 0 : index
    %176 = vector.load %arg2[%175, %c0_56, %c0_57] : memref<8x8x4xf32, #tpu.memory_space<vmem>>, vector<1x8x4xf32>
    %177 = vector.shape_cast %176 : vector<1x8x4xf32> to vector<8x4xf32>
    %c0_58 = arith.constant 0 : index
    %c0_59 = arith.constant 0 : index
    %178 = vector.load %arg3[%c0_58, %c0_59] : memref<4x384xf32, #tpu.memory_space<vmem>>, vector<4x384xf32>
    %cst_60 = arith.constant dense<0.000000e+00> : vector<8x384xf32>
    %179 = tpu.matmul %177, %178, %cst_60 {dimension_numbers = #tpu.dot_dimension_numbers<[1], [0], [0], [1], [0, 0, 1, 1], [], []>} : vector<8x4xf32>, vector<4x384xf32>, vector<8x384xf32> -> vector<8x384xf32>
    %180 = arith.addf %179, %6 : vector<8x384xf32>
    %c0_61 = arith.constant 0 : index
    %c0_62 = arith.constant 0 : index
    %181 = vector.load %arg5[%c0_61, %c0_62] : memref<128x384xf32, #tpu.memory_space<vmem>>, vector<128x384xf32>
    %cst_63 = arith.constant dense<0.000000e+00> : vector<8x384xf32>
    %182 = tpu.matmul %174, %181, %cst_63 {dimension_numbers = #tpu.dot_dimension_numbers<[1], [0], [0], [1], [0, 0, 1, 1], [], []>} : vector<8x128xf32>, vector<128x384xf32>, vector<8x384xf32> -> vector<8x384xf32>
    %183 = vector.extract_strided_slice %180 {offsets = [0, 0], sizes = [8, 128], strides = [1, 1]} : vector<8x384xf32> to vector<8x128xf32>
    %184 = vector.extract_strided_slice %182 {offsets = [0, 0], sizes = [8, 128], strides = [1, 1]} : vector<8x384xf32> to vector<8x128xf32>
    %185 = arith.addf %183, %184 : vector<8x128xf32>
    %186 = arith.negf %185 : vector<8x128xf32>
    %187 = math.exp %186 : vector<8x128xf32>
    %cst_64 = arith.constant 1.000000e+00 : f32
    %188 = vector.broadcast %cst_64 : f32 to vector<8x128xf32>
    %189 = arith.addf %188, %187 : vector<8x128xf32>
    %190 = arith.divf %188, %189 : vector<8x128xf32>
    %191 = vector.extract_strided_slice %180 {offsets = [0, 128], sizes = [8, 128], strides = [1, 1]} : vector<8x384xf32> to vector<8x128xf32>
    %192 = vector.extract_strided_slice %182 {offsets = [0, 128], sizes = [8, 128], strides = [1, 1]} : vector<8x384xf32> to vector<8x128xf32>
    %193 = arith.addf %191, %192 : vector<8x128xf32>
    %194 = arith.negf %193 : vector<8x128xf32>
    %195 = math.exp %194 : vector<8x128xf32>
    %cst_65 = arith.constant 1.000000e+00 : f32
    %196 = vector.broadcast %cst_65 : f32 to vector<8x128xf32>
    %197 = arith.addf %196, %195 : vector<8x128xf32>
    %198 = arith.divf %196, %197 : vector<8x128xf32>
    %199 = vector.extract_strided_slice %180 {offsets = [0, 256], sizes = [8, 128], strides = [1, 1]} : vector<8x384xf32> to vector<8x128xf32>
    %200 = vector.extract_strided_slice %182 {offsets = [0, 256], sizes = [8, 128], strides = [1, 1]} : vector<8x384xf32> to vector<8x128xf32>
    %201 = arith.addf %200, %9 : vector<8x128xf32>
    %202 = arith.mulf %190, %201 : vector<8x128xf32>
    %203 = arith.addf %199, %202 : vector<8x128xf32>
    %204 = math.tanh %203 : vector<8x128xf32>
    %205 = arith.subf %174, %204 : vector<8x128xf32>
    %206 = arith.mulf %198, %205 : vector<8x128xf32>
    %207 = arith.addf %204, %206 : vector<8x128xf32>
    %c6_i32 = arith.constant 6 : i32
    %208 = arith.index_cast %c6_i32 : i32 to index
    %c0_66 = arith.constant 0 : index
    %c0_67 = arith.constant 0 : index
    %209 = vector.load %arg2[%208, %c0_66, %c0_67] : memref<8x8x4xf32, #tpu.memory_space<vmem>>, vector<1x8x4xf32>
    %210 = vector.shape_cast %209 : vector<1x8x4xf32> to vector<8x4xf32>
    %c0_68 = arith.constant 0 : index
    %c0_69 = arith.constant 0 : index
    %211 = vector.load %arg3[%c0_68, %c0_69] : memref<4x384xf32, #tpu.memory_space<vmem>>, vector<4x384xf32>
    %cst_70 = arith.constant dense<0.000000e+00> : vector<8x384xf32>
    %212 = tpu.matmul %210, %211, %cst_70 {dimension_numbers = #tpu.dot_dimension_numbers<[1], [0], [0], [1], [0, 0, 1, 1], [], []>} : vector<8x4xf32>, vector<4x384xf32>, vector<8x384xf32> -> vector<8x384xf32>
    %213 = arith.addf %212, %6 : vector<8x384xf32>
    %c0_71 = arith.constant 0 : index
    %c0_72 = arith.constant 0 : index
    %214 = vector.load %arg5[%c0_71, %c0_72] : memref<128x384xf32, #tpu.memory_space<vmem>>, vector<128x384xf32>
    %cst_73 = arith.constant dense<0.000000e+00> : vector<8x384xf32>
    %215 = tpu.matmul %207, %214, %cst_73 {dimension_numbers = #tpu.dot_dimension_numbers<[1], [0], [0], [1], [0, 0, 1, 1], [], []>} : vector<8x128xf32>, vector<128x384xf32>, vector<8x384xf32> -> vector<8x384xf32>
    %216 = vector.extract_strided_slice %213 {offsets = [0, 0], sizes = [8, 128], strides = [1, 1]} : vector<8x384xf32> to vector<8x128xf32>
    %217 = vector.extract_strided_slice %215 {offsets = [0, 0], sizes = [8, 128], strides = [1, 1]} : vector<8x384xf32> to vector<8x128xf32>
    %218 = arith.addf %216, %217 : vector<8x128xf32>
    %219 = arith.negf %218 : vector<8x128xf32>
    %220 = math.exp %219 : vector<8x128xf32>
    %cst_74 = arith.constant 1.000000e+00 : f32
    %221 = vector.broadcast %cst_74 : f32 to vector<8x128xf32>
    %222 = arith.addf %221, %220 : vector<8x128xf32>
    %223 = arith.divf %221, %222 : vector<8x128xf32>
    %224 = vector.extract_strided_slice %213 {offsets = [0, 128], sizes = [8, 128], strides = [1, 1]} : vector<8x384xf32> to vector<8x128xf32>
    %225 = vector.extract_strided_slice %215 {offsets = [0, 128], sizes = [8, 128], strides = [1, 1]} : vector<8x384xf32> to vector<8x128xf32>
    %226 = arith.addf %224, %225 : vector<8x128xf32>
    %227 = arith.negf %226 : vector<8x128xf32>
    %228 = math.exp %227 : vector<8x128xf32>
    %cst_75 = arith.constant 1.000000e+00 : f32
    %229 = vector.broadcast %cst_75 : f32 to vector<8x128xf32>
    %230 = arith.addf %229, %228 : vector<8x128xf32>
    %231 = arith.divf %229, %230 : vector<8x128xf32>
    %232 = vector.extract_strided_slice %213 {offsets = [0, 256], sizes = [8, 128], strides = [1, 1]} : vector<8x384xf32> to vector<8x128xf32>
    %233 = vector.extract_strided_slice %215 {offsets = [0, 256], sizes = [8, 128], strides = [1, 1]} : vector<8x384xf32> to vector<8x128xf32>
    %234 = arith.addf %233, %9 : vector<8x128xf32>
    %235 = arith.mulf %223, %234 : vector<8x128xf32>
    %236 = arith.addf %232, %235 : vector<8x128xf32>
    %237 = math.tanh %236 : vector<8x128xf32>
    %238 = arith.subf %207, %237 : vector<8x128xf32>
    %239 = arith.mulf %231, %238 : vector<8x128xf32>
    %240 = arith.addf %237, %239 : vector<8x128xf32>
    %c7_i32 = arith.constant 7 : i32
    %241 = arith.index_cast %c7_i32 : i32 to index
    %c0_76 = arith.constant 0 : index
    %c0_77 = arith.constant 0 : index
    %242 = vector.load %arg2[%241, %c0_76, %c0_77] : memref<8x8x4xf32, #tpu.memory_space<vmem>>, vector<1x8x4xf32>
    %243 = vector.shape_cast %242 : vector<1x8x4xf32> to vector<8x4xf32>
    %c0_78 = arith.constant 0 : index
    %c0_79 = arith.constant 0 : index
    %244 = vector.load %arg3[%c0_78, %c0_79] : memref<4x384xf32, #tpu.memory_space<vmem>>, vector<4x384xf32>
    %cst_80 = arith.constant dense<0.000000e+00> : vector<8x384xf32>
    %245 = tpu.matmul %243, %244, %cst_80 {dimension_numbers = #tpu.dot_dimension_numbers<[1], [0], [0], [1], [0, 0, 1, 1], [], []>} : vector<8x4xf32>, vector<4x384xf32>, vector<8x384xf32> -> vector<8x384xf32>
    %246 = arith.addf %245, %6 : vector<8x384xf32>
    %c0_81 = arith.constant 0 : index
    %c0_82 = arith.constant 0 : index
    %247 = vector.load %arg5[%c0_81, %c0_82] : memref<128x384xf32, #tpu.memory_space<vmem>>, vector<128x384xf32>
    %cst_83 = arith.constant dense<0.000000e+00> : vector<8x384xf32>
    %248 = tpu.matmul %240, %247, %cst_83 {dimension_numbers = #tpu.dot_dimension_numbers<[1], [0], [0], [1], [0, 0, 1, 1], [], []>} : vector<8x128xf32>, vector<128x384xf32>, vector<8x384xf32> -> vector<8x384xf32>
    %249 = vector.extract_strided_slice %246 {offsets = [0, 0], sizes = [8, 128], strides = [1, 1]} : vector<8x384xf32> to vector<8x128xf32>
    %250 = vector.extract_strided_slice %248 {offsets = [0, 0], sizes = [8, 128], strides = [1, 1]} : vector<8x384xf32> to vector<8x128xf32>
    %251 = arith.addf %249, %250 : vector<8x128xf32>
    %252 = arith.negf %251 : vector<8x128xf32>
    %253 = math.exp %252 : vector<8x128xf32>
    %cst_84 = arith.constant 1.000000e+00 : f32
    %254 = vector.broadcast %cst_84 : f32 to vector<8x128xf32>
    %255 = arith.addf %254, %253 : vector<8x128xf32>
    %256 = arith.divf %254, %255 : vector<8x128xf32>
    %257 = vector.extract_strided_slice %246 {offsets = [0, 128], sizes = [8, 128], strides = [1, 1]} : vector<8x384xf32> to vector<8x128xf32>
    %258 = vector.extract_strided_slice %248 {offsets = [0, 128], sizes = [8, 128], strides = [1, 1]} : vector<8x384xf32> to vector<8x128xf32>
    %259 = arith.addf %257, %258 : vector<8x128xf32>
    %260 = arith.negf %259 : vector<8x128xf32>
    %261 = math.exp %260 : vector<8x128xf32>
    %cst_85 = arith.constant 1.000000e+00 : f32
    %262 = vector.broadcast %cst_85 : f32 to vector<8x128xf32>
    %263 = arith.addf %262, %261 : vector<8x128xf32>
    %264 = arith.divf %262, %263 : vector<8x128xf32>
    %265 = vector.extract_strided_slice %246 {offsets = [0, 256], sizes = [8, 128], strides = [1, 1]} : vector<8x384xf32> to vector<8x128xf32>
    %266 = vector.extract_strided_slice %248 {offsets = [0, 256], sizes = [8, 128], strides = [1, 1]} : vector<8x384xf32> to vector<8x128xf32>
    %267 = arith.addf %266, %9 : vector<8x128xf32>
    %268 = arith.mulf %256, %267 : vector<8x128xf32>
    %269 = arith.addf %265, %268 : vector<8x128xf32>
    %270 = math.tanh %269 : vector<8x128xf32>
    %271 = arith.subf %240, %270 : vector<8x128xf32>
    %272 = arith.mulf %264, %271 : vector<8x128xf32>
    %273 = arith.addf %270, %272 : vector<8x128xf32>
    %c8_i32 = arith.constant 8 : i32
    %c0_86 = arith.constant 0 : index
    %c0_87 = arith.constant 0 : index
    %274 = vector.load %arg7[%c0_86, %c0_87] : memref<8x128xf32, #tpu.memory_space<vmem>>, vector<8x128xf32>
    tpu.vector_store %arg7[%c0_86, %c0_87], %273 {strides = array<i32>} : memref<8x128xf32, #tpu.memory_space<vmem>>, vector<8x128xf32>,
    return
  }
  func.func @transform_0(%arg0: i32, %arg1: i32) -> (i32, i32, i32) {
    %c0_i32 = arith.constant 0 : i32
    %c0_i32_0 = arith.constant 0 : i32
    return %arg1, %arg0, %c0_i32 : i32, i32, i32
  }
  func.func @transform_1(%arg0: i32, %arg1: i32) -> (i32, i32) {
    %c0_i32 = arith.constant 0 : i32
    %c0_i32_0 = arith.constant 0 : i32
    %c0_i32_1 = arith.constant 0 : i32
    return %c0_i32, %c0_i32_0 : i32, i32
  }
  func.func @transform_2(%arg0: i32, %arg1: i32) -> (i32, i32) {
    %c0_i32 = arith.constant 0 : i32
    %c0_i32_0 = arith.constant 0 : i32
    %c0_i32_1 = arith.constant 0 : i32
    return %c0_i32, %c0_i32_0 : i32, i32
  }
  func.func @transform_3(%arg0: i32, %arg1: i32) -> (i32, i32) {
    %c0_i32 = arith.constant 0 : i32
    %c0_i32_0 = arith.constant 0 : i32
    %c0_i32_1 = arith.constant 0 : i32
    return %c0_i32, %c0_i32_0 : i32, i32
  }
  func.func @transform_4(%arg0: i32, %arg1: i32) -> (i32, i32) {
    %c0_i32 = arith.constant 0 : i32
    %c0_i32_0 = arith.constant 0 : i32
    %c0_i32_1 = arith.constant 0 : i32
    return %c0_i32, %c0_i32_0 : i32, i32
  }
  func.func @transform_5(%arg0: i32, %arg1: i32) -> (i32, i32) {
    %c0_i32 = arith.constant 0 : i32
    %c0_i32_0 = arith.constant 0 : i32
    return %arg0, %c0_i32 : i32, i32
  }
}

</mosaic_0001>

<llo_original>
// kernel: tpu_custom_call.1
$region0: #{tpu_custom_call.1}
  #allocation0 [shape = 'u32[]', space=smem, size = 0x4, offset = 0x4, fixed_abs, tag = 'smem constant byte address 0x4 - core index']
  #allocation1 [shape = 'u32[144,128]{1,0:T(1,128)}', space=vmem, size = 0x12000, scoped, tag = 'internal scratch']
  %s0 = inlined_call_operand.vmem [shape: f32[8,8,4], index: 0, kind: input, shape index: {}]
  %s1 = inlined_call_operand.vmem [shape: f32[4,384], index: 1, kind: input, shape index: {}]
  %s2 = inlined_call_operand.vmem [shape: f32[1,384], index: 2, kind: input, shape index: {}]
  %s3 = inlined_call_operand.hbm [shape: f32[128,384], index: 3, kind: input, shape index: {}]
  %s4 = inlined_call_operand.vmem [shape: f32[1,128], index: 4, kind: input, shape index: {}]
  %s5 = inlined_call_operand.hbm [shape: f32[8,128], index: 5, kind: output, shape index: {}]
  %s6 = sld [smem:[#allocation0]]
  $region38: #{tpu_custom_call.1} parent=0
    _
  %s8 = ssub.s32 1, %s6
  %s9 = scalar_select 0, %s8, %s6
  $region1: #{tpu_custom_call.1} parent=0
    #allocation2 [shape = 'u8[196608]{0}', space=vmem, size = 0x30000, scoped, tag = 'input window, operand 3, single buffered']
    #allocation3 [shape = 's32[1]{0}', space=sflag, size = 0x4, scoped, tag = 'scoped memory for tpu_custom_call.1']
    #allocation4 [shape = 's32[1]{0}', space=sflag, size = 0x4, scoped, tag = 'scoped memory for tpu_custom_call.1']
    #allocation5 [shape = 'u8[4096]{0}', space=vmem, size = 0x1000, scoped, tag = 'output window, operand 0, single buffered']
    %10 = vsyncpa [#allocation3], 0
    %11 = vsyncpa [#allocation4], 0
    // Predicated region
    $region2: #{tpu_custom_call.1} parent=1 // pred_check
      _
    $region3: #{tpu_custom_call.1} parent=1 // pred_check_branch
      %13 = sbr.rel (0) target = $region5
    $region4: #{tpu_custom_call.1} parent=1 // pred_region
      _
    $region5: #{tpu_custom_call.1} parent=1 // pred_fallthru
      _
    // Predicated region
    $region6: #{tpu_custom_call.1} parent=1 // pred_check
      _
    $region7: #{tpu_custom_call.1} parent=1 // pred_check_branch
      %15 = sbr.rel (0) target = $region9
    $region8: #{tpu_custom_call.1} parent=1 // pred_region
      _
    $region9: #{tpu_custom_call.1} parent=1 // pred_fallthru
      _
    // Predicated region
    $region10: #{tpu_custom_call.1} parent=1 // pred_check
      _
    $region11: #{tpu_custom_call.1} parent=1 // pred_check_branch
      %17 = sbr.rel (0) target = $region13
    $region12: #{tpu_custom_call.1} parent=1 // pred_region
      _
    $region13: #{tpu_custom_call.1} parent=1 // pred_fallthru
      _
    // Predicated region
    $region14: #{tpu_custom_call.1} parent=1 // pred_check
      _
    $region15: #{tpu_custom_call.1} parent=1 // pred_check_branch
      %19 = sbr.rel (0) target = $region17
    $region16: #{tpu_custom_call.1} parent=1 // pred_region
      %s21 = ssub.s32 6144, 6144
      %22 = vsyncadd [#allocation3], %s21
      %s23 = sshll.u32 [#allocation2], 4
      %s24 = int_to_ptr.vmem [resolvable:$true] %s23
      %29 = dma.hbm_to_vmem [thread:$0]  %s3, 6144, %s24, [#allocation3], 384, 384, 24
    $region17: #{tpu_custom_call.1} parent=1 // pred_fallthru
      _
    // Predicated region
    $region18: #{tpu_custom_call.1} parent=1 // pred_check
      _
    $region19: #{tpu_custom_call.1} parent=1 // pred_check_branch
      %31 = sbr.rel (0) target = $region21
    $region20: #{tpu_custom_call.1} parent=1 // pred_region
      _
    $region21: #{tpu_custom_call.1} parent=1 // pred_fallthru
      _
    // Predicated region
    $region22: #{tpu_custom_call.1} parent=1 // pred_check
      _
    $region23: #{tpu_custom_call.1} parent=1 // pred_check_branch
      %33 = sbr.rel (0) target = $region25
    $region24: #{tpu_custom_call.1} parent=1 // pred_region
      %34 = dma.done [#allocation3], 6144
    $region25: #{tpu_custom_call.1} parent=1 // pred_fallthru
      _
    %p35 = scmp.eq.s32.totalorder 0, 0
    // Predicated region
    $region26: #{tpu_custom_call.1} parent=1 // pred_check
      %p36 = pneg %p35
    $region27: #{tpu_custom_call.1} parent=1 // pred_check_branch
      %38 = sbr.rel (%p36) target = $region29
    $region28: #{tpu_custom_call.1} parent=1 // pred_region
      %39 = vst [vmem:[#allocation5] sm:$0xff] 0.0
    $region29: #{tpu_custom_call.1} parent=1 // pred_fallthru
      _
    %v40 = vld [vmem:[#allocation5] sm:$0xff]
    %v41 = vld [vmem:[%s2] sm:$0x7]
    %v43 = vlaneseq
    %v44 = vshrl.u32 %v43, 7
    %v45 = vsub.s32 0, %v44
    %v46 = vrot.slane %v41, %v45
    %v47 = vlaneseq
    %v48 = vshrl.u32 %v47, 7
    %v49 = vsub.s32 1, %v48
    %v50 = vrot.slane %v41, %v49
    %v51 = vlaneseq
    %v52 = vshrl.u32 %v51, 7
    %v53 = vsub.s32 2, %v52
    %v54 = vrot.slane %v41, %v53
    %v58 = vld [vmem:[%s4] sm:$0x1]
    %v60 = vlaneseq
    %v61 = vshrl.u32 %v60, 7
    %v62 = vsub.s32 0, %v61
    %v63 = vrot.slane %v58, %v62
    %v65 = vld [vmem:[%s0] sm:$0xff]
    %v66 = vld [vmem:[%s1] sm:$0xff]
    %v67 = vld [vmem:[%s1 + $0x8] sm:$0xf]
    %v70 = vcombine.high %v66, %v66
    %vm71 = vcmask 31744
    %v73 = vsel %vm71, %v65, 0
    %vm75 = vcmask 1043456
    %v76 = vsel %vm75, %v66, 0
    %v78 = vsel %vm75, %v70, 0
    %v80 = vsel %vm75, %v67, 0
    %82 = vmatprep.subr.mxu0 0.0
    %83 = vmatpush1.msra.mxu0 0.0
    %84 = vmatprep.subr.mxu0 0.0
    %85 = vmatpush1.msra.mxu0 0.0
    %86 = vmatprep.subr.mxu0 0.0
    %87 = vmatpush1.msra.mxu0 0.0
    %88 = vmatprep.subr.mxu0 0.0
    %89 = vmatpush1.msra.mxu0 0.0
    %90 = vmatprep.subr.mxu0 0.0
    %91 = vmatpush1.msra.mxu0 0.0
    %92 = vmatprep.subr.mxu0 0.0
    %93 = vmatpush1.msra.mxu0 0.0
    %94 = vmatprep.subr.mxu0 0.0
    %95 = vmatpush1.msra.mxu0 0.0
    %96 = vmatprep.subr.mxu0 0.0
    %97 = vmatpush1.msra.mxu0 0.0
    %98 = vmatprep.subr.mxu0 0.0
    %99 = vmatpush1.msra.mxu0 0.0
    %100 = vmatprep.subr.mxu0 0.0
    %101 = vmatpush1.msra.mxu0 0.0
    %102 = vmatprep.subr.mxu0 0.0
    %103 = vmatpush1.msra.mxu0 0.0
    %104 = vmatprep.subr.mxu0 0.0
    %105 = vmatpush1.msra.mxu0 0.0
    %106 = vmatprep.subr.mxu0 0.0
    %107 = vmatpush1.msra.mxu0 0.0
    %108 = vmatprep.subr.mxu0 0.0
    %109 = vmatpush1.msra.mxu0 0.0
    %110 = vmatprep.subr.mxu0 0.0
    %111 = vmatpush1.msra.mxu0 0.0
    %112 = vmatprep.subr.mxu0 %v78
    %113 = vmatpush1.msra.mxu0 %v76
    %114 = vmatprep.subr.mxu0 0.0
    %115 = vmatpush2.msra.mxu0 0.0
    %116 = vmatprep.subr.mxu0 0.0
    %117 = vmatpush2.msra.mxu0 0.0
    %118 = vmatprep.subr.mxu0 0.0
    %119 = vmatpush2.msra.mxu0 0.0
    %120 = vmatprep.subr.mxu0 0.0
    %121 = vmatpush2.msra.mxu0 0.0
    %122 = vmatprep.subr.mxu0 0.0
    %123 = vmatpush2.msra.mxu0 0.0
    %124 = vmatprep.subr.mxu0 0.0
    %125 = vmatpush2.msra.mxu0 0.0
    %126 = vmatprep.subr.mxu0 0.0
    %127 = vmatpush2.msra.mxu0 0.0
    %128 = vmatprep.subr.mxu0 0.0
    %129 = vmatpush2.msra.mxu0 0.0
    %130 = vmatprep.subr.mxu0 0.0
    %131 = vmatpush2.msra.mxu0 0.0
    %132 = vmatprep.subr.mxu0 0.0
    %133 = vmatpush2.msra.mxu0 0.0
    %134 = vmatprep.subr.mxu0 0.0
    %135 = vmatpush2.msra.mxu0 0.0
    %136 = vmatprep.subr.mxu0 0.0
    %137 = vmatpush2.msra.mxu0 0.0
    %138 = vmatprep.subr.mxu0 0.0
    %139 = vmatpush2.msra.mxu0 0.0
    %140 = vmatprep.subr.mxu0 0.0
    %141 = vmatpush2.msra.mxu0 0.0
    %142 = vmatprep.subr.mxu0 0.0
    %143 = vmatpush2.msra.mxu0 0.0
    %144 = vmatprep.subr.mxu0 0.0
    %145 = vmatpush2.msra.mxu0 0.0
    %146 = vmatprep.mubr.f32.mxu0 0.0
    %147 = vmatmul.mubr.f32.gmra.mxu0 %v73
    %v148 = vpop.f32.mrf.mxu0
    %v149 = vadd.f32 %v46, %v148
    %v150 = vpop.f32.mrf.mxu0
    %v151 = vadd.f32 %v50, %v150
    %152 = vdwg.mxu0
    %153 = vmatprep.subr.mxu0 0.0
    %154 = vmatpush1.msra.mxu0 0.0
    %155 = vmatprep.subr.mxu0 0.0
    %156 = vmatpush1.msra.mxu0 0.0
    %157 = vmatprep.subr.mxu0 0.0
    %158 = vmatpush1.msra.mxu0 0.0
    %159 = vmatprep.subr.mxu0 0.0
    %160 = vmatpush1.msra.mxu0 0.0
    %161 = vmatprep.subr.mxu0 0.0
    %162 = vmatpush1.msra.mxu0 0.0
    %163 = vmatprep.subr.mxu0 0.0
    %164 = vmatpush1.msra.mxu0 0.0
    %165 = vmatprep.subr.mxu0 0.0
    %166 = vmatpush1.msra.mxu0 0.0
    %167 = vmatprep.subr.mxu0 0.0
    %168 = vmatpush1.msra.mxu0 0.0
    %169 = vmatprep.subr.mxu0 0.0
    %170 = vmatpush1.msra.mxu0 0.0
    %171 = vmatprep.subr.mxu0 0.0
    %172 = vmatpush1.msra.mxu0 0.0
    %173 = vmatprep.subr.mxu0 0.0
    %174 = vmatpush1.msra.mxu0 0.0
    %175 = vmatprep.subr.mxu0 0.0
    %176 = vmatpush1.msra.mxu0 0.0
    %177 = vmatprep.subr.mxu0 0.0
    %178 = vmatpush1.msra.mxu0 0.0
    %179 = vmatprep.subr.mxu0 0.0
    %180 = vmatpush1.msra.mxu0 0.0
    %181 = vmatprep.subr.mxu0 0.0
    %182 = vmatpush1.msra.mxu0 0.0
    %183 = vmatprep.subr.mxu0 0.0
    %184 = vmatpush1.msra.mxu0 %v80
    %185 = vmatprep.subr.mxu0 0.0
    %186 = vmatpush2.msra.mxu0 0.0
    %187 = vmatprep.subr.mxu0 0.0
    %188 = vmatpush2.msra.mxu0 0.0
    %189 = vmatprep.subr.mxu0 0.0
    %190 = vmatpush2.msra.mxu0 0.0
    %191 = vmatprep.subr.mxu0 0.0
    %192 = vmatpush2.msra.mxu0 0.0
    %193 = vmatprep.subr.mxu0 0.0
    %194 = vmatpush2.msra.mxu0 0.0
    %195 = vmatprep.subr.mxu0 0.0
    %196 = vmatpush2.msra.mxu0 0.0
    %197 = vmatprep.subr.mxu0 0.0
    %198 = vmatpush2.msra.mxu0 0.0
    %199 = vmatprep.subr.mxu0 0.0
    %200 = vmatpush2.msra.mxu0 0.0
    %201 = vmatprep.subr.mxu0 0.0
    %202 = vmatpush2.msra.mxu0 0.0
    %203 = vmatprep.subr.mxu0 0.0
    %204 = vmatpush2.msra.mxu0 0.0
    %205 = vmatprep.subr.mxu0 0.0
    %206 = vmatpush2.msra.mxu0 0.0
    %207 = vmatprep.subr.mxu0 0.0
    %208 = vmatpush2.msra.mxu0 0.0
    %209 = vmatprep.subr.mxu0 0.0
    %210 = vmatpush2.msra.mxu0 0.0
    %211 = vmatprep.subr.mxu0 0.0
    %212 = vmatpush2.msra.mxu0 0.0
    %213 = vmatprep.subr.mxu0 0.0
    %214 = vmatpush2.msra.mxu0 0.0
    %215 = vmatprep.subr.mxu0 0.0
    %216 = vmatpush2.msra.mxu0 0.0
    %217 = vmatprep.mubr.f32.mxu0 0.0
    %218 = vmatmul.mubr.f32.gmra.mxu0 %v73
    %v219 = vpop.f32.mrf.mxu0
    %v220 = vadd.f32 %v54, %v219
    %v221 = vpop.f32.mrf.mxu0
    %222 = vdwg.mxu0
    %v223 = vld [vmem:[#allocation2] sm:$0xff]
    %v224 = vld [vmem:[#allocation2 + $0x8] sm:$0xff]
    %v225 = vld [vmem:[#allocation2 + $0x10] sm:$0xff]
    %v226 = vld [vmem:[#allocation2 + $0x18] sm:$0xff]
    %v227 = vld [vmem:[#allocation2 + $0x20] sm:$0xff]
    %v228 = vld [vmem:[#allocation2 + $0x28] sm:$0xff]
    %v229 = vld [vmem:[#allocation2 + $0x30] sm:$0xff]
    %v230 = vld [vmem:[#allocation2 + $0x38] sm:$0xff]
    %v231 = vld [vmem:[#allocation2 + $0x40] sm:$0xff]
    %v232 = vld [vmem:[#allocation2 + $0x48] sm:$0xff]
    %v233 = vld [vmem:[#allocation2 + $0x50] sm:$0xff]
    %v234 = vld [vmem:[#allocation2 + $0x58] sm:$0xff]
    %v235 = vld [vmem:[#allocation2 + $0x60] sm:$0xff]
    %v236 = vld [vmem:[#allocation2 + $0x68] sm:$0xff]
    %v237 = vld [vmem:[#allocation2 + $0x70] sm:$0xff]
    %v238 = vld [vmem:[#allocation2 + $0x78] sm:$0xff]
    %v239 = vld [vmem:[#allocation2 + $0x80] sm:$0xff]
    %v240 = vld [vmem:[#allocation2 + $0x88] sm:$0xff]
    %v241 = vld [vmem:[#allocation2 + $0x90] sm:$0xff]
    %v242 = vld [vmem:[#allocation2 + $0x98] sm:$0xff]
    %v243 = vld [vmem:[#allocation2 + $0xa0] sm:$0xff]
    %v244 = vld [vmem:[#allocation2 + $0xa8] sm:$0xff]
    %v245 = vld [vmem:[#allocation2 + $0xb0] sm:$0xff]
    %v246 = vld [vmem:[#allocation2 + $0xb8] sm:$0xff]
    %v247 = vld [vmem:[#allocation2 + $0xc0] sm:$0xff]
    %v248 = vld [vmem:[#allocation2 + $0xc8] sm:$0xff]
    %v249 = vld [vmem:[#allocation2 + $0xd0] sm:$0xff]
    %v250 = vld [vmem:[#allocation2 + $0xd8] sm:$0xff]
    %v251 = vld [vmem:[#allocation2 + $0xe0] sm:$0xff]
    %v252 = vld [vmem:[#allocation2 + $0xe8] sm:$0xff]
    %v253 = vld [vmem:[#allocation2 + $0xf0] sm:$0xff]
    %v254 = vld [vmem:[#allocation2 + $0xf8] sm:$0xff]
    %v255 = vld [vmem:[#allocation2 + $0x100] sm:$0xff]
    %v256 = vld [vmem:[#allocation2 + $0x108] sm:$0xff]
    %v257 = vld [vmem:[#allocation2 + $0x110] sm:$0xff]
    %v258 = vld [vmem:[#allocation2 + $0x118] sm:$0xff]
    %v259 = vld [vmem:[#allocation2 + $0x120] sm:$0xff]
    %v260 = vld [vmem:[#allocation2 + $0x128] sm:$0xff]
    %v261 = vld [vmem:[#allocation2 + $0x130] sm:$0xff]
    %v262 = vld [vmem:[#allocation2 + $0x138] sm:$0xff]
    %v263 = vld [vmem:[#allocation2 + $0x140] sm:$0xff]
    %v264 = vld [vmem:[#allocation2 + $0x148] sm:$0xff]
    %v265 = vld [vmem:[#allocation2 + $0x150] sm:$0xff]
    %v266 = vld [vmem:[#allocation2 + $0x158] sm:$0xff]
    %v267 = vld [vmem:[#allocation2 + $0x160] sm:$0xff]
    %v268 = vld [vmem:[#allocation2 + $0x168] sm:$0xff]
    %v269 = vld [vmem:[#allocation2 + $0x170] sm:$0xff]
    %v270 = vld [vmem:[#allocation2 + $0x178] sm:$0xff]
    %271 = vmatprep.subr.mxu0 %v269
    %272 = vmatpush1.msra.mxu0 %v268
    %273 = vmatprep.subr.mxu0 %v266
    %274 = vmatpush1.msra.mxu0 %v265
    %275 = vmatprep.subr.mxu0 %v263
    %276 = vmatpush1.msra.mxu0 %v262
    %277 = vmatprep.subr.mxu0 %v260
    %278 = vmatpush1.msra.mxu0 %v259
    %279 = vmatprep.subr.mxu0 %v257
    %280 = vmatpush1.msra.mxu0 %v256
    %281 = vmatprep.subr.mxu0 %v254
    %282 = vmatpush1.msra.mxu0 %v253
    %283 = vmatprep.subr.mxu0 %v251
    %284 = vmatpush1.msra.mxu0 %v250
    %285 = vmatprep.subr.mxu0 %v248
    %286 = vmatpush1.msra.mxu0 %v247
    %287 = vmatprep.subr.mxu0 %v245
    %288 = vmatpush1.msra.mxu0 %v244
    %289 = vmatprep.subr.mxu0 %v242
    %290 = vmatpush1.msra.mxu0 %v241
    %291 = vmatprep.subr.mxu0 %v239
    %292 = vmatpush1.msra.mxu0 %v238
    %293 = vmatprep.subr.mxu0 %v236
    %294 = vmatpush1.msra.mxu0 %v235
    %295 = vmatprep.subr.mxu0 %v233
    %296 = vmatpush1.msra.mxu0 %v232
    %297 = vmatprep.subr.mxu0 %v230
    %298 = vmatpush1.msra.mxu0 %v229
    %299 = vmatprep.subr.mxu0 %v227
    %300 = vmatpush1.msra.mxu0 %v226
    %301 = vmatprep.subr.mxu0 %v224
    %302 = vmatpush1.msra.mxu0 %v223
    %303 = vmatprep.subr.mxu0 0.0
    %304 = vmatpush2.msra.mxu0 0.0
    %305 = vmatprep.subr.mxu0 0.0
    %306 = vmatpush2.msra.mxu0 0.0
    %307 = vmatprep.subr.mxu0 0.0
    %308 = vmatpush2.msra.mxu0 0.0
    %309 = vmatprep.subr.mxu0 0.0
    %310 = vmatpush2.msra.mxu0 0.0
    %311 = vmatprep.subr.mxu0 0.0
    %312 = vmatpush2.msra.mxu0 0.0
    %313 = vmatprep.subr.mxu0 0.0
    %314 = vmatpush2.msra.mxu0 0.0
    %315 = vmatprep.subr.mxu0 0.0
    %316 = vmatpush2.msra.mxu0 0.0
    %317 = vmatprep.subr.mxu0 0.0
    %318 = vmatpush2.msra.mxu0 0.0
    %319 = vmatprep.subr.mxu0 0.0
    %320 = vmatpush2.msra.mxu0 0.0
    %321 = vmatprep.subr.mxu0 0.0
    %322 = vmatpush2.msra.mxu0 0.0
    %323 = vmatprep.subr.mxu0 0.0
    %324 = vmatpush2.msra.mxu0 0.0
    %325 = vmatprep.subr.mxu0 0.0
    %326 = vmatpush2.msra.mxu0 0.0
    %327 = vmatprep.subr.mxu0 0.0
    %328 = vmatpush2.msra.mxu0 0.0
    %329 = vmatprep.subr.mxu0 0.0
    %330 = vmatpush2.msra.mxu0 0.0
    %331 = vmatprep.subr.mxu0 0.0
    %332 = vmatpush2.msra.mxu0 0.0
    %333 = vmatprep.subr.mxu0 0.0
    %334 = vmatpush2.msra.mxu0 0.0
    %335 = vmatprep.mubr.f32.mxu0 0.0
    %336 = vmatmul.mubr.f32.gmra.mxu0 %v40
    %v337 = vpop.f32.mrf.mxu0
    %v338 = vadd.f32 0.0, %v337
    %v339 = vpop.f32.mrf.mxu0
    %v340 = vadd.f32 0.0, %v339
    %341 = vdwg.mxu0
    %342 = vmatprep.subr.mxu0 0.0
    %343 = vmatpush1.msra.mxu0 %v270
    %344 = vmatprep.subr.mxu0 0.0
    %345 = vmatpush1.msra.mxu0 %v267
    %346 = vmatprep.subr.mxu0 0.0
    %347 = vmatpush1.msra.mxu0 %v264
    %348 = vmatprep.subr.mxu0 0.0
    %349 = vmatpush1.msra.mxu0 %v261
    %350 = vmatprep.subr.mxu0 0.0
    %351 = vmatpush1.msra.mxu0 %v258
    %352 = vmatprep.subr.mxu0 0.0
    %353 = vmatpush1.msra.mxu0 %v255
    %354 = vmatprep.subr.mxu0 0.0
    %355 = vmatpush1.msra.mxu0 %v252
    %356 = vmatprep.subr.mxu0 0.0
    %357 = vmatpush1.msra.mxu0 %v249
    %358 = vmatprep.subr.mxu0 0.0
    %359 = vmatpush1.msra.mxu0 %v246
    %360 = vmatprep.subr.mxu0 0.0
    %361 = vmatpush1.msra.mxu0 %v243
    %362 = vmatprep.subr.mxu0 0.0
    %363 = vmatpush1.msra.mxu0 %v240
    %364 = vmatprep.subr.mxu0 0.0
    %365 = vmatpush1.msra.mxu0 %v237
    %366 = vmatprep.subr.mxu0 0.0
    %367 = vmatpush1.msra.mxu0 %v234
    %368 = vmatprep.subr.mxu0 0.0
    %369 = vmatpush1.msra.mxu0 %v231
    %370 = vmatprep.subr.mxu0 0.0
    %371 = vmatpush1.msra.mxu0 %v228
    %372 = vmatprep.subr.mxu0 0.0
    %373 = vmatpush1.msra.mxu0 %v225
    %374 = vmatprep.subr.mxu0 0.0
    %375 = vmatpush2.msra.mxu0 0.0
    %376 = vmatprep.subr.mxu0 0.0
    %377 = vmatpush2.msra.mxu0 0.0
    %378 = vmatprep.subr.mxu0 0.0
    %379 = vmatpush2.msra.mxu0 0.0
    %380 = vmatprep.subr.mxu0 0.0
    %381 = vmatpush2.msra.mxu0 0.0
    %382 = vmatprep.subr.mxu0 0.0
    %383 = vmatpush2.msra.mxu0 0.0
    %384 = vmatprep.subr.mxu0 0.0
    %385 = vmatpush2.msra.mxu0 0.0
    %386 = vmatprep.subr.mxu0 0.0
    %387 = vmatpush2.msra.mxu0 0.0
    %388 = vmatprep.subr.mxu0 0.0
    %389 = vmatpush2.msra.mxu0 0.0
    %390 = vmatprep.subr.mxu0 0.0
    %391 = vmatpush2.msra.mxu0 0.0
    %392 = vmatprep.subr.mxu0 0.0
    %393 = vmatpush2.msra.mxu0 0.0
    %394 = vmatprep.subr.mxu0 0.0
    %395 = vmatpush2.msra.mxu0 0.0
    %396 = vmatprep.subr.mxu0 0.0
    %397 = vmatpush2.msra.mxu0 0.0
    %398 = vmatprep.subr.mxu0 0.0
    %399 = vmatpush2.msra.mxu0 0.0
    %400 = vmatprep.subr.mxu0 0.0
    %401 = vmatpush2.msra.mxu0 0.0
    %402 = vmatprep.subr.mxu0 0.0
    %403 = vmatpush2.msra.mxu0 0.0
    %404 = vmatprep.subr.mxu0 0.0
    %405 = vmatpush2.msra.mxu0 0.0
    %406 = vmatprep.mubr.f32.mxu0 0.0
    %407 = vmatmul.mubr.f32.gmra.mxu0 %v40
    %v408 = vpop.f32.mrf.mxu0
    %v409 = vadd.f32 0.0, %v408
    %v410 = vpop.f32.mrf.mxu0
    %411 = vdwg.mxu0
    %v412 = vadd.f32 %v149, %v338
    %v413 = vxor.u32 %v412, 2147483648
    %v414 = vmul.f32 %v413, 1.442695
    %v415 = vpow.pop %v414
    %v416 = vadd.f32 %v415, 1.0
    %v417 = vrcp.pop %v416
    %v418 = vmul.f32 1.0, %v417
    %v419 = vadd.f32 %v151, %v340
    %v420 = vxor.u32 %v419, 2147483648
    %v421 = vmul.f32 %v420, 1.442695
    %v422 = vpow.pop %v421
    %v423 = vadd.f32 %v422, 1.0
    %v424 = vrcp.pop %v423
    %v425 = vmul.f32 1.0, %v424
    %v426 = vadd.f32 %v409, %v63
    %v427 = vmul.f32 %v418, %v426
    %v428 = vadd.f32 %v220, %v427
    %v429 = vtanh.pop %v428
    %v430 = vsub.f32 %v40, %v429
    %v431 = vmul.f32 %v425, %v430
    %v432 = vadd.f32 %v429, %v431
    %s433 = scalar_lea.vmem %s0, 8
    %v434 = vld [vmem:[%s433] sm:$0xff]
    %v436 = vsel %vm71, %v434, 0
    %438 = vmatprep.subr.mxu0 0.0
    %439 = vmatpush1.msra.mxu0 0.0
    %440 = vmatprep.subr.mxu0 0.0
    %441 = vmatpush1.msra.mxu0 0.0
    %442 = vmatprep.subr.mxu0 0.0
    %443 = vmatpush1.msra.mxu0 0.0
    %444 = vmatprep.subr.mxu0 0.0
    %445 = vmatpush1.msra.mxu0 0.0
    %446 = vmatprep.subr.mxu0 0.0
    %447 = vmatpush1.msra.mxu0 0.0
    %448 = vmatprep.subr.mxu0 0.0
    %449 = vmatpush1.msra.mxu0 0.0
    %450 = vmatprep.subr.mxu0 0.0
    %451 = vmatpush1.msra.mxu0 0.0
    %452 = vmatprep.subr.mxu0 0.0
    %453 = vmatpush1.msra.mxu0 0.0
    %454 = vmatprep.subr.mxu0 0.0
    %455 = vmatpush1.msra.mxu0 0.0
    %456 = vmatprep.subr.mxu0 0.0
    %457 = vmatpush1.msra.mxu0 0.0
    %458 = vmatprep.subr.mxu0 0.0
    %459 = vmatpush1.msra.mxu0 0.0
    %460 = vmatprep.subr.mxu0 0.0
    %461 = vmatpush1.msra.mxu0 0.0
    %462 = vmatprep.subr.mxu0 0.0
    %463 = vmatpush1.msra.mxu0 0.0
    %464 = vmatprep.subr.mxu0 0.0
    %465 = vmatpush1.msra.mxu0 0.0
    %466 = vmatprep.subr.mxu0 0.0
    %467 = vmatpush1.msra.mxu0 0.0
    %468 = vmatprep.subr.mxu0 %v78
    %469 = vmatpush1.msra.mxu0 %v76
    %470 = vmatprep.subr.mxu0 0.0
    %471 = vmatpush2.msra.mxu0 0.0
    %472 = vmatprep.subr.mxu0 0.0
    %473 = vmatpush2.msra.mxu0 0.0
    %474 = vmatprep.subr.mxu0 0.0
    %475 = vmatpush2.msra.mxu0 0.0
    %476 = vmatprep.subr.mxu0 0.0
    %477 = vmatpush2.msra.mxu0 0.0
    %478 = vmatprep.subr.mxu0 0.0
    %479 = vmatpush2.msra.mxu0 0.0
    %480 = vmatprep.subr.mxu0 0.0
    %481 = vmatpush2.msra.mxu0 0.0
    %482 = vmatprep.subr.mxu0 0.0
    %483 = vmatpush2.msra.mxu0 0.0
    %484 = vmatprep.subr.mxu0 0.0
    %485 = vmatpush2.msra.mxu0 0.0
    %486 = vmatprep.subr.mxu0 0.0
    %487 = vmatpush2.msra.mxu0 0.0
    %488 = vmatprep.subr.mxu0 0.0
    %489 = vmatpush2.msra.mxu0 0.0
    %490 = vmatprep.subr.mxu0 0.0
    %491 = vmatpush2.msra.mxu0 0.0
    %492 = vmatprep.subr.mxu0 0.0
    %493 = vmatpush2.msra.mxu0 0.0
    %494 = vmatprep.subr.mxu0 0.0
    %495 = vmatpush2.msra.mxu0 0.0
    %496 = vmatprep.subr.mxu0 0.0
    %497 = vmatpush2.msra.mxu0 0.0
    %498 = vmatprep.subr.mxu0 0.0
    %499 = vmatpush2.msra.mxu0 0.0
    %500 = vmatprep.subr.mxu0 0.0
    %501 = vmatpush2.msra.mxu0 0.0
    %502 = vmatprep.mubr.f32.mxu0 0.0
    %503 = vmatmul.mubr.f32.gmra.mxu0 %v436
    %v504 = vpop.f32.mrf.mxu0
    %v505 = vadd.f32 %v46, %v504
    %v506 = vpop.f32.mrf.mxu0
    %v507 = vadd.f32 %v50, %v506
    %508 = vdwg.mxu0
    %509 = vmatprep.subr.mxu0 0.0
    %510 = vmatpush1.msra.mxu0 0.0
    %511 = vmatprep.subr.mxu0 0.0
    %512 = vmatpush1.msra.mxu0 0.0
    %513 = vmatprep.subr.mxu0 0.0
    %514 = vmatpush1.msra.mxu0 0.0
    %515 = vmatprep.subr.mxu0 0.0
    %516 = vmatpush1.msra.mxu0 0.0
    %517 = vmatprep.subr.mxu0 0.0
    %518 = vmatpush1.msra.mxu0 0.0
    %519 = vmatprep.subr.mxu0 0.0
    %520 = vmatpush1.msra.mxu0 0.0
    %521 = vmatprep.subr.mxu0 0.0
    %522 = vmatpush1.msra.mxu0 0.0
    %523 = vmatprep.subr.mxu0 0.0
    %524 = vmatpush1.msra.mxu0 0.0
    %525 = vmatprep.subr.mxu0 0.0
    %526 = vmatpush1.msra.mxu0 0.0
    %527 = vmatprep.subr.mxu0 0.0
    %528 = vmatpush1.msra.mxu0 0.0
    %529 = vmatprep.subr.mxu0 0.0
    %530 = vmatpush1.msra.mxu0 0.0
    %531 = vmatprep.subr.mxu0 0.0
    %532 = vmatpush1.msra.mxu0 0.0
    %533 = vmatprep.subr.mxu0 0.0
    %534 = vmatpush1.msra.mxu0 0.0
    %535 = vmatprep.subr.mxu0 0.0
    %536 = vmatpush1.msra.mxu0 0.0
    %537 = vmatprep.subr.mxu0 0.0
    %538 = vmatpush1.msra.mxu0 0.0
    %539 = vmatprep.subr.mxu0 0.0
    %540 = vmatpush1.msra.mxu0 %v80
    %541 = vmatprep.subr.mxu0 0.0
    %542 = vmatpush2.msra.mxu0 0.0
    %543 = vmatprep.subr.mxu0 0.0
    %544 = vmatpush2.msra.mxu0 0.0
    %545 = vmatprep.subr.mxu0 0.0
    %546 = vmatpush2.msra.mxu0 0.0
    %547 = vmatprep.subr.mxu0 0.0
    %548 = vmatpush2.msra.mxu0 0.0
    %549 = vmatprep.subr.mxu0 0.0
    %550 = vmatpush2.msra.mxu0 0.0
    %551 = vmatprep.subr.mxu0 0.0
    %552 = vmatpush2.msra.mxu0 0.0
    %553 = vmatprep.subr.mxu0 0.0
    %554 = vmatpush2.msra.mxu0 0.0
    %555 = vmatprep.subr.mxu0 0.0
    %556 = vmatpush2.msra.mxu0 0.0
    %557 = vmatprep.subr.mxu0 0.0
    %558 = vmatpush2.msra.mxu0 0.0
    %559 = vmatprep.subr.mxu0 0.0
    %560 = vmatpush2.msra.mxu0 0.0
    %561 = vmatprep.subr.mxu0 0.0
    %562 = vmatpush2.msra.mxu0 0.0
    %563 = vmatprep.subr.mxu0 0.0
    %564 = vmatpush2.msra.mxu0 0.0
    %565 = vmatprep.subr.mxu0 0.0
    %566 = vmatpush2.msra.mxu0 0.0
    %567 = vmatprep.subr.mxu0 0.0
    %568 = vmatpush2.msra.mxu0 0.0
    %569 = vmatprep.subr.mxu0 0.0
    %570 = vmatpush2.msra.mxu0 0.0
    %571 = vmatprep.subr.mxu0 0.0
    %572 = vmatpush2.msra.mxu0 0.0
    %573 = vmatprep.mubr.f32.mxu0 0.0
    %574 = vmatmul.mubr.f32.gmra.mxu0 %v436
    %v575 = vpop.f32.mrf.mxu0
    %v576 = vadd.f32 %v54, %v575
    %v577 = vpop.f32.mrf.mxu0
    %578 = vdwg.mxu0
    %579 = vmatprep.subr.mxu0 %v269
    %580 = vmatpush1.msra.mxu0 %v268
    %581 = vmatprep.subr.mxu0 %v266
    %582 = vmatpush1.msra.mxu0 %v265
    %583 = vmatprep.subr.mxu0 %v263
    %584 = vmatpush1.msra.mxu0 %v262
    %585 = vmatprep.subr.mxu0 %v260
    %586 = vmatpush1.msra.mxu0 %v259
    %587 = vmatprep.subr.mxu0 %v257
    %588 = vmatpush1.msra.mxu0 %v256
    %589 = vmatprep.subr.mxu0 %v254
    %590 = vmatpush1.msra.mxu0 %v253
    %591 = vmatprep.subr.mxu0 %v251
    %592 = vmatpush1.msra.mxu0 %v250
    %593 = vmatprep.subr.mxu0 %v248
    %594 = vmatpush1.msra.mxu0 %v247
    %595 = vmatprep.subr.mxu0 %v245
    %596 = vmatpush1.msra.mxu0 %v244
    %597 = vmatprep.subr.mxu0 %v242
    %598 = vmatpush1.msra.mxu0 %v241
    %599 = vmatprep.subr.mxu0 %v239
    %600 = vmatpush1.msra.mxu0 %v238
    %601 = vmatprep.subr.mxu0 %v236
    %602 = vmatpush1.msra.mxu0 %v235
    %603 = vmatprep.subr.mxu0 %v233
    %604 = vmatpush1.msra.mxu0 %v232
    %605 = vmatprep.subr.mxu0 %v230
    %606 = vmatpush1.msra.mxu0 %v229
    %607 = vmatprep.subr.mxu0 %v227
    %608 = vmatpush1.msra.mxu0 %v226
    %609 = vmatprep.subr.mxu0 %v224
    %610 = vmatpush1.msra.mxu0 %v223
    %611 = vmatprep.subr.mxu0 0.0
    %612 = vmatpush2.msra.mxu0 0.0
    %613 = vmatprep.subr.mxu0 0.0
    %614 = vmatpush2.msra.mxu0 0.0
    %615 = vmatprep.subr.mxu0 0.0
    %616 = vmatpush2.msra.mxu0 0.0
    %617 = vmatprep.subr.mxu0 0.0
    %618 = vmatpush2.msra.mxu0 0.0
    %619 = vmatprep.subr.mxu0 0.0
    %620 = vmatpush2.msra.mxu0 0.0
    %621 = vmatprep.subr.mxu0 0.0
    %622 = vmatpush2.msra.mxu0 0.0
    %623 = vmatprep.subr.mxu0 0.0
    %624 = vmatpush2.msra.mxu0 0.0
    %625 = vmatprep.subr.mxu0 0.0
    %626 = vmatpush2.msra.mxu0 0.0
    %627 = vmatprep.subr.mxu0 0.0
    %628 = vmatpush2.msra.mxu0 0.0
    %629 = vmatprep.subr.mxu0 0.0
    %630 = vmatpush2.msra.mxu0 0.0
    %631 = vmatprep.subr.mxu0 0.0
    %632 = vmatpush2.msra.mxu0 0.0
    %633 = vmatprep.subr.mxu0 0.0
    %634 = vmatpush2.msra.mxu0 0.0
    %635 = vmatprep.subr.mxu0 0.0
    %636 = vmatpush2.msra.mxu0 0.0
    %637 = vmatprep.subr.mxu0 0.0
    %638 = vmatpush2.msra.mxu0 0.0
    %639 = vmatprep.subr.mxu0 0.0
    %640 = vmatpush2.msra.mxu0 0.0
    %641 = vmatprep.subr.mxu0 0.0
    %642 = vmatpush2.msra.mxu0 0.0
    %643 = vmatprep.mubr.f32.mxu0 0.0
    %644 = vmatmul.mubr.f32.gmra.mxu0 %v432
    %v645 = vpop.f32.mrf.mxu0
    %v646 = vadd.f32 0.0, %v645
    %v647 = vpop.f32.mrf.mxu0
    %v648 = vadd.f32 0.0, %v647
    %649 = vdwg.mxu0
    %650 = vmatprep.subr.mxu0 0.0
    %651 = vmatpush1.msra.mxu0 %v270
    %652 = vmatprep.subr.mxu0 0.0
    %653 = vmatpush1.msra.mxu0 %v267
    %654 = vmatprep.subr.mxu0 0.0
    %655 = vmatpush1.msra.mxu0 %v264
    %656 = vmatprep.subr.mxu0 0.0
    %657 = vmatpush1.msra.mxu0 %v261
    %658 = vmatprep.subr.mxu0 0.0
    %659 = vmatpush1.msra.mxu0 %v258
    %660 = vmatprep.subr.mxu0 0.0
    %661 = vmatpush1.msra.mxu0 %v255
    %662 = vmatprep.subr.mxu0 0.0
    %663 = vmatpush1.msra.mxu0 %v252
    %664 = vmatprep.subr.mxu0 0.0
    %665 = vmatpush1.msra.mxu0 %v249
    %666 = vmatprep.subr.mxu0 0.0
    %667 = vmatpush1.msra.mxu0 %v246
    %668 = vmatprep.subr.mxu0 0.0
    %669 = vmatpush1.msra.mxu0 %v243
    %670 = vmatprep.subr.mxu0 0.0
    %671 = vmatpush1.msra.mxu0 %v240
    %672 = vmatprep.subr.mxu0 0.0
    %673 = vmatpush1.msra.mxu0 %v237
    %674 = vmatprep.subr.mxu0 0.0
    %675 = vmatpush1.msra.mxu0 %v234
    %676 = vmatprep.subr.mxu0 0.0
    %677 = vmatpush1.msra.mxu0 %v231
    %678 = vmatprep.subr.mxu0 0.0
    %679 = vmatpush1.msra.mxu0 %v228
    %680 = vmatprep.subr.mxu0 0.0
    %681 = vmatpush1.msra.mxu0 %v225
    %682 = vmatprep.subr.mxu0 0.0
    %683 = vmatpush2.msra.mxu0 0.0
    %684 = vmatprep.subr.mxu0 0.0
    %685 = vmatpush2.msra.mxu0 0.0
    %686 = vmatprep.subr.mxu0 0.0
    %687 = vmatpush2.msra.mxu0 0.0
    %688 = vmatprep.subr.mxu0 0.0
    %689 = vmatpush2.msra.mxu0 0.0
    %690 = vmatprep.subr.mxu0 0.0
    %691 = vmatpush2.msra.mxu0 0.0
    %692 = vmatprep.subr.mxu0 0.0
    %693 = vmatpush2.msra.mxu0 0.0
    %694 = vmatprep.subr.mxu0 0.0
    %695 = vmatpush2.msra.mxu0 0.0
    %696 = vmatprep.subr.mxu0 0.0
    %697 = vmatpush2.msra.mxu0 0.0
    %698 = vmatprep.subr.mxu0 0.0
    %699 = vmatpush2.msra.mxu0 0.0
    %700 = vmatprep.subr.mxu0 0.0
    %701 = vmatpush2.msra.mxu0 0.0
    %702 = vmatprep.subr.mxu0 0.0
    %703 = vmatpush2.msra.mxu0 0.0
    %704 = vmatprep.subr.mxu0 0.0
    %705 = vmatpush2.msra.mxu0 0.0
    %706 = vmatprep.subr.mxu0 0.0
    %707 = vmatpush2.msra.mxu0 0.0
    %708 = vmatprep.subr.mxu0 0.0
    %709 = vmatpush2.msra.mxu0 0.0
    %710 = vmatprep.subr.mxu0 0.0
    %711 = vmatpush2.msra.mxu0 0.0
    %712 = vmatprep.subr.mxu0 0.0
    %713 = vmatpush2.msra.mxu0 0.0
    %714 = vmatprep.mubr.f32.mxu0 0.0
    %715 = vmatmul.mubr.f32.gmra.mxu0 %v432
    %v716 = vpop.f32.mrf.mxu0
    %v717 = vadd.f32 0.0, %v716
    %v718 = vpop.f32.mrf.mxu0
    %719 = vdwg.mxu0
    %v720 = vadd.f32 %v505, %v646
    %v721 = vxor.u32 %v720, 2147483648
    %v722 = vmul.f32 %v721, 1.442695
    %v723 = vpow.pop %v722
    %v724 = vadd.f32 %v723, 1.0
    %v725 = vrcp.pop %v724
    %v726 = vmul.f32 1.0, %v725
    %v727 = vadd.f32 %v507, %v648
    %v728 = vxor.u32 %v727, 2147483648
    %v729 = vmul.f32 %v728, 1.442695
    %v730 = vpow.pop %v729
    %v731 = vadd.f32 %v730, 1.0
    %v732 = vrcp.pop %v731
    %v733 = vmul.f32 1.0, %v732
    %v734 = vadd.f32 %v717, %v63
    %v735 = vmul.f32 %v726, %v734
    %v736 = vadd.f32 %v576, %v735
    %v737 = vtanh.pop %v736
    %v738 = vsub.f32 %v432, %v737
    %v739 = vmul.f32 %v733, %v738
    %v740 = vadd.f32 %v737, %v739
    %s741 = scalar_lea.vmem %s0, 16
    %v742 = vld [vmem:[%s741] sm:$0xff]
    %v744 = vsel %vm71, %v742, 0
    %746 = vmatprep.subr.mxu0 0.0
    %747 = vmatpush1.msra.mxu0 0.0
    %748 = vmatprep.subr.mxu0 0.0
    %749 = vmatpush1.msra.mxu0 0.0
    %750 = vmatprep.subr.mxu0 0.0
    %751 = vmatpush1.msra.mxu0 0.0
    %752 = vmatprep.subr.mxu0 0.0
    %753 = vmatpush1.msra.mxu0 0.0
    %754 = vmatprep.subr.mxu0 0.0
    %755 = vmatpush1.msra.mxu0 0.0
    %756 = vmatprep.subr.mxu0 0.0
    %757 = vmatpush1.msra.mxu0 0.0
    %758 = vmatprep.subr.mxu0 0.0
    %759 = vmatpush1.msra.mxu0 0.0
    %760 = vmatprep.subr.mxu0 0.0
    %761 = vmatpush1.msra.mxu0 0.0
    %762 = vmatprep.subr.mxu0 0.0
    %763 = vmatpush1.msra.mxu0 0.0
    %764 = vmatprep.subr.mxu0 0.0
    %765 = vmatpush1.msra.mxu0 0.0
    %766 = vmatprep.subr.mxu0 0.0
    %767 = vmatpush1.msra.mxu0 0.0
    %768 = vmatprep.subr.mxu0 0.0
    %769 = vmatpush1.msra.mxu0 0.0
    %770 = vmatprep.subr.mxu0 0.0
    %771 = vmatpush1.msra.mxu0 0.0
    %772 = vmatprep.subr.mxu0 0.0
    %773 = vmatpush1.msra.mxu0 0.0
    %774 = vmatprep.subr.mxu0 0.0
    %775 = vmatpush1.msra.mxu0 0.0
    %776 = vmatprep.subr.mxu0 %v78
    %777 = vmatpush1.msra.mxu0 %v76
    %778 = vmatprep.subr.mxu0 0.0
    %779 = vmatpush2.msra.mxu0 0.0
    %780 = vmatprep.subr.mxu0 0.0
    %781 = vmatpush2.msra.mxu0 0.0
    %782 = vmatprep.subr.mxu0 0.0
    %783 = vmatpush2.msra.mxu0 0.0
    %784 = vmatprep.subr.mxu0 0.0
    %785 = vmatpush2.msra.mxu0 0.0
    %786 = vmatprep.subr.mxu0 0.0
    %787 = vmatpush2.msra.mxu0 0.0
    %788 = vmatprep.subr.mxu0 0.0
    %789 = vmatpush2.msra.mxu0 0.0
    %790 = vmatprep.subr.mxu0 0.0
    %791 = vmatpush2.msra.mxu0 0.0
    %792 = vmatprep.subr.mxu0 0.0
    %793 = vmatpush2.msra.mxu0 0.0
    %794 = vmatprep.subr.mxu0 0.0
    %795 = vmatpush2.msra.mxu0 0.0
    %796 = vmatprep.subr.mxu0 0.0
    %797 = vmatpush2.msra.mxu0 0.0
    %798 = vmatprep.subr.mxu0 0.0
    %799 = vmatpush2.msra.mxu0 0.0
    %800 = vmatprep.subr.mxu0 0.0
    %801 = vmatpush2.msra.mxu0 0.0
    %802 = vmatprep.subr.mxu0 0.0
    %803 = vmatpush2.msra.mxu0 0.0
    %804 = vmatprep.subr.mxu0 0.0
    %805 = vmatpush2.msra.mxu0 0.0
    %806 = vmatprep.subr.mxu0 0.0
    %807 = vmatpush2.msra.mxu0 0.0
    %808 = vmatprep.subr.mxu0 0.0
    %809 = vmatpush2.msra.mxu0 0.0
    %810 = vmatprep.mubr.f32.mxu0 0.0
    %811 = vmatmul.mubr.f32.gmra.mxu0 %v744
    %v812 = vpop.f32.mrf.mxu0
    %v813 = vadd.f32 %v46, %v812
    %v814 = vpop.f32.mrf.mxu0
    %v815 = vadd.f32 %v50, %v814
    %816 = vdwg.mxu0
    %817 = vmatprep.subr.mxu0 0.0
    %818 = vmatpush1.msra.mxu0 0.0
    %819 = vmatprep.subr.mxu0 0.0
    %820 = vmatpush1.msra.mxu0 0.0
    %821 = vmatprep.subr.mxu0 0.0
    %822 = vmatpush1.msra.mxu0 0.0
    %823 = vmatprep.subr.mxu0 0.0
    %824 = vmatpush1.msra.mxu0 0.0
    %825 = vmatprep.subr.mxu0 0.0
    %826 = vmatpush1.msra.mxu0 0.0
    %827 = vmatprep.subr.mxu0 0.0
    %828 = vmatpush1.msra.mxu0 0.0
    %829 = vmatprep.subr.mxu0 0.0
    %830 = vmatpush1.msra.mxu0 0.0
    %831 = vmatprep.subr.mxu0 0.0
    %832 = vmatpush1.msra.mxu0 0.0
    %833 = vmatprep.subr.mxu0 0.0
    %834 = vmatpush1.msra.mxu0 0.0
    %835 = vmatprep.subr.mxu0 0.0
    %836 = vmatpush1.msra.mxu0 0.0
    %837 = vmatprep.subr.mxu0 0.0
    %838 = vmatpush1.msra.mxu0 0.0
    %839 = vmatprep.subr.mxu0 0.0
    %840 = vmatpush1.msra.mxu0 0.0
    %841 = vmatprep.subr.mxu0 0.0
    %842 = vmatpush1.msra.mxu0 0.0
    %843 = vmatprep.subr.mxu0 0.0
    %844 = vmatpush1.msra.mxu0 0.0
    %845 = vmatprep.subr.mxu0 0.0
    %846 = vmatpush1.msra.mxu0 0.0
    %847 = vmatprep.subr.mxu0 0.0
    %848 = vmatpush1.msra.mxu0 %v80
    %849 = vmatprep.subr.mxu0 0.0
    %850 = vmatpush2.msra.mxu0 0.0
    %851 = vmatprep.subr.mxu0 0.0
    %852 = vmatpush2.msra.mxu0 0.0
    %853 = vmatprep.subr.mxu0 0.0
    %854 = vmatpush2.msra.mxu0 0.0
    %855 = vmatprep.subr.mxu0 0.0
    %856 = vmatpush2.msra.mxu0 0.0
    %857 = vmatprep.subr.mxu0 0.0
    %858 = vmatpush2.msra.mxu0 0.0
    %859 = vmatprep.subr.mxu0 0.0
    %860 = vmatpush2.msra.mxu0 0.0
    %861 = vmatprep.subr.mxu0 0.0
    %862 = vmatpush2.msra.mxu0 0.0
    %863 = vmatprep.subr.mxu0 0.0
    %864 = vmatpush2.msra.mxu0 0.0
    %865 = vmatprep.subr.mxu0 0.0
    %866 = vmatpush2.msra.mxu0 0.0
    %867 = vmatprep.subr.mxu0 0.0
    %868 = vmatpush2.msra.mxu0 0.0
    %869 = vmatprep.subr.mxu0 0.0
    %870 = vmatpush2.msra.mxu0 0.0
    %871 = vmatprep.subr.mxu0 0.0
    %872 = vmatpush2.msra.mxu0 0.0
    %873 = vmatprep.subr.mxu0 0.0
    %874 = vmatpush2.msra.mxu0 0.0
    %875 = vmatprep.subr.mxu0 0.0
    %876 = vmatpush2.msra.mxu0 0.0
    %877 = vmatprep.subr.mxu0 0.0
    %878 = vmatpush2.msra.mxu0 0.0
    %879 = vmatprep.subr.mxu0 0.0
    %880 = vmatpush2.msra.mxu0 0.0
    %881 = vmatprep.mubr.f32.mxu0 0.0
    %882 = vmatmul.mubr.f32.gmra.mxu0 %v744
    %v883 = vpop.f32.mrf.mxu0
    %v884 = vadd.f32 %v54, %v883
    %v885 = vpop.f32.mrf.mxu0
    %886 = vdwg.mxu0
    %887 = vmatprep.subr.mxu0 %v269
    %888 = vmatpush1.msra.mxu0 %v268
    %889 = vmatprep.subr.mxu0 %v266
    %890 = vmatpush1.msra.mxu0 %v265
    %891 = vmatprep.subr.mxu0 %v263
    %892 = vmatpush1.msra.mxu0 %v262
    %893 = vmatprep.subr.mxu0 %v260
    %894 = vmatpush1.msra.mxu0 %v259
    %895 = vmatprep.subr.mxu0 %v257
    %896 = vmatpush1.msra.mxu0 %v256
    %897 = vmatprep.subr.mxu0 %v254
    %898 = vmatpush1.msra.mxu0 %v253
    %899 = vmatprep.subr.mxu0 %v251
    %900 = vmatpush1.msra.mxu0 %v250
    %901 = vmatprep.subr.mxu0 %v248
    %902 = vmatpush1.msra.mxu0 %v247
    %903 = vmatprep.subr.mxu0 %v245
    %904 = vmatpush1.msra.mxu0 %v244
    %905 = vmatprep.subr.mxu0 %v242
    %906 = vmatpush1.msra.mxu0 %v241
    %907 = vmatprep.subr.mxu0 %v239
    %908 = vmatpush1.msra.mxu0 %v238
    %909 = vmatprep.subr.mxu0 %v236
    %910 = vmatpush1.msra.mxu0 %v235
    %911 = vmatprep.subr.mxu0 %v233
    %912 = vmatpush1.msra.mxu0 %v232
    %913 = vmatprep.subr.mxu0 %v230
    %914 = vmatpush1.msra.mxu0 %v229
    %915 = vmatprep.subr.mxu0 %v227
    %916 = vmatpush1.msra.mxu0 %v226
    %917 = vmatprep.subr.mxu0 %v224
    %918 = vmatpush1.msra.mxu0 %v223
    %919 = vmatprep.subr.mxu0 0.0
    %920 = vmatpush2.msra.mxu0 0.0
    %921 = vmatprep.subr.mxu0 0.0
    %922 = vmatpush2.msra.mxu0 0.0
    %923 = vmatprep.subr.mxu0 0.0
    %924 = vmatpush2.msra.mxu0 0.0
    %925 = vmatprep.subr.mxu0 0.0
    %926 = vmatpush2.msra.mxu0 0.0
    %927 = vmatprep.subr.mxu0 0.0
    %928 = vmatpush2.msra.mxu0 0.0
    %929 = vmatprep.subr.mxu0 0.0
    %930 = vmatpush2.msra.mxu0 0.0
    %931 = vmatprep.subr.mxu0 0.0
    %932 = vmatpush2.msra.mxu0 0.0
    %933 = vmatprep.subr.mxu0 0.0
    %934 = vmatpush2.msra.mxu0 0.0
    %935 = vmatprep.subr.mxu0 0.0
    %936 = vmatpush2.msra.mxu0 0.0
    %937 = vmatprep.subr.mxu0 0.0
    %938 = vmatpush2.msra.mxu0 0.0
    %939 = vmatprep.subr.mxu0 0.0
    %940 = vmatpush2.msra.mxu0 0.0
    %941 = vmatprep.subr.mxu0 0.0
    %942 = vmatpush2.msra.mxu0 0.0
    %943 = vmatprep.subr.mxu0 0.0
    %944 = vmatpush2.msra.mxu0 0.0
    %945 = vmatprep.subr.mxu0 0.0
    %946 = vmatpush2.msra.mxu0 0.0
    %947 = vmatprep.subr.mxu0 0.0
    %948 = vmatpush2.msra.mxu0 0.0
    %949 = vmatprep.subr.mxu0 0.0
    %950 = vmatpush2.msra.mxu0 0.0
    %951 = vmatprep.mubr.f32.mxu0 0.0
    %952 = vmatmul.mubr.f32.gmra.mxu0 %v740
    %v953 = vpop.f32.mrf.mxu0
    %v954 = vadd.f32 0.0, %v953
    %v955 = vpop.f32.mrf.mxu0
    %v956 = vadd.f32 0.0, %v955
    %957 = vdwg.mxu0
    %958 = vmatprep.subr.mxu0 0.0
    %959 = vmatpush1.msra.mxu0 %v270
    %960 = vmatprep.subr.mxu0 0.0
    %961 = vmatpush1.msra.mxu0 %v267
    %962 = vmatprep.subr.mxu0 0.0
    %963 = vmatpush1.msra.mxu0 %v264
    %964 = vmatprep.subr.mxu0 0.0
    %965 = vmatpush1.msra.mxu0 %v261
    %966 = vmatprep.subr.mxu0 0.0
    %967 = vmatpush1.msra.mxu0 %v258
    %968 = vmatprep.subr.mxu0 0.0
    %969 = vmatpush1.msra.mxu0 %v255
    %970 = vmatprep.subr.mxu0 0.0
    %971 = vmatpush1.msra.mxu0 %v252
    %972 = vmatprep.subr.mxu0 0.0
    %973 = vmatpush1.msra.mxu0 %v249
    %974 = vmatprep.subr.mxu0 0.0
    %975 = vmatpush1.msra.mxu0 %v246
    %976 = vmatprep.subr.mxu0 0.0
    %977 = vmatpush1.msra.mxu0 %v243
    %978 = vmatprep.subr.mxu0 0.0
    %979 = vmatpush1.msra.mxu0 %v240
    %980 = vmatprep.subr.mxu0 0.0
    %981 = vmatpush1.msra.mxu0 %v237
    %982 = vmatprep.subr.mxu0 0.0
    %983 = vmatpush1.msra.mxu0 %v234
    %984 = vmatprep.subr.mxu0 0.0
    %985 = vmatpush1.msra.mxu0 %v231
    %986 = vmatprep.subr.mxu0 0.0
    %987 = vmatpush1.msra.mxu0 %v228
    %988 = vmatprep.subr.mxu0 0.0
    %989 = vmatpush1.msra.mxu0 %v225
    %990 = vmatprep.subr.mxu0 0.0
    %991 = vmatpush2.msra.mxu0 0.0
    %992 = vmatprep.subr.mxu0 0.0
    %993 = vmatpush2.msra.mxu0 0.0
    %994 = vmatprep.subr.mxu0 0.0
    %995 = vmatpush2.msra.mxu0 0.0
    %996 = vmatprep.subr.mxu0 0.0
    %997 = vmatpush2.msra.mxu0 0.0
    %998 = vmatprep.subr.mxu0 0.0
    %999 = vmatpush2.msra.mxu0 0.0
    %1000 = vmatprep.subr.mxu0 0.0
    %1001 = vmatpush2.msra.mxu0 0.0
    %1002 = vmatprep.subr.mxu0 0.0
    %1003 = vmatpush2.msra.mxu0 0.0
    %1004 = vmatprep.subr.mxu0 0.0
    %1005 = vmatpush2.msra.mxu0 0.0
    %1006 = vmatprep.subr.mxu0 0.0
    %1007 = vmatpush2.msra.mxu0 0.0
    %1008 = vmatprep.subr.mxu0 0.0
    %1009 = vmatpush2.msra.mxu0 0.0
    %1010 = vmatprep.subr.mxu0 0.0
    %1011 = vmatpush2.msra.mxu0 0.0
    %1012 = vmatprep.subr.mxu0 0.0
    %1013 = vmatpush2.msra.mxu0 0.0
    %1014 = vmatprep.subr.mxu0 0.0
    %1015 = vmatpush2.msra.mxu0 0.0
    %1016 = vmatprep.subr.mxu0 0.0
    %1017 = vmatpush2.msra.mxu0 0.0
    %1018 = vmatprep.subr.mxu0 0.0
    %1019 = vmatpush2.msra.mxu0 0.0
    %1020 = vmatprep.subr.mxu0 0.0
    %1021 = vmatpush2.msra.mxu0 0.0
    %1022 = vmatprep.mubr.f32.mxu0 0.0
    %1023 = vmatmul.mubr.f32.gmra.mxu0 %v740
    %v1024 = vpop.f32.mrf.mxu0
    %v1025 = vadd.f32 0.0, %v1024
    %v1026 = vpop.f32.mrf.mxu0
    %1027 = vdwg.mxu0
    %v1028 = vadd.f32 %v813, %v954
    %v1029 = vxor.u32 %v1028, 2147483648
    %v1030 = vmul.f32 %v1029, 1.442695
    %v1031 = vpow.pop %v1030
    %v1032 = vadd.f32 %v1031, 1.0
    %v1033 = vrcp.pop %v1032
    %v1034 = vmul.f32 1.0, %v1033
    %v1035 = vadd.f32 %v815, %v956
    %v1036 = vxor.u32 %v1035, 2147483648
    %v1037 = vmul.f32 %v1036, 1.442695
    %v1038 = vpow.pop %v1037
    %v1039 = vadd.f32 %v1038, 1.0
    %v1040 = vrcp.pop %v1039
    %v1041 = vmul.f32 1.0, %v1040
    %v1042 = vadd.f32 %v1025, %v63
    %v1043 = vmul.f32 %v1034, %v1042
    %v1044 = vadd.f32 %v884, %v1043
    %v1045 = vtanh.pop %v1044
    %v1046 = vsub.f32 %v740, %v1045
    %v1047 = vmul.f32 %v1041, %v1046
    %v1048 = vadd.f32 %v1045, %v1047
    %s1049 = scalar_lea.vmem %s0, 24
    %v1050 = vld [vmem:[%s1049] sm:$0xff]
    %v1052 = vsel %vm71, %v1050, 0
    %1054 = vmatprep.subr.mxu0 0.0
    %1055 = vmatpush1.msra.mxu0 0.0
    %1056 = vmatprep.subr.mxu0 0.0
    %1057 = vmatpush1.msra.mxu0 0.0
    %1058 = vmatprep.subr.mxu0 0.0
    %1059 = vmatpush1.msra.mxu0 0.0
    %1060 = vmatprep.subr.mxu0 0.0
    %1061 = vmatpush1.msra.mxu0 0.0
    %1062 = vmatprep.subr.mxu0 0.0
    %1063 = vmatpush1.msra.mxu0 0.0
    %1064 = vmatprep.subr.mxu0 0.0
    %1065 = vmatpush1.msra.mxu0 0.0
    %1066 = vmatprep.subr.mxu0 0.0
    %1067 = vmatpush1.msra.mxu0 0.0
    %1068 = vmatprep.subr.mxu0 0.0
    %1069 = vmatpush1.msra.mxu0 0.0
    %1070 = vmatprep.subr.mxu0 0.0
    %1071 = vmatpush1.msra.mxu0 0.0
    %1072 = vmatprep.subr.mxu0 0.0
    %1073 = vmatpush1.msra.mxu0 0.0
    %1074 = vmatprep.subr.mxu0 0.0
    %1075 = vmatpush1.msra.mxu0 0.0
    %1076 = vmatprep.subr.mxu0 0.0
    %1077 = vmatpush1.msra.mxu0 0.0
    %1078 = vmatprep.subr.mxu0 0.0
    %1079 = vmatpush1.msra.mxu0 0.0
    %1080 = vmatprep.subr.mxu0 0.0
    %1081 = vmatpush1.msra.mxu0 0.0
    %1082 = vmatprep.subr.mxu0 0.0
    %1083 = vmatpush1.msra.mxu0 0.0
    %1084 = vmatprep.subr.mxu0 %v78
    %1085 = vmatpush1.msra.mxu0 %v76
    %1086 = vmatprep.subr.mxu0 0.0
    %1087 = vmatpush2.msra.mxu0 0.0
    %1088 = vmatprep.subr.mxu0 0.0
    %1089 = vmatpush2.msra.mxu0 0.0
    %1090 = vmatprep.subr.mxu0 0.0
    %1091 = vmatpush2.msra.mxu0 0.0
    %1092 = vmatprep.subr.mxu0 0.0
    %1093 = vmatpush2.msra.mxu0 0.0
    %1094 = vmatprep.subr.mxu0 0.0
    %1095 = vmatpush2.msra.mxu0 0.0
    %1096 = vmatprep.subr.mxu0 0.0
    %1097 = vmatpush2.msra.mxu0 0.0
    %1098 = vmatprep.subr.mxu0 0.0
    %1099 = vmatpush2.msra.mxu0 0.0
    %1100 = vmatprep.subr.mxu0 0.0
    %1101 = vmatpush2.msra.mxu0 0.0
    %1102 = vmatprep.subr.mxu0 0.0
    %1103 = vmatpush2.msra.mxu0 0.0
    %1104 = vmatprep.subr.mxu0 0.0
    %1105 = vmatpush2.msra.mxu0 0.0
    %1106 = vmatprep.subr.mxu0 0.0
    %1107 = vmatpush2.msra.mxu0 0.0
    %1108 = vmatprep.subr.mxu0 0.0
    %1109 = vmatpush2.msra.mxu0 0.0
    %1110 = vmatprep.subr.mxu0 0.0
    %1111 = vmatpush2.msra.mxu0 0.0
    %1112 = vmatprep.subr.mxu0 0.0
    %1113 = vmatpush2.msra.mxu0 0.0
    %1114 = vmatprep.subr.mxu0 0.0
    %1115 = vmatpush2.msra.mxu0 0.0
    %1116 = vmatprep.subr.mxu0 0.0
    %1117 = vmatpush2.msra.mxu0 0.0
    %1118 = vmatprep.mubr.f32.mxu0 0.0
    %1119 = vmatmul.mubr.f32.gmra.mxu0 %v1052
    %v1120 = vpop.f32.mrf.mxu0
    %v1121 = vadd.f32 %v46, %v1120
    %v1122 = vpop.f32.mrf.mxu0
    %v1123 = vadd.f32 %v50, %v1122
    %1124 = vdwg.mxu0
    %1125 = vmatprep.subr.mxu0 0.0
    %1126 = vmatpush1.msra.mxu0 0.0
    %1127 = vmatprep.subr.mxu0 0.0
    %1128 = vmatpush1.msra.mxu0 0.0
    %1129 = vmatprep.subr.mxu0 0.0
    %1130 = vmatpush1.msra.mxu0 0.0
    %1131 = vmatprep.subr.mxu0 0.0
    %1132 = vmatpush1.msra.mxu0 0.0
    %1133 = vmatprep.subr.mxu0 0.0
    %1134 = vmatpush1.msra.mxu0 0.0
    %1135 = vmatprep.subr.mxu0 0.0
    %1136 = vmatpush1.msra.mxu0 0.0
    %1137 = vmatprep.subr.mxu0 0.0
    %1138 = vmatpush1.msra.mxu0 0.0
    %1139 = vmatprep.subr.mxu0 0.0
    %1140 = vmatpush1.msra.mxu0 0.0
    %1141 = vmatprep.subr.mxu0 0.0
    %1142 = vmatpush1.msra.mxu0 0.0
    %1143 = vmatprep.subr.mxu0 0.0
    %1144 = vmatpush1.msra.mxu0 0.0
    %1145 = vmatprep.subr.mxu0 0.0
    %1146 = vmatpush1.msra.mxu0 0.0
    %1147 = vmatprep.subr.mxu0 0.0
    %1148 = vmatpush1.msra.mxu0 0.0
    %1149 = vmatprep.subr.mxu0 0.0
    %1150 = vmatpush1.msra.mxu0 0.0
    %1151 = vmatprep.subr.mxu0 0.0
    %1152 = vmatpush1.msra.mxu0 0.0
    %1153 = vmatprep.subr.mxu0 0.0
    %1154 = vmatpush1.msra.mxu0 0.0
    %1155 = vmatprep.subr.mxu0 0.0
    %1156 = vmatpush1.msra.mxu0 %v80
    %1157 = vmatprep.subr.mxu0 0.0
    %1158 = vmatpush2.msra.mxu0 0.0
    %1159 = vmatprep.subr.mxu0 0.0
    %1160 = vmatpush2.msra.mxu0 0.0
    %1161 = vmatprep.subr.mxu0 0.0
    %1162 = vmatpush2.msra.mxu0 0.0
    %1163 = vmatprep.subr.mxu0 0.0
    %1164 = vmatpush2.msra.mxu0 0.0
    %1165 = vmatprep.subr.mxu0 0.0
    %1166 = vmatpush2.msra.mxu0 0.0
    %1167 = vmatprep.subr.mxu0 0.0
    %1168 = vmatpush2.msra.mxu0 0.0
    %1169 = vmatprep.subr.mxu0 0.0
    %1170 = vmatpush2.msra.mxu0 0.0
    %1171 = vmatprep.subr.mxu0 0.0
    %1172 = vmatpush2.msra.mxu0 0.0
    %1173 = vmatprep.subr.mxu0 0.0
    %1174 = vmatpush2.msra.mxu0 0.0
    %1175 = vmatprep.subr.mxu0 0.0
    %1176 = vmatpush2.msra.mxu0 0.0
    %1177 = vmatprep.subr.mxu0 0.0
    %1178 = vmatpush2.msra.mxu0 0.0
    %1179 = vmatprep.subr.mxu0 0.0
    %1180 = vmatpush2.msra.mxu0 0.0
    %1181 = vmatprep.subr.mxu0 0.0
    %1182 = vmatpush2.msra.mxu0 0.0
    %1183 = vmatprep.subr.mxu0 0.0
    %1184 = vmatpush2.msra.mxu0 0.0
    %1185 = vmatprep.subr.mxu0 0.0
    %1186 = vmatpush2.msra.mxu0 0.0
    %1187 = vmatprep.subr.mxu0 0.0
    %1188 = vmatpush2.msra.mxu0 0.0
    %1189 = vmatprep.mubr.f32.mxu0 0.0
    %1190 = vmatmul.mubr.f32.gmra.mxu0 %v1052
    %v1191 = vpop.f32.mrf.mxu0
    %v1192 = vadd.f32 %v54, %v1191
    %v1193 = vpop.f32.mrf.mxu0
    %1194 = vdwg.mxu0
    %1195 = vmatprep.subr.mxu0 %v269
    %1196 = vmatpush1.msra.mxu0 %v268
    %1197 = vmatprep.subr.mxu0 %v266
    %1198 = vmatpush1.msra.mxu0 %v265
    %1199 = vmatprep.subr.mxu0 %v263
    %1200 = vmatpush1.msra.mxu0 %v262
    %1201 = vmatprep.subr.mxu0 %v260
    %1202 = vmatpush1.msra.mxu0 %v259
    %1203 = vmatprep.subr.mxu0 %v257
    %1204 = vmatpush1.msra.mxu0 %v256
    %1205 = vmatprep.subr.mxu0 %v254
    %1206 = vmatpush1.msra.mxu0 %v253
    %1207 = vmatprep.subr.mxu0 %v251
    %1208 = vmatpush1.msra.mxu0 %v250
    %1209 = vmatprep.subr.mxu0 %v248
    %1210 = vmatpush1.msra.mxu0 %v247
    %1211 = vmatprep.subr.mxu0 %v245
    %1212 = vmatpush1.msra.mxu0 %v244
    %1213 = vmatprep.subr.mxu0 %v242
    %1214 = vmatpush1.msra.mxu0 %v241
    %1215 = vmatprep.subr.mxu0 %v239
    %1216 = vmatpush1.msra.mxu0 %v238
    %1217 = vmatprep.subr.mxu0 %v236
    %1218 = vmatpush1.msra.mxu0 %v235
    %1219 = vmatprep.subr.mxu0 %v233
    %1220 = vmatpush1.msra.mxu0 %v232
    %1221 = vmatprep.subr.mxu0 %v230
    %1222 = vmatpush1.msra.mxu0 %v229
    %1223 = vmatprep.subr.mxu0 %v227
    %1224 = vmatpush1.msra.mxu0 %v226
    %1225 = vmatprep.subr.mxu0 %v224
    %1226 = vmatpush1.msra.mxu0 %v223
    %1227 = vmatprep.subr.mxu0 0.0
    %1228 = vmatpush2.msra.mxu0 0.0
    %1229 = vmatprep.subr.mxu0 0.0
    %1230 = vmatpush2.msra.mxu0 0.0
    %1231 = vmatprep.subr.mxu0 0.0
    %1232 = vmatpush2.msra.mxu0 0.0
    %1233 = vmatprep.subr.mxu0 0.0
    %1234 = vmatpush2.msra.mxu0 0.0
    %1235 = vmatprep.subr.mxu0 0.0
    %1236 = vmatpush2.msra.mxu0 0.0
    %1237 = vmatprep.subr.mxu0 0.0
    %1238 = vmatpush2.msra.mxu0 0.0
    %1239 = vmatprep.subr.mxu0 0.0
    %1240 = vmatpush2.msra.mxu0 0.0
    %1241 = vmatprep.subr.mxu0 0.0
    %1242 = vmatpush2.msra.mxu0 0.0
    %1243 = vmatprep.subr.mxu0 0.0
    %1244 = vmatpush2.msra.mxu0 0.0
    %1245 = vmatprep.subr.mxu0 0.0
    %1246 = vmatpush2.msra.mxu0 0.0
    %1247 = vmatprep.subr.mxu0 0.0
    %1248 = vmatpush2.msra.mxu0 0.0
    %1249 = vmatprep.subr.mxu0 0.0
    %1250 = vmatpush2.msra.mxu0 0.0
    %1251 = vmatprep.subr.mxu0 0.0
    %1252 = vmatpush2.msra.mxu0 0.0
    %1253 = vmatprep.subr.mxu0 0.0
    %1254 = vmatpush2.msra.mxu0 0.0
    %1255 = vmatprep.subr.mxu0 0.0
    %1256 = vmatpush2.msra.mxu0 0.0
    %1257 = vmatprep.subr.mxu0 0.0
    %1258 = vmatpush2.msra.mxu0 0.0
    %1259 = vmatprep.mubr.f32.mxu0 0.0
    %1260 = vmatmul.mubr.f32.gmra.mxu0 %v1048
    %v1261 = vpop.f32.mrf.mxu0
    %v1262 = vadd.f32 0.0, %v1261
    %v1263 = vpop.f32.mrf.mxu0
    %v1264 = vadd.f32 0.0, %v1263
    %1265 = vdwg.mxu0
    %1266 = vmatprep.subr.mxu0 0.0
    %1267 = vmatpush1.msra.mxu0 %v270
    %1268 = vmatprep.subr.mxu0 0.0
    %1269 = vmatpush1.msra.mxu0 %v267
    %1270 = vmatprep.subr.mxu0 0.0
    %1271 = vmatpush1.msra.mxu0 %v264
    %1272 = vmatprep.subr.mxu0 0.0
    %1273 = vmatpush1.msra.mxu0 %v261
    %1274 = vmatprep.subr.mxu0 0.0
    %1275 = vmatpush1.msra.mxu0 %v258
    %1276 = vmatprep.subr.mxu0 0.0
    %1277 = vmatpush1.msra.mxu0 %v255
    %1278 = vmatprep.subr.mxu0 0.0
    %1279 = vmatpush1.msra.mxu0 %v252
    %1280 = vmatprep.subr.mxu0 0.0
    %1281 = vmatpush1.msra.mxu0 %v249
    %1282 = vmatprep.subr.mxu0 0.0
    %1283 = vmatpush1.msra.mxu0 %v246
    %1284 = vmatprep.subr.mxu0 0.0
    %1285 = vmatpush1.msra.mxu0 %v243
    %1286 = vmatprep.subr.mxu0 0.0
    %1287 = vmatpush1.msra.mxu0 %v240
    %1288 = vmatprep.subr.mxu0 0.0
    %1289 = vmatpush1.msra.mxu0 %v237
    %1290 = vmatprep.subr.mxu0 0.0
    %1291 = vmatpush1.msra.mxu0 %v234
    %1292 = vmatprep.subr.mxu0 0.0
    %1293 = vmatpush1.msra.mxu0 %v231
    %1294 = vmatprep.subr.mxu0 0.0
    %1295 = vmatpush1.msra.mxu0 %v228
    %1296 = vmatprep.subr.mxu0 0.0
    %1297 = vmatpush1.msra.mxu0 %v225
    %1298 = vmatprep.subr.mxu0 0.0
    %1299 = vmatpush2.msra.mxu0 0.0
    %1300 = vmatprep.subr.mxu0 0.0
    %1301 = vmatpush2.msra.mxu0 0.0
    %1302 = vmatprep.subr.mxu0 0.0
    %1303 = vmatpush2.msra.mxu0 0.0
    %1304 = vmatprep.subr.mxu0 0.0
    %1305 = vmatpush2.msra.mxu0 0.0
    %1306 = vmatprep.subr.mxu0 0.0
    %1307 = vmatpush2.msra.mxu0 0.0
    %1308 = vmatprep.subr.mxu0 0.0
    %1309 = vmatpush2.msra.mxu0 0.0
    %1310 = vmatprep.subr.mxu0 0.0
    %1311 = vmatpush2.msra.mxu0 0.0
    %1312 = vmatprep.subr.mxu0 0.0
    %1313 = vmatpush2.msra.mxu0 0.0
    %1314 = vmatprep.subr.mxu0 0.0
    %1315 = vmatpush2.msra.mxu0 0.0
    %1316 = vmatprep.subr.mxu0 0.0
    %1317 = vmatpush2.msra.mxu0 0.0
    %1318 = vmatprep.subr.mxu0 0.0
    %1319 = vmatpush2.msra.mxu0 0.0
    %1320 = vmatprep.subr.mxu0 0.0
    %1321 = vmatpush2.msra.mxu0 0.0
    %1322 = vmatprep.subr.mxu0 0.0
    %1323 = vmatpush2.msra.mxu0 0.0
    %1324 = vmatprep.subr.mxu0 0.0
    %1325 = vmatpush2.msra.mxu0 0.0
    %1326 = vmatprep.subr.mxu0 0.0
    %1327 = vmatpush2.msra.mxu0 0.0
    %1328 = vmatprep.subr.mxu0 0.0
    %1329 = vmatpush2.msra.mxu0 0.0
    %1330 = vmatprep.mubr.f32.mxu0 0.0
    %1331 = vmatmul.mubr.f32.gmra.mxu0 %v1048
    %v1332 = vpop.f32.mrf.mxu0
    %v1333 = vadd.f32 0.0, %v1332
    %v1334 = vpop.f32.mrf.mxu0
    %1335 = vdwg.mxu0
    %v1336 = vadd.f32 %v1121, %v1262
    %v1337 = vxor.u32 %v1336, 2147483648
    %v1338 = vmul.f32 %v1337, 1.442695
    %v1339 = vpow.pop %v1338
    %v1340 = vadd.f32 %v1339, 1.0
    %v1341 = vrcp.pop %v1340
    %v1342 = vmul.f32 1.0, %v1341
    %v1343 = vadd.f32 %v1123, %v1264
    %v1344 = vxor.u32 %v1343, 2147483648
    %v1345 = vmul.f32 %v1344, 1.442695
    %v1346 = vpow.pop %v1345
    %v1347 = vadd.f32 %v1346, 1.0
    %v1348 = vrcp.pop %v1347
    %v1349 = vmul.f32 1.0, %v1348
    %v1350 = vadd.f32 %v1333, %v63
    %v1351 = vmul.f32 %v1342, %v1350
    %v1352 = vadd.f32 %v1192, %v1351
    %v1353 = vtanh.pop %v1352
    %v1354 = vsub.f32 %v1048, %v1353
    %v1355 = vmul.f32 %v1349, %v1354
    %v1356 = vadd.f32 %v1353, %v1355
    %s1357 = scalar_lea.vmem %s0, 32
    %v1358 = vld [vmem:[%s1357] sm:$0xff]
    %v1360 = vsel %vm71, %v1358, 0
    %1362 = vmatprep.subr.mxu0 0.0
    %1363 = vmatpush1.msra.mxu0 0.0
    %1364 = vmatprep.subr.mxu0 0.0
    %1365 = vmatpush1.msra.mxu0 0.0
    %1366 = vmatprep.subr.mxu0 0.0
    %1367 = vmatpush1.msra.mxu0 0.0
    %1368 = vmatprep.subr.mxu0 0.0
    %1369 = vmatpush1.msra.mxu0 0.0
    %1370 = vmatprep.subr.mxu0 0.0
    %1371 = vmatpush1.msra.mxu0 0.0
    %1372 = vmatprep.subr.mxu0 0.0
    %1373 = vmatpush1.msra.mxu0 0.0
    %1374 = vmatprep.subr.mxu0 0.0
    %1375 = vmatpush1.msra.mxu0 0.0
    %1376 = vmatprep.subr.mxu0 0.0
    %1377 = vmatpush1.msra.mxu0 0.0
    %1378 = vmatprep.subr.mxu0 0.0
    %1379 = vmatpush1.msra.mxu0 0.0
    %1380 = vmatprep.subr.mxu0 0.0
    %1381 = vmatpush1.msra.mxu0 0.0
    %1382 = vmatprep.subr.mxu0 0.0
    %1383 = vmatpush1.msra.mxu0 0.0
    %1384 = vmatprep.subr.mxu0 0.0
    %1385 = vmatpush1.msra.mxu0 0.0
    %1386 = vmatprep.subr.mxu0 0.0
    %1387 = vmatpush1.msra.mxu0 0.0
    %1388 = vmatprep.subr.mxu0 0.0
    %1389 = vmatpush1.msra.mxu0 0.0
    %1390 = vmatprep.subr.mxu0 0.0
    %1391 = vmatpush1.msra.mxu0 0.0
    %1392 = vmatprep.subr.mxu0 %v78
    %1393 = vmatpush1.msra.mxu0 %v76
    %1394 = vmatprep.subr.mxu0 0.0
    %1395 = vmatpush2.msra.mxu0 0.0
    %1396 = vmatprep.subr.mxu0 0.0
    %1397 = vmatpush2.msra.mxu0 0.0
    %1398 = vmatprep.subr.mxu0 0.0
    %1399 = vmatpush2.msra.mxu0 0.0
    %1400 = vmatprep.subr.mxu0 0.0
    %1401 = vmatpush2.msra.mxu0 0.0
    %1402 = vmatprep.subr.mxu0 0.0
    %1403 = vmatpush2.msra.mxu0 0.0
    %1404 = vmatprep.subr.mxu0 0.0
    %1405 = vmatpush2.msra.mxu0 0.0
    %1406 = vmatprep.subr.mxu0 0.0
    %1407 = vmatpush2.msra.mxu0 0.0
    %1408 = vmatprep.subr.mxu0 0.0
    %1409 = vmatpush2.msra.mxu0 0.0
    %1410 = vmatprep.subr.mxu0 0.0
    %1411 = vmatpush2.msra.mxu0 0.0
    %1412 = vmatprep.subr.mxu0 0.0
    %1413 = vmatpush2.msra.mxu0 0.0
    %1414 = vmatprep.subr.mxu0 0.0
    %1415 = vmatpush2.msra.mxu0 0.0
    %1416 = vmatprep.subr.mxu0 0.0
    %1417 = vmatpush2.msra.mxu0 0.0
    %1418 = vmatprep.subr.mxu0 0.0
    %1419 = vmatpush2.msra.mxu0 0.0
    %1420 = vmatprep.subr.mxu0 0.0
    %1421 = vmatpush2.msra.mxu0 0.0
    %1422 = vmatprep.subr.mxu0 0.0
    %1423 = vmatpush2.msra.mxu0 0.0
    %1424 = vmatprep.subr.mxu0 0.0
    %1425 = vmatpush2.msra.mxu0 0.0
    %1426 = vmatprep.mubr.f32.mxu0 0.0
    %1427 = vmatmul.mubr.f32.gmra.mxu0 %v1360
    %v1428 = vpop.f32.mrf.mxu0
    %v1429 = vadd.f32 %v46, %v1428
    %v1430 = vpop.f32.mrf.mxu0
    %v1431 = vadd.f32 %v50, %v1430
    %1432 = vdwg.mxu0
    %1433 = vmatprep.subr.mxu0 0.0
    %1434 = vmatpush1.msra.mxu0 0.0
    %1435 = vmatprep.subr.mxu0 0.0
    %1436 = vmatpush1.msra.mxu0 0.0
    %1437 = vmatprep.subr.mxu0 0.0
    %1438 = vmatpush1.msra.mxu0 0.0
    %1439 = vmatprep.subr.mxu0 0.0
    %1440 = vmatpush1.msra.mxu0 0.0
    %1441 = vmatprep.subr.mxu0 0.0
    %1442 = vmatpush1.msra.mxu0 0.0
    %1443 = vmatprep.subr.mxu0 0.0
    %1444 = vmatpush1.msra.mxu0 0.0
    %1445 = vmatprep.subr.mxu0 0.0
    %1446 = vmatpush1.msra.mxu0 0.0
    %1447 = vmatprep.subr.mxu0 0.0
    %1448 = vmatpush1.msra.mxu0 0.0
    %1449 = vmatprep.subr.mxu0 0.0
    %1450 = vmatpush1.msra.mxu0 0.0
    %1451 = vmatprep.subr.mxu0 0.0
    %1452 = vmatpush1.msra.mxu0 0.0
    %1453 = vmatprep.subr.mxu0 0.0
    %1454 = vmatpush1.msra.mxu0 0.0
    %1455 = vmatprep.subr.mxu0 0.0
    %1456 = vmatpush1.msra.mxu0 0.0
    %1457 = vmatprep.subr.mxu0 0.0
    %1458 = vmatpush1.msra.mxu0 0.0
    %1459 = vmatprep.subr.mxu0 0.0
    %1460 = vmatpush1.msra.mxu0 0.0
    %1461 = vmatprep.subr.mxu0 0.0
    %1462 = vmatpush1.msra.mxu0 0.0
    %1463 = vmatprep.subr.mxu0 0.0
    %1464 = vmatpush1.msra.mxu0 %v80
    %1465 = vmatprep.subr.mxu0 0.0
    %1466 = vmatpush2.msra.mxu0 0.0
    %1467 = vmatprep.subr.mxu0 0.0
    %1468 = vmatpush2.msra.mxu0 0.0
    %1469 = vmatprep.subr.mxu0 0.0
    %1470 = vmatpush2.msra.mxu0 0.0
    %1471 = vmatprep.subr.mxu0 0.0
    %1472 = vmatpush2.msra.mxu0 0.0
    %1473 = vmatprep.subr.mxu0 0.0
    %1474 = vmatpush2.msra.mxu0 0.0
    %1475 = vmatprep.subr.mxu0 0.0
    %1476 = vmatpush2.msra.mxu0 0.0
    %1477 = vmatprep.subr.mxu0 0.0
    %1478 = vmatpush2.msra.mxu0 0.0
    %1479 = vmatprep.subr.mxu0 0.0
    %1480 = vmatpush2.msra.mxu0 0.0
    %1481 = vmatprep.subr.mxu0 0.0
    %1482 = vmatpush2.msra.mxu0 0.0
    %1483 = vmatprep.subr.mxu0 0.0
    %1484 = vmatpush2.msra.mxu0 0.0
    %1485 = vmatprep.subr.mxu0 0.0
    %1486 = vmatpush2.msra.mxu0 0.0
    %1487 = vmatprep.subr.mxu0 0.0
    %1488 = vmatpush2.msra.mxu0 0.0
    %1489 = vmatprep.subr.mxu0 0.0
    %1490 = vmatpush2.msra.mxu0 0.0
    %1491 = vmatprep.subr.mxu0 0.0
    %1492 = vmatpush2.msra.mxu0 0.0
    %1493 = vmatprep.subr.mxu0 0.0
    %1494 = vmatpush2.msra.mxu0 0.0
    %1495 = vmatprep.subr.mxu0 0.0
    %1496 = vmatpush2.msra.mxu0 0.0
    %1497 = vmatprep.mubr.f32.mxu0 0.0
    %1498 = vmatmul.mubr.f32.gmra.mxu0 %v1360
    %v1499 = vpop.f32.mrf.mxu0
    %v1500 = vadd.f32 %v54, %v1499
    %v1501 = vpop.f32.mrf.mxu0
    %1502 = vdwg.mxu0
    %1503 = vmatprep.subr.mxu0 %v269
    %1504 = vmatpush1.msra.mxu0 %v268
    %1505 = vmatprep.subr.mxu0 %v266
    %1506 = vmatpush1.msra.mxu0 %v265
    %1507 = vmatprep.subr.mxu0 %v263
    %1508 = vmatpush1.msra.mxu0 %v262
    %1509 = vmatprep.subr.mxu0 %v260
    %1510 = vmatpush1.msra.mxu0 %v259
    %1511 = vmatprep.subr.mxu0 %v257
    %1512 = vmatpush1.msra.mxu0 %v256
    %1513 = vmatprep.subr.mxu0 %v254
    %1514 = vmatpush1.msra.mxu0 %v253
    %1515 = vmatprep.subr.mxu0 %v251
    %1516 = vmatpush1.msra.mxu0 %v250
    %1517 = vmatprep.subr.mxu0 %v248
    %1518 = vmatpush1.msra.mxu0 %v247
    %1519 = vmatprep.subr.mxu0 %v245
    %1520 = vmatpush1.msra.mxu0 %v244
    %1521 = vmatprep.subr.mxu0 %v242
    %1522 = vmatpush1.msra.mxu0 %v241
    %1523 = vmatprep.subr.mxu0 %v239
    %1524 = vmatpush1.msra.mxu0 %v238
    %1525 = vmatprep.subr.mxu0 %v236
    %1526 = vmatpush1.msra.mxu0 %v235
    %1527 = vmatprep.subr.mxu0 %v233
    %1528 = vmatpush1.msra.mxu0 %v232
    %1529 = vmatprep.subr.mxu0 %v230
    %1530 = vmatpush1.msra.mxu0 %v229
    %1531 = vmatprep.subr.mxu0 %v227
    %1532 = vmatpush1.msra.mxu0 %v226
    %1533 = vmatprep.subr.mxu0 %v224
    %1534 = vmatpush1.msra.mxu0 %v223
    %1535 = vmatprep.subr.mxu0 0.0
    %1536 = vmatpush2.msra.mxu0 0.0
    %1537 = vmatprep.subr.mxu0 0.0
    %1538 = vmatpush2.msra.mxu0 0.0
    %1539 = vmatprep.subr.mxu0 0.0
    %1540 = vmatpush2.msra.mxu0 0.0
    %1541 = vmatprep.subr.mxu0 0.0
    %1542 = vmatpush2.msra.mxu0 0.0
    %1543 = vmatprep.subr.mxu0 0.0
    %1544 = vmatpush2.msra.mxu0 0.0
    %1545 = vmatprep.subr.mxu0 0.0
    %1546 = vmatpush2.msra.mxu0 0.0
    %1547 = vmatprep.subr.mxu0 0.0
    %1548 = vmatpush2.msra.mxu0 0.0
    %1549 = vmatprep.subr.mxu0 0.0
    %1550 = vmatpush2.msra.mxu0 0.0
    %1551 = vmatprep.subr.mxu0 0.0
    %1552 = vmatpush2.msra.mxu0 0.0
    %1553 = vmatprep.subr.mxu0 0.0
    %1554 = vmatpush2.msra.mxu0 0.0
    %1555 = vmatprep.subr.mxu0 0.0
    %1556 = vmatpush2.msra.mxu0 0.0
    %1557 = vmatprep.subr.mxu0 0.0
    %1558 = vmatpush2.msra.mxu0 0.0
    %1559 = vmatprep.subr.mxu0 0.0
    %1560 = vmatpush2.msra.mxu0 0.0
    %1561 = vmatprep.subr.mxu0 0.0
    %1562 = vmatpush2.msra.mxu0 0.0
    %1563 = vmatprep.subr.mxu0 0.0
    %1564 = vmatpush2.msra.mxu0 0.0
    %1565 = vmatprep.subr.mxu0 0.0
    %1566 = vmatpush2.msra.mxu0 0.0
    %1567 = vmatprep.mubr.f32.mxu0 0.0
    %1568 = vmatmul.mubr.f32.gmra.mxu0 %v1356
    %v1569 = vpop.f32.mrf.mxu0
    %v1570 = vadd.f32 0.0, %v1569
    %v1571 = vpop.f32.mrf.mxu0
    %v1572 = vadd.f32 0.0, %v1571
    %1573 = vdwg.mxu0
    %1574 = vmatprep.subr.mxu0 0.0
    %1575 = vmatpush1.msra.mxu0 %v270
    %1576 = vmatprep.subr.mxu0 0.0
    %1577 = vmatpush1.msra.mxu0 %v267
    %1578 = vmatprep.subr.mxu0 0.0
    %1579 = vmatpush1.msra.mxu0 %v264
    %1580 = vmatprep.subr.mxu0 0.0
    %1581 = vmatpush1.msra.mxu0 %v261
    %1582 = vmatprep.subr.mxu0 0.0
    %1583 = vmatpush1.msra.mxu0 %v258
    %1584 = vmatprep.subr.mxu0 0.0
    %1585 = vmatpush1.msra.mxu0 %v255
    %1586 = vmatprep.subr.mxu0 0.0
    %1587 = vmatpush1.msra.mxu0 %v252
    %1588 = vmatprep.subr.mxu0 0.0
    %1589 = vmatpush1.msra.mxu0 %v249
    %1590 = vmatprep.subr.mxu0 0.0
    %1591 = vmatpush1.msra.mxu0 %v246
    %1592 = vmatprep.subr.mxu0 0.0
    %1593 = vmatpush1.msra.mxu0 %v243
    %1594 = vmatprep.subr.mxu0 0.0
    %1595 = vmatpush1.msra.mxu0 %v240
    %1596 = vmatprep.subr.mxu0 0.0
    %1597 = vmatpush1.msra.mxu0 %v237
    %1598 = vmatprep.subr.mxu0 0.0
    %1599 = vmatpush1.msra.mxu0 %v234
    %1600 = vmatprep.subr.mxu0 0.0
    %1601 = vmatpush1.msra.mxu0 %v231
    %1602 = vmatprep.subr.mxu0 0.0
    %1603 = vmatpush1.msra.mxu0 %v228
    %1604 = vmatprep.subr.mxu0 0.0
    %1605 = vmatpush1.msra.mxu0 %v225
    %1606 = vmatprep.subr.mxu0 0.0
    %1607 = vmatpush2.msra.mxu0 0.0
    %1608 = vmatprep.subr.mxu0 0.0
    %1609 = vmatpush2.msra.mxu0 0.0
    %1610 = vmatprep.subr.mxu0 0.0
    %1611 = vmatpush2.msra.mxu0 0.0
    %1612 = vmatprep.subr.mxu0 0.0
    %1613 = vmatpush2.msra.mxu0 0.0
    %1614 = vmatprep.subr.mxu0 0.0
    %1615 = vmatpush2.msra.mxu0 0.0
    %1616 = vmatprep.subr.mxu0 0.0
    %1617 = vmatpush2.msra.mxu0 0.0
    %1618 = vmatprep.subr.mxu0 0.0
    %1619 = vmatpush2.msra.mxu0 0.0
    %1620 = vmatprep.subr.mxu0 0.0
    %1621 = vmatpush2.msra.mxu0 0.0
    %1622 = vmatprep.subr.mxu0 0.0
    %1623 = vmatpush2.msra.mxu0 0.0
    %1624 = vmatprep.subr.mxu0 0.0
    %1625 = vmatpush2.msra.mxu0 0.0
    %1626 = vmatprep.subr.mxu0 0.0
    %1627 = vmatpush2.msra.mxu0 0.0
    %1628 = vmatprep.subr.mxu0 0.0
    %1629 = vmatpush2.msra.mxu0 0.0
    %1630 = vmatprep.subr.mxu0 0.0
    %1631 = vmatpush2.msra.mxu0 0.0
    %1632 = vmatprep.subr.mxu0 0.0
    %1633 = vmatpush2.msra.mxu0 0.0
    %1634 = vmatprep.subr.mxu0 0.0
    %1635 = vmatpush2.msra.mxu0 0.0
    %1636 = vmatprep.subr.mxu0 0.0
    %1637 = vmatpush2.msra.mxu0 0.0
    %1638 = vmatprep.mubr.f32.mxu0 0.0
    %1639 = vmatmul.mubr.f32.gmra.mxu0 %v1356
    %v1640 = vpop.f32.mrf.mxu0
    %v1641 = vadd.f32 0.0, %v1640
    %v1642 = vpop.f32.mrf.mxu0
    %1643 = vdwg.mxu0
    %v1644 = vadd.f32 %v1429, %v1570
    %v1645 = vxor.u32 %v1644, 2147483648
    %v1646 = vmul.f32 %v1645, 1.442695
    %v1647 = vpow.pop %v1646
    %v1648 = vadd.f32 %v1647, 1.0
    %v1649 = vrcp.pop %v1648
    %v1650 = vmul.f32 1.0, %v1649
    %v1651 = vadd.f32 %v1431, %v1572
    %v1652 = vxor.u32 %v1651, 2147483648
    %v1653 = vmul.f32 %v1652, 1.442695
    %v1654 = vpow.pop %v1653
    %v1655 = vadd.f32 %v1654, 1.0
    %v1656 = vrcp.pop %v1655
    %v1657 = vmul.f32 1.0, %v1656
    %v1658 = vadd.f32 %v1641, %v63
    %v1659 = vmul.f32 %v1650, %v1658
    %v1660 = vadd.f32 %v1500, %v1659
    %v1661 = vtanh.pop %v1660
    %v1662 = vsub.f32 %v1356, %v1661
    %v1663 = vmul.f32 %v1657, %v1662
    %v1664 = vadd.f32 %v1661, %v1663
    %s1665 = scalar_lea.vmem %s0, 40
    %v1666 = vld [vmem:[%s1665] sm:$0xff]
    %v1668 = vsel %vm71, %v1666, 0
    %1670 = vmatprep.subr.mxu0 0.0
    %1671 = vmatpush1.msra.mxu0 0.0
    %1672 = vmatprep.subr.mxu0 0.0
    %1673 = vmatpush1.msra.mxu0 0.0
    %1674 = vmatprep.subr.mxu0 0.0
    %1675 = vmatpush1.msra.mxu0 0.0
    %1676 = vmatprep.subr.mxu0 0.0
    %1677 = vmatpush1.msra.mxu0 0.0
    %1678 = vmatprep.subr.mxu0 0.0
    %1679 = vmatpush1.msra.mxu0 0.0
    %1680 = vmatprep.subr.mxu0 0.0
    %1681 = vmatpush1.msra.mxu0 0.0
    %1682 = vmatprep.subr.mxu0 0.0
    %1683 = vmatpush1.msra.mxu0 0.0
    %1684 = vmatprep.subr.mxu0 0.0
    %1685 = vmatpush1.msra.mxu0 0.0
    %1686 = vmatprep.subr.mxu0 0.0
    %1687 = vmatpush1.msra.mxu0 0.0
    %1688 = vmatprep.subr.mxu0 0.0
    %1689 = vmatpush1.msra.mxu0 0.0
    %1690 = vmatprep.subr.mxu0 0.0
    %1691 = vmatpush1.msra.mxu0 0.0
    %1692 = vmatprep.subr.mxu0 0.0
    %1693 = vmatpush1.msra.mxu0 0.0
    %1694 = vmatprep.subr.mxu0 0.0
    %1695 = vmatpush1.msra.mxu0 0.0
    %1696 = vmatprep.subr.mxu0 0.0
    %1697 = vmatpush1.msra.mxu0 0.0
    %1698 = vmatprep.subr.mxu0 0.0
    %1699 = vmatpush1.msra.mxu0 0.0
    %1700 = vmatprep.subr.mxu0 %v78
    %1701 = vmatpush1.msra.mxu0 %v76
    %1702 = vmatprep.subr.mxu0 0.0
    %1703 = vmatpush2.msra.mxu0 0.0
    %1704 = vmatprep.subr.mxu0 0.0
    %1705 = vmatpush2.msra.mxu0 0.0
    %1706 = vmatprep.subr.mxu0 0.0
    %1707 = vmatpush2.msra.mxu0 0.0
    %1708 = vmatprep.subr.mxu0 0.0
    %1709 = vmatpush2.msra.mxu0 0.0
    %1710 = vmatprep.subr.mxu0 0.0
    %1711 = vmatpush2.msra.mxu0 0.0
    %1712 = vmatprep.subr.mxu0 0.0
    %1713 = vmatpush2.msra.mxu0 0.0
    %1714 = vmatprep.subr.mxu0 0.0
    %1715 = vmatpush2.msra.mxu0 0.0
    %1716 = vmatprep.subr.mxu0 0.0
    %1717 = vmatpush2.msra.mxu0 0.0
    %1718 = vmatprep.subr.mxu0 0.0
    %1719 = vmatpush2.msra.mxu0 0.0
    %1720 = vmatprep.subr.mxu0 0.0
    %1721 = vmatpush2.msra.mxu0 0.0
    %1722 = vmatprep.subr.mxu0 0.0
    %1723 = vmatpush2.msra.mxu0 0.0
    %1724 = vmatprep.subr.mxu0 0.0
    %1725 = vmatpush2.msra.mxu0 0.0
    %1726 = vmatprep.subr.mxu0 0.0
    %1727 = vmatpush2.msra.mxu0 0.0
    %1728 = vmatprep.subr.mxu0 0.0
    %1729 = vmatpush2.msra.mxu0 0.0
    %1730 = vmatprep.subr.mxu0 0.0
    %1731 = vmatpush2.msra.mxu0 0.0
    %1732 = vmatprep.subr.mxu0 0.0
    %1733 = vmatpush2.msra.mxu0 0.0
    %1734 = vmatprep.mubr.f32.mxu0 0.0
    %1735 = vmatmul.mubr.f32.gmra.mxu0 %v1668
    %v1736 = vpop.f32.mrf.mxu0
    %v1737 = vadd.f32 %v46, %v1736
    %v1738 = vpop.f32.mrf.mxu0
    %v1739 = vadd.f32 %v50, %v1738
    %1740 = vdwg.mxu0
    %1741 = vmatprep.subr.mxu0 0.0
    %1742 = vmatpush1.msra.mxu0 0.0
    %1743 = vmatprep.subr.mxu0 0.0
    %1744 = vmatpush1.msra.mxu0 0.0
    %1745 = vmatprep.subr.mxu0 0.0
    %1746 = vmatpush1.msra.mxu0 0.0
    %1747 = vmatprep.subr.mxu0 0.0
    %1748 = vmatpush1.msra.mxu0 0.0
    %1749 = vmatprep.subr.mxu0 0.0
    %1750 = vmatpush1.msra.mxu0 0.0
    %1751 = vmatprep.subr.mxu0 0.0
    %1752 = vmatpush1.msra.mxu0 0.0
    %1753 = vmatprep.subr.mxu0 0.0
    %1754 = vmatpush1.msra.mxu0 0.0
    %1755 = vmatprep.subr.mxu0 0.0
    %1756 = vmatpush1.msra.mxu0 0.0
    %1757 = vmatprep.subr.mxu0 0.0
    %1758 = vmatpush1.msra.mxu0 0.0
    %1759 = vmatprep.subr.mxu0 0.0
    %1760 = vmatpush1.msra.mxu0 0.0
    %1761 = vmatprep.subr.mxu0 0.0
    %1762 = vmatpush1.msra.mxu0 0.0
    %1763 = vmatprep.subr.mxu0 0.0
    %1764 = vmatpush1.msra.mxu0 0.0
    %1765 = vmatprep.subr.mxu0 0.0
    %1766 = vmatpush1.msra.mxu0 0.0
    %1767 = vmatprep.subr.mxu0 0.0
    %1768 = vmatpush1.msra.mxu0 0.0
    %1769 = vmatprep.subr.mxu0 0.0
    %1770 = vmatpush1.msra.mxu0 0.0
    %1771 = vmatprep.subr.mxu0 0.0
    %1772 = vmatpush1.msra.mxu0 %v80
    %1773 = vmatprep.subr.mxu0 0.0
    %1774 = vmatpush2.msra.mxu0 0.0
    %1775 = vmatprep.subr.mxu0 0.0
    %1776 = vmatpush2.msra.mxu0 0.0
    %1777 = vmatprep.subr.mxu0 0.0
    %1778 = vmatpush2.msra.mxu0 0.0
    %1779 = vmatprep.subr.mxu0 0.0
    %1780 = vmatpush2.msra.mxu0 0.0
    %1781 = vmatprep.subr.mxu0 0.0
    %1782 = vmatpush2.msra.mxu0 0.0
    %1783 = vmatprep.subr.mxu0 0.0
    %1784 = vmatpush2.msra.mxu0 0.0
    %1785 = vmatprep.subr.mxu0 0.0
    %1786 = vmatpush2.msra.mxu0 0.0
    %1787 = vmatprep.subr.mxu0 0.0
    %1788 = vmatpush2.msra.mxu0 0.0
    %1789 = vmatprep.subr.mxu0 0.0
    %1790 = vmatpush2.msra.mxu0 0.0
    %1791 = vmatprep.subr.mxu0 0.0
    %1792 = vmatpush2.msra.mxu0 0.0
    %1793 = vmatprep.subr.mxu0 0.0
    %1794 = vmatpush2.msra.mxu0 0.0
    %1795 = vmatprep.subr.mxu0 0.0
    %1796 = vmatpush2.msra.mxu0 0.0
    %1797 = vmatprep.subr.mxu0 0.0
    %1798 = vmatpush2.msra.mxu0 0.0
    %1799 = vmatprep.subr.mxu0 0.0
    %1800 = vmatpush2.msra.mxu0 0.0
    %1801 = vmatprep.subr.mxu0 0.0
    %1802 = vmatpush2.msra.mxu0 0.0
    %1803 = vmatprep.subr.mxu0 0.0
    %1804 = vmatpush2.msra.mxu0 0.0
    %1805 = vmatprep.mubr.f32.mxu0 0.0
    %1806 = vmatmul.mubr.f32.gmra.mxu0 %v1668
    %v1807 = vpop.f32.mrf.mxu0
    %v1808 = vadd.f32 %v54, %v1807
    %v1809 = vpop.f32.mrf.mxu0
    %1810 = vdwg.mxu0
    %1811 = vmatprep.subr.mxu0 %v269
    %1812 = vmatpush1.msra.mxu0 %v268
    %1813 = vmatprep.subr.mxu0 %v266
    %1814 = vmatpush1.msra.mxu0 %v265
    %1815 = vmatprep.subr.mxu0 %v263
    %1816 = vmatpush1.msra.mxu0 %v262
    %1817 = vmatprep.subr.mxu0 %v260
    %1818 = vmatpush1.msra.mxu0 %v259
    %1819 = vmatprep.subr.mxu0 %v257
    %1820 = vmatpush1.msra.mxu0 %v256
    %1821 = vmatprep.subr.mxu0 %v254
    %1822 = vmatpush1.msra.mxu0 %v253
    %1823 = vmatprep.subr.mxu0 %v251
    %1824 = vmatpush1.msra.mxu0 %v250
    %1825 = vmatprep.subr.mxu0 %v248
    %1826 = vmatpush1.msra.mxu0 %v247
    %1827 = vmatprep.subr.mxu0 %v245
    %1828 = vmatpush1.msra.mxu0 %v244
    %1829 = vmatprep.subr.mxu0 %v242
    %1830 = vmatpush1.msra.mxu0 %v241
    %1831 = vmatprep.subr.mxu0 %v239
    %1832 = vmatpush1.msra.mxu0 %v238
    %1833 = vmatprep.subr.mxu0 %v236
    %1834 = vmatpush1.msra.mxu0 %v235
    %1835 = vmatprep.subr.mxu0 %v233
    %1836 = vmatpush1.msra.mxu0 %v232
    %1837 = vmatprep.subr.mxu0 %v230
    %1838 = vmatpush1.msra.mxu0 %v229
    %1839 = vmatprep.subr.mxu0 %v227
    %1840 = vmatpush1.msra.mxu0 %v226
    %1841 = vmatprep.subr.mxu0 %v224
    %1842 = vmatpush1.msra.mxu0 %v223
    %1843 = vmatprep.subr.mxu0 0.0
    %1844 = vmatpush2.msra.mxu0 0.0
    %1845 = vmatprep.subr.mxu0 0.0
    %1846 = vmatpush2.msra.mxu0 0.0
    %1847 = vmatprep.subr.mxu0 0.0
    %1848 = vmatpush2.msra.mxu0 0.0
    %1849 = vmatprep.subr.mxu0 0.0
    %1850 = vmatpush2.msra.mxu0 0.0
    %1851 = vmatprep.subr.mxu0 0.0
    %1852 = vmatpush2.msra.mxu0 0.0
    %1853 = vmatprep.subr.mxu0 0.0
    %1854 = vmatpush2.msra.mxu0 0.0
    %1855 = vmatprep.subr.mxu0 0.0
    %1856 = vmatpush2.msra.mxu0 0.0
    %1857 = vmatprep.subr.mxu0 0.0
    %1858 = vmatpush2.msra.mxu0 0.0
    %1859 = vmatprep.subr.mxu0 0.0
    %1860 = vmatpush2.msra.mxu0 0.0
    %1861 = vmatprep.subr.mxu0 0.0
    %1862 = vmatpush2.msra.mxu0 0.0
    %1863 = vmatprep.subr.mxu0 0.0
    %1864 = vmatpush2.msra.mxu0 0.0
    %1865 = vmatprep.subr.mxu0 0.0
    %1866 = vmatpush2.msra.mxu0 0.0
    %1867 = vmatprep.subr.mxu0 0.0
    %1868 = vmatpush2.msra.mxu0 0.0
    %1869 = vmatprep.subr.mxu0 0.0
    %1870 = vmatpush2.msra.mxu0 0.0
    %1871 = vmatprep.subr.mxu0 0.0
    %1872 = vmatpush2.msra.mxu0 0.0
    %1873 = vmatprep.subr.mxu0 0.0
    %1874 = vmatpush2.msra.mxu0 0.0
    %1875 = vmatprep.mubr.f32.mxu0 0.0
    %1876 = vmatmul.mubr.f32.gmra.mxu0 %v1664
    %v1877 = vpop.f32.mrf.mxu0
    %v1878 = vadd.f32 0.0, %v1877
    %v1879 = vpop.f32.mrf.mxu0
    %v1880 = vadd.f32 0.0, %v1879
    %1881 = vdwg.mxu0
    %1882 = vmatprep.subr.mxu0 0.0
    %1883 = vmatpush1.msra.mxu0 %v270
    %1884 = vmatprep.subr.mxu0 0.0
    %1885 = vmatpush1.msra.mxu0 %v267
    %1886 = vmatprep.subr.mxu0 0.0
    %1887 = vmatpush1.msra.mxu0 %v264
    %1888 = vmatprep.subr.mxu0 0.0
    %1889 = vmatpush1.msra.mxu0 %v261
    %1890 = vmatprep.subr.mxu0 0.0
    %1891 = vmatpush1.msra.mxu0 %v258
    %1892 = vmatprep.subr.mxu0 0.0
    %1893 = vmatpush1.msra.mxu0 %v255
    %1894 = vmatprep.subr.mxu0 0.0
    %1895 = vmatpush1.msra.mxu0 %v252
    %1896 = vmatprep.subr.mxu0 0.0
    %1897 = vmatpush1.msra.mxu0 %v249
    %1898 = vmatprep.subr.mxu0 0.0
    %1899 = vmatpush1.msra.mxu0 %v246
    %1900 = vmatprep.subr.mxu0 0.0
    %1901 = vmatpush1.msra.mxu0 %v243
    %1902 = vmatprep.subr.mxu0 0.0
    %1903 = vmatpush1.msra.mxu0 %v240
    %1904 = vmatprep.subr.mxu0 0.0
    %1905 = vmatpush1.msra.mxu0 %v237
    %1906 = vmatprep.subr.mxu0 0.0
    %1907 = vmatpush1.msra.mxu0 %v234
    %1908 = vmatprep.subr.mxu0 0.0
    %1909 = vmatpush1.msra.mxu0 %v231
    %1910 = vmatprep.subr.mxu0 0.0
    %1911 = vmatpush1.msra.mxu0 %v228
    %1912 = vmatprep.subr.mxu0 0.0
    %1913 = vmatpush1.msra.mxu0 %v225
    %1914 = vmatprep.subr.mxu0 0.0
    %1915 = vmatpush2.msra.mxu0 0.0
    %1916 = vmatprep.subr.mxu0 0.0
    %1917 = vmatpush2.msra.mxu0 0.0
    %1918 = vmatprep.subr.mxu0 0.0
    %1919 = vmatpush2.msra.mxu0 0.0
    %1920 = vmatprep.subr.mxu0 0.0
    %1921 = vmatpush2.msra.mxu0 0.0
    %1922 = vmatprep.subr.mxu0 0.0
    %1923 = vmatpush2.msra.mxu0 0.0
    %1924 = vmatprep.subr.mxu0 0.0
    %1925 = vmatpush2.msra.mxu0 0.0
    %1926 = vmatprep.subr.mxu0 0.0
    %1927 = vmatpush2.msra.mxu0 0.0
    %1928 = vmatprep.subr.mxu0 0.0
    %1929 = vmatpush2.msra.mxu0 0.0
    %1930 = vmatprep.subr.mxu0 0.0
    %1931 = vmatpush2.msra.mxu0 0.0
    %1932 = vmatprep.subr.mxu0 0.0
    %1933 = vmatpush2.msra.mxu0 0.0
    %1934 = vmatprep.subr.mxu0 0.0
    %1935 = vmatpush2.msra.mxu0 0.0
    %1936 = vmatprep.subr.mxu0 0.0
    %1937 = vmatpush2.msra.mxu0 0.0
    %1938 = vmatprep.subr.mxu0 0.0
    %1939 = vmatpush2.msra.mxu0 0.0
    %1940 = vmatprep.subr.mxu0 0.0
    %1941 = vmatpush2.msra.mxu0 0.0
    %1942 = vmatprep.subr.mxu0 0.0
    %1943 = vmatpush2.msra.mxu0 0.0
    %1944 = vmatprep.subr.mxu0 0.0
    %1945 = vmatpush2.msra.mxu0 0.0
    %1946 = vmatprep.mubr.f32.mxu0 0.0
    %1947 = vmatmul.mubr.f32.gmra.mxu0 %v1664
    %v1948 = vpop.f32.mrf.mxu0
    %v1949 = vadd.f32 0.0, %v1948
    %v1950 = vpop.f32.mrf.mxu0
    %1951 = vdwg.mxu0
    %v1952 = vadd.f32 %v1737, %v1878
    %v1953 = vxor.u32 %v1952, 2147483648
    %v1954 = vmul.f32 %v1953, 1.442695
    %v1955 = vpow.pop %v1954
    %v1956 = vadd.f32 %v1955, 1.0
    %v1957 = vrcp.pop %v1956
    %v1958 = vmul.f32 1.0, %v1957
    %v1959 = vadd.f32 %v1739, %v1880
    %v1960 = vxor.u32 %v1959, 2147483648
    %v1961 = vmul.f32 %v1960, 1.442695
    %v1962 = vpow.pop %v1961
    %v1963 = vadd.f32 %v1962, 1.0
    %v1964 = vrcp.pop %v1963
    %v1965 = vmul.f32 1.0, %v1964
    %v1966 = vadd.f32 %v1949, %v63
    %v1967 = vmul.f32 %v1958, %v1966
    %v1968 = vadd.f32 %v1808, %v1967
    %v1969 = vtanh.pop %v1968
    %v1970 = vsub.f32 %v1664, %v1969
    %v1971 = vmul.f32 %v1965, %v1970
    %v1972 = vadd.f32 %v1969, %v1971
    %s1973 = scalar_lea.vmem %s0, 48
    %v1974 = vld [vmem:[%s1973] sm:$0xff]
    %v1976 = vsel %vm71, %v1974, 0
    %1978 = vmatprep.subr.mxu0 0.0
    %1979 = vmatpush1.msra.mxu0 0.0
    %1980 = vmatprep.subr.mxu0 0.0
    %1981 = vmatpush1.msra.mxu0 0.0
    %1982 = vmatprep.subr.mxu0 0.0
    %1983 = vmatpush1.msra.mxu0 0.0
    %1984 = vmatprep.subr.mxu0 0.0
    %1985 = vmatpush1.msra.mxu0 0.0
    %1986 = vmatprep.subr.mxu0 0.0
    %1987 = vmatpush1.msra.mxu0 0.0
    %1988 = vmatprep.subr.mxu0 0.0
    %1989 = vmatpush1.msra.mxu0 0.0
    %1990 = vmatprep.subr.mxu0 0.0
    %1991 = vmatpush1.msra.mxu0 0.0
    %1992 = vmatprep.subr.mxu0 0.0
    %1993 = vmatpush1.msra.mxu0 0.0
    %1994 = vmatprep.subr.mxu0 0.0
    %1995 = vmatpush1.msra.mxu0 0.0
    %1996 = vmatprep.subr.mxu0 0.0
    %1997 = vmatpush1.msra.mxu0 0.0
    %1998 = vmatprep.subr.mxu0 0.0
    %1999 = vmatpush1.msra.mxu0 0.0
    %2000 = vmatprep.subr.mxu0 0.0
    %2001 = vmatpush1.msra.mxu0 0.0
    %2002 = vmatprep.subr.mxu0 0.0
    %2003 = vmatpush1.msra.mxu0 0.0
    %2004 = vmatprep.subr.mxu0 0.0
    %2005 = vmatpush1.msra.mxu0 0.0
    %2006 = vmatprep.subr.mxu0 0.0
    %2007 = vmatpush1.msra.mxu0 0.0
    %2008 = vmatprep.subr.mxu0 %v78
    %2009 = vmatpush1.msra.mxu0 %v76
    %2010 = vmatprep.subr.mxu0 0.0
    %2011 = vmatpush2.msra.mxu0 0.0
    %2012 = vmatprep.subr.mxu0 0.0
    %2013 = vmatpush2.msra.mxu0 0.0
    %2014 = vmatprep.subr.mxu0 0.0
    %2015 = vmatpush2.msra.mxu0 0.0
    %2016 = vmatprep.subr.mxu0 0.0
    %2017 = vmatpush2.msra.mxu0 0.0
    %2018 = vmatprep.subr.mxu0 0.0
    %2019 = vmatpush2.msra.mxu0 0.0
    %2020 = vmatprep.subr.mxu0 0.0
    %2021 = vmatpush2.msra.mxu0 0.0
    %2022 = vmatprep.subr.mxu0 0.0
    %2023 = vmatpush2.msra.mxu0 0.0
    %2024 = vmatprep.subr.mxu0 0.0
    %2025 = vmatpush2.msra.mxu0 0.0
    %2026 = vmatprep.subr.mxu0 0.0
    %2027 = vmatpush2.msra.mxu0 0.0
    %2028 = vmatprep.subr.mxu0 0.0
    %2029 = vmatpush2.msra.mxu0 0.0
    %2030 = vmatprep.subr.mxu0 0.0
    %2031 = vmatpush2.msra.mxu0 0.0
    %2032 = vmatprep.subr.mxu0 0.0
    %2033 = vmatpush2.msra.mxu0 0.0
    %2034 = vmatprep.subr.mxu0 0.0
    %2035 = vmatpush2.msra.mxu0 0.0
    %2036 = vmatprep.subr.mxu0 0.0
    %2037 = vmatpush2.msra.mxu0 0.0
    %2038 = vmatprep.subr.mxu0 0.0
    %2039 = vmatpush2.msra.mxu0 0.0
    %2040 = vmatprep.subr.mxu0 0.0
    %2041 = vmatpush2.msra.mxu0 0.0
    %2042 = vmatprep.mubr.f32.mxu0 0.0
    %2043 = vmatmul.mubr.f32.gmra.mxu0 %v1976
    %v2044 = vpop.f32.mrf.mxu0
    %v2045 = vadd.f32 %v46, %v2044
    %v2046 = vpop.f32.mrf.mxu0
    %v2047 = vadd.f32 %v50, %v2046
    %2048 = vdwg.mxu0
    %2049 = vmatprep.subr.mxu0 0.0
    %2050 = vmatpush1.msra.mxu0 0.0
    %2051 = vmatprep.subr.mxu0 0.0
    %2052 = vmatpush1.msra.mxu0 0.0
    %2053 = vmatprep.subr.mxu0 0.0
    %2054 = vmatpush1.msra.mxu0 0.0
    %2055 = vmatprep.subr.mxu0 0.0
    %2056 = vmatpush1.msra.mxu0 0.0
    %2057 = vmatprep.subr.mxu0 0.0
    %2058 = vmatpush1.msra.mxu0 0.0
    %2059 = vmatprep.subr.mxu0 0.0
    %2060 = vmatpush1.msra.mxu0 0.0
    %2061 = vmatprep.subr.mxu0 0.0
    %2062 = vmatpush1.msra.mxu0 0.0
    %2063 = vmatprep.subr.mxu0 0.0
    %2064 = vmatpush1.msra.mxu0 0.0
    %2065 = vmatprep.subr.mxu0 0.0
    %2066 = vmatpush1.msra.mxu0 0.0
    %2067 = vmatprep.subr.mxu0 0.0
    %2068 = vmatpush1.msra.mxu0 0.0
    %2069 = vmatprep.subr.mxu0 0.0
    %2070 = vmatpush1.msra.mxu0 0.0
    %2071 = vmatprep.subr.mxu0 0.0
    %2072 = vmatpush1.msra.mxu0 0.0
    %2073 = vmatprep.subr.mxu0 0.0
    %2074 = vmatpush1.msra.mxu0 0.0
    %2075 = vmatprep.subr.mxu0 0.0
    %2076 = vmatpush1.msra.mxu0 0.0
    %2077 = vmatprep.subr.mxu0 0.0
    %2078 = vmatpush1.msra.mxu0 0.0
    %2079 = vmatprep.subr.mxu0 0.0
    %2080 = vmatpush1.msra.mxu0 %v80
    %2081 = vmatprep.subr.mxu0 0.0
    %2082 = vmatpush2.msra.mxu0 0.0
    %2083 = vmatprep.subr.mxu0 0.0
    %2084 = vmatpush2.msra.mxu0 0.0
    %2085 = vmatprep.subr.mxu0 0.0
    %2086 = vmatpush2.msra.mxu0 0.0
    %2087 = vmatprep.subr.mxu0 0.0
    %2088 = vmatpush2.msra.mxu0 0.0
    %2089 = vmatprep.subr.mxu0 0.0
    %2090 = vmatpush2.msra.mxu0 0.0
    %2091 = vmatprep.subr.mxu0 0.0
    %2092 = vmatpush2.msra.mxu0 0.0
    %2093 = vmatprep.subr.mxu0 0.0
    %2094 = vmatpush2.msra.mxu0 0.0
    %2095 = vmatprep.subr.mxu0 0.0
    %2096 = vmatpush2.msra.mxu0 0.0
    %2097 = vmatprep.subr.mxu0 0.0
    %2098 = vmatpush2.msra.mxu0 0.0
    %2099 = vmatprep.subr.mxu0 0.0
    %2100 = vmatpush2.msra.mxu0 0.0
    %2101 = vmatprep.subr.mxu0 0.0
    %2102 = vmatpush2.msra.mxu0 0.0
    %2103 = vmatprep.subr.mxu0 0.0
    %2104 = vmatpush2.msra.mxu0 0.0
    %2105 = vmatprep.subr.mxu0 0.0
    %2106 = vmatpush2.msra.mxu0 0.0
    %2107 = vmatprep.subr.mxu0 0.0
    %2108 = vmatpush2.msra.mxu0 0.0
    %2109 = vmatprep.subr.mxu0 0.0
    %2110 = vmatpush2.msra.mxu0 0.0
    %2111 = vmatprep.subr.mxu0 0.0
    %2112 = vmatpush2.msra.mxu0 0.0
    %2113 = vmatprep.mubr.f32.mxu0 0.0
    %2114 = vmatmul.mubr.f32.gmra.mxu0 %v1976
    %v2115 = vpop.f32.mrf.mxu0
    %v2116 = vadd.f32 %v54, %v2115
    %v2117 = vpop.f32.mrf.mxu0
    %2118 = vdwg.mxu0
    %2119 = vmatprep.subr.mxu0 %v269
    %2120 = vmatpush1.msra.mxu0 %v268
    %2121 = vmatprep.subr.mxu0 %v266
    %2122 = vmatpush1.msra.mxu0 %v265
    %2123 = vmatprep.subr.mxu0 %v263
    %2124 = vmatpush1.msra.mxu0 %v262
    %2125 = vmatprep.subr.mxu0 %v260
    %2126 = vmatpush1.msra.mxu0 %v259
    %2127 = vmatprep.subr.mxu0 %v257
    %2128 = vmatpush1.msra.mxu0 %v256
    %2129 = vmatprep.subr.mxu0 %v254
    %2130 = vmatpush1.msra.mxu0 %v253
    %2131 = vmatprep.subr.mxu0 %v251
    %2132 = vmatpush1.msra.mxu0 %v250
    %2133 = vmatprep.subr.mxu0 %v248
    %2134 = vmatpush1.msra.mxu0 %v247
    %2135 = vmatprep.subr.mxu0 %v245
    %2136 = vmatpush1.msra.mxu0 %v244
    %2137 = vmatprep.subr.mxu0 %v242
    %2138 = vmatpush1.msra.mxu0 %v241
    %2139 = vmatprep.subr.mxu0 %v239
    %2140 = vmatpush1.msra.mxu0 %v238
    %2141 = vmatprep.subr.mxu0 %v236
    %2142 = vmatpush1.msra.mxu0 %v235
    %2143 = vmatprep.subr.mxu0 %v233
    %2144 = vmatpush1.msra.mxu0 %v232
    %2145 = vmatprep.subr.mxu0 %v230
    %2146 = vmatpush1.msra.mxu0 %v229
    %2147 = vmatprep.subr.mxu0 %v227
    %2148 = vmatpush1.msra.mxu0 %v226
    %2149 = vmatprep.subr.mxu0 %v224
    %2150 = vmatpush1.msra.mxu0 %v223
    %2151 = vmatprep.subr.mxu0 0.0
    %2152 = vmatpush2.msra.mxu0 0.0
    %2153 = vmatprep.subr.mxu0 0.0
    %2154 = vmatpush2.msra.mxu0 0.0
    %2155 = vmatprep.subr.mxu0 0.0
    %2156 = vmatpush2.msra.mxu0 0.0
    %2157 = vmatprep.subr.mxu0 0.0
    %2158 = vmatpush2.msra.mxu0 0.0
    %2159 = vmatprep.subr.mxu0 0.0
    %2160 = vmatpush2.msra.mxu0 0.0
    %2161 = vmatprep.subr.mxu0 0.0
    %2162 = vmatpush2.msra.mxu0 0.0
    %2163 = vmatprep.subr.mxu0 0.0
    %2164 = vmatpush2.msra.mxu0 0.0
    %2165 = vmatprep.subr.mxu0 0.0
    %2166 = vmatpush2.msra.mxu0 0.0
    %2167 = vmatprep.subr.mxu0 0.0
    %2168 = vmatpush2.msra.mxu0 0.0
    %2169 = vmatprep.subr.mxu0 0.0
    %2170 = vmatpush2.msra.mxu0 0.0
    %2171 = vmatprep.subr.mxu0 0.0
    %2172 = vmatpush2.msra.mxu0 0.0
    %2173 = vmatprep.subr.mxu0 0.0
    %2174 = vmatpush2.msra.mxu0 0.0
    %2175 = vmatprep.subr.mxu0 0.0
    %2176 = vmatpush2.msra.mxu0 0.0
    %2177 = vmatprep.subr.mxu0 0.0
    %2178 = vmatpush2.msra.mxu0 0.0
    %2179 = vmatprep.subr.mxu0 0.0
    %2180 = vmatpush2.msra.mxu0 0.0
    %2181 = vmatprep.subr.mxu0 0.0
    %2182 = vmatpush2.msra.mxu0 0.0
    %2183 = vmatprep.mubr.f32.mxu0 0.0
    %2184 = vmatmul.mubr.f32.gmra.mxu0 %v1972
    %v2185 = vpop.f32.mrf.mxu0
    %v2186 = vadd.f32 0.0, %v2185
    %v2187 = vpop.f32.mrf.mxu0
    %v2188 = vadd.f32 0.0, %v2187
    %2189 = vdwg.mxu0
    %2190 = vmatprep.subr.mxu0 0.0
    %2191 = vmatpush1.msra.mxu0 %v270
    %2192 = vmatprep.subr.mxu0 0.0
    %2193 = vmatpush1.msra.mxu0 %v267
    %2194 = vmatprep.subr.mxu0 0.0
    %2195 = vmatpush1.msra.mxu0 %v264
    %2196 = vmatprep.subr.mxu0 0.0
    %2197 = vmatpush1.msra.mxu0 %v261
    %2198 = vmatprep.subr.mxu0 0.0
    %2199 = vmatpush1.msra.mxu0 %v258
    %2200 = vmatprep.subr.mxu0 0.0
    %2201 = vmatpush1.msra.mxu0 %v255
    %2202 = vmatprep.subr.mxu0 0.0
    %2203 = vmatpush1.msra.mxu0 %v252
    %2204 = vmatprep.subr.mxu0 0.0
    %2205 = vmatpush1.msra.mxu0 %v249
    %2206 = vmatprep.subr.mxu0 0.0
    %2207 = vmatpush1.msra.mxu0 %v246
    %2208 = vmatprep.subr.mxu0 0.0
    %2209 = vmatpush1.msra.mxu0 %v243
    %2210 = vmatprep.subr.mxu0 0.0
    %2211 = vmatpush1.msra.mxu0 %v240
    %2212 = vmatprep.subr.mxu0 0.0
    %2213 = vmatpush1.msra.mxu0 %v237
    %2214 = vmatprep.subr.mxu0 0.0
    %2215 = vmatpush1.msra.mxu0 %v234
    %2216 = vmatprep.subr.mxu0 0.0
    %2217 = vmatpush1.msra.mxu0 %v231
    %2218 = vmatprep.subr.mxu0 0.0
    %2219 = vmatpush1.msra.mxu0 %v228
    %2220 = vmatprep.subr.mxu0 0.0
    %2221 = vmatpush1.msra.mxu0 %v225
    %2222 = vmatprep.subr.mxu0 0.0
    %2223 = vmatpush2.msra.mxu0 0.0
    %2224 = vmatprep.subr.mxu0 0.0
    %2225 = vmatpush2.msra.mxu0 0.0
    %2226 = vmatprep.subr.mxu0 0.0
    %2227 = vmatpush2.msra.mxu0 0.0
    %2228 = vmatprep.subr.mxu0 0.0
    %2229 = vmatpush2.msra.mxu0 0.0
    %2230 = vmatprep.subr.mxu0 0.0
    %2231 = vmatpush2.msra.mxu0 0.0
    %2232 = vmatprep.subr.mxu0 0.0
    %2233 = vmatpush2.msra.mxu0 0.0
    %2234 = vmatprep.subr.mxu0 0.0
    %2235 = vmatpush2.msra.mxu0 0.0
    %2236 = vmatprep.subr.mxu0 0.0
    %2237 = vmatpush2.msra.mxu0 0.0
    %2238 = vmatprep.subr.mxu0 0.0
    %2239 = vmatpush2.msra.mxu0 0.0
    %2240 = vmatprep.subr.mxu0 0.0
    %2241 = vmatpush2.msra.mxu0 0.0
    %2242 = vmatprep.subr.mxu0 0.0
    %2243 = vmatpush2.msra.mxu0 0.0
    %2244 = vmatprep.subr.mxu0 0.0
    %2245 = vmatpush2.msra.mxu0 0.0
    %2246 = vmatprep.subr.mxu0 0.0
    %2247 = vmatpush2.msra.mxu0 0.0
    %2248 = vmatprep.subr.mxu0 0.0
    %2249 = vmatpush2.msra.mxu0 0.0
    %2250 = vmatprep.subr.mxu0 0.0
    %2251 = vmatpush2.msra.mxu0 0.0
    %2252 = vmatprep.subr.mxu0 0.0
    %2253 = vmatpush2.msra.mxu0 0.0
    %2254 = vmatprep.mubr.f32.mxu0 0.0
    %2255 = vmatmul.mubr.f32.gmra.mxu0 %v1972
    %v2256 = vpop.f32.mrf.mxu0
    %v2257 = vadd.f32 0.0, %v2256
    %v2258 = vpop.f32.mrf.mxu0
    %2259 = vdwg.mxu0
    %v2260 = vadd.f32 %v2045, %v2186
    %v2261 = vxor.u32 %v2260, 2147483648
    %v2262 = vmul.f32 %v2261, 1.442695
    %v2263 = vpow.pop %v2262
    %v2264 = vadd.f32 %v2263, 1.0
    %v2265 = vrcp.pop %v2264
    %v2266 = vmul.f32 1.0, %v2265
    %v2267 = vadd.f32 %v2047, %v2188
    %v2268 = vxor.u32 %v2267, 2147483648
    %v2269 = vmul.f32 %v2268, 1.442695
    %v2270 = vpow.pop %v2269
    %v2271 = vadd.f32 %v2270, 1.0
    %v2272 = vrcp.pop %v2271
    %v2273 = vmul.f32 1.0, %v2272
    %v2274 = vadd.f32 %v2257, %v63
    %v2275 = vmul.f32 %v2266, %v2274
    %v2276 = vadd.f32 %v2116, %v2275
    %v2277 = vtanh.pop %v2276
    %v2278 = vsub.f32 %v1972, %v2277
    %v2279 = vmul.f32 %v2273, %v2278
    %v2280 = vadd.f32 %v2277, %v2279
    %s2281 = scalar_lea.vmem %s0, 56
    %v2282 = vld [vmem:[%s2281] sm:$0xff]
    %v2284 = vsel %vm71, %v2282, 0
    %2286 = vmatprep.subr.mxu0 0.0
    %2287 = vmatpush1.msra.mxu0 0.0
    %2288 = vmatprep.subr.mxu0 0.0
    %2289 = vmatpush1.msra.mxu0 0.0
    %2290 = vmatprep.subr.mxu0 0.0
    %2291 = vmatpush1.msra.mxu0 0.0
    %2292 = vmatprep.subr.mxu0 0.0
    %2293 = vmatpush1.msra.mxu0 0.0
    %2294 = vmatprep.subr.mxu0 0.0
    %2295 = vmatpush1.msra.mxu0 0.0
    %2296 = vmatprep.subr.mxu0 0.0
    %2297 = vmatpush1.msra.mxu0 0.0
    %2298 = vmatprep.subr.mxu0 0.0
    %2299 = vmatpush1.msra.mxu0 0.0
    %2300 = vmatprep.subr.mxu0 0.0
    %2301 = vmatpush1.msra.mxu0 0.0
    %2302 = vmatprep.subr.mxu0 0.0
    %2303 = vmatpush1.msra.mxu0 0.0
    %2304 = vmatprep.subr.mxu0 0.0
    %2305 = vmatpush1.msra.mxu0 0.0
    %2306 = vmatprep.subr.mxu0 0.0
    %2307 = vmatpush1.msra.mxu0 0.0
    %2308 = vmatprep.subr.mxu0 0.0
    %2309 = vmatpush1.msra.mxu0 0.0
    %2310 = vmatprep.subr.mxu0 0.0
    %2311 = vmatpush1.msra.mxu0 0.0
    %2312 = vmatprep.subr.mxu0 0.0
    %2313 = vmatpush1.msra.mxu0 0.0
    %2314 = vmatprep.subr.mxu0 0.0
    %2315 = vmatpush1.msra.mxu0 0.0
    %2316 = vmatprep.subr.mxu0 %v78
    %2317 = vmatpush1.msra.mxu0 %v76
    %2318 = vmatprep.subr.mxu0 0.0
    %2319 = vmatpush2.msra.mxu0 0.0
    %2320 = vmatprep.subr.mxu0 0.0
    %2321 = vmatpush2.msra.mxu0 0.0
    %2322 = vmatprep.subr.mxu0 0.0
    %2323 = vmatpush2.msra.mxu0 0.0
    %2324 = vmatprep.subr.mxu0 0.0
    %2325 = vmatpush2.msra.mxu0 0.0
    %2326 = vmatprep.subr.mxu0 0.0
    %2327 = vmatpush2.msra.mxu0 0.0
    %2328 = vmatprep.subr.mxu0 0.0
    %2329 = vmatpush2.msra.mxu0 0.0
    %2330 = vmatprep.subr.mxu0 0.0
    %2331 = vmatpush2.msra.mxu0 0.0
    %2332 = vmatprep.subr.mxu0 0.0
    %2333 = vmatpush2.msra.mxu0 0.0
    %2334 = vmatprep.subr.mxu0 0.0
    %2335 = vmatpush2.msra.mxu0 0.0
    %2336 = vmatprep.subr.mxu0 0.0
    %2337 = vmatpush2.msra.mxu0 0.0
    %2338 = vmatprep.subr.mxu0 0.0
    %2339 = vmatpush2.msra.mxu0 0.0
    %2340 = vmatprep.subr.mxu0 0.0
    %2341 = vmatpush2.msra.mxu0 0.0
    %2342 = vmatprep.subr.mxu0 0.0
    %2343 = vmatpush2.msra.mxu0 0.0
    %2344 = vmatprep.subr.mxu0 0.0
    %2345 = vmatpush2.msra.mxu0 0.0
    %2346 = vmatprep.subr.mxu0 0.0
    %2347 = vmatpush2.msra.mxu0 0.0
    %2348 = vmatprep.subr.mxu0 0.0
    %2349 = vmatpush2.msra.mxu0 0.0
    %2350 = vmatprep.mubr.f32.mxu0 0.0
    %2351 = vmatmul.mubr.f32.gmra.mxu0 %v2284
    %v2352 = vpop.f32.mrf.mxu0
    %v2353 = vadd.f32 %v46, %v2352
    %v2354 = vpop.f32.mrf.mxu0
    %v2355 = vadd.f32 %v50, %v2354
    %2356 = vdwg.mxu0
    %2357 = vmatprep.subr.mxu0 0.0
    %2358 = vmatpush1.msra.mxu0 0.0
    %2359 = vmatprep.subr.mxu0 0.0
    %2360 = vmatpush1.msra.mxu0 0.0
    %2361 = vmatprep.subr.mxu0 0.0
    %2362 = vmatpush1.msra.mxu0 0.0
    %2363 = vmatprep.subr.mxu0 0.0
    %2364 = vmatpush1.msra.mxu0 0.0
    %2365 = vmatprep.subr.mxu0 0.0
    %2366 = vmatpush1.msra.mxu0 0.0
    %2367 = vmatprep.subr.mxu0 0.0
    %2368 = vmatpush1.msra.mxu0 0.0
    %2369 = vmatprep.subr.mxu0 0.0
    %2370 = vmatpush1.msra.mxu0 0.0
    %2371 = vmatprep.subr.mxu0 0.0
    %2372 = vmatpush1.msra.mxu0 0.0
    %2373 = vmatprep.subr.mxu0 0.0
    %2374 = vmatpush1.msra.mxu0 0.0
    %2375 = vmatprep.subr.mxu0 0.0
    %2376 = vmatpush1.msra.mxu0 0.0
    %2377 = vmatprep.subr.mxu0 0.0
    %2378 = vmatpush1.msra.mxu0 0.0
    %2379 = vmatprep.subr.mxu0 0.0
    %2380 = vmatpush1.msra.mxu0 0.0
    %2381 = vmatprep.subr.mxu0 0.0
    %2382 = vmatpush1.msra.mxu0 0.0
    %2383 = vmatprep.subr.mxu0 0.0
    %2384 = vmatpush1.msra.mxu0 0.0
    %2385 = vmatprep.subr.mxu0 0.0
    %2386 = vmatpush1.msra.mxu0 0.0
    %2387 = vmatprep.subr.mxu0 0.0
    %2388 = vmatpush1.msra.mxu0 %v80
    %2389 = vmatprep.subr.mxu0 0.0
    %2390 = vmatpush2.msra.mxu0 0.0
    %2391 = vmatprep.subr.mxu0 0.0
    %2392 = vmatpush2.msra.mxu0 0.0
    %2393 = vmatprep.subr.mxu0 0.0
    %2394 = vmatpush2.msra.mxu0 0.0
    %2395 = vmatprep.subr.mxu0 0.0
    %2396 = vmatpush2.msra.mxu0 0.0
    %2397 = vmatprep.subr.mxu0 0.0
    %2398 = vmatpush2.msra.mxu0 0.0
    %2399 = vmatprep.subr.mxu0 0.0
    %2400 = vmatpush2.msra.mxu0 0.0
    %2401 = vmatprep.subr.mxu0 0.0
    %2402 = vmatpush2.msra.mxu0 0.0
    %2403 = vmatprep.subr.mxu0 0.0
    %2404 = vmatpush2.msra.mxu0 0.0
    %2405 = vmatprep.subr.mxu0 0.0
    %2406 = vmatpush2.msra.mxu0 0.0
    %2407 = vmatprep.subr.mxu0 0.0
    %2408 = vmatpush2.msra.mxu0 0.0
    %2409 = vmatprep.subr.mxu0 0.0
    %2410 = vmatpush2.msra.mxu0 0.0
    %2411 = vmatprep.subr.mxu0 0.0
    %2412 = vmatpush2.msra.mxu0 0.0
    %2413 = vmatprep.subr.mxu0 0.0
    %2414 = vmatpush2.msra.mxu0 0.0
    %2415 = vmatprep.subr.mxu0 0.0
    %2416 = vmatpush2.msra.mxu0 0.0
    %2417 = vmatprep.subr.mxu0 0.0
    %2418 = vmatpush2.msra.mxu0 0.0
    %2419 = vmatprep.subr.mxu0 0.0
    %2420 = vmatpush2.msra.mxu0 0.0
    %2421 = vmatprep.mubr.f32.mxu0 0.0
    %2422 = vmatmul.mubr.f32.gmra.mxu0 %v2284
    %v2423 = vpop.f32.mrf.mxu0
    %v2424 = vadd.f32 %v54, %v2423
    %v2425 = vpop.f32.mrf.mxu0
    %2426 = vdwg.mxu0
    %2427 = vmatprep.subr.mxu0 %v269
    %2428 = vmatpush1.msra.mxu0 %v268
    %2429 = vmatprep.subr.mxu0 %v266
    %2430 = vmatpush1.msra.mxu0 %v265
    %2431 = vmatprep.subr.mxu0 %v263
    %2432 = vmatpush1.msra.mxu0 %v262
    %2433 = vmatprep.subr.mxu0 %v260
    %2434 = vmatpush1.msra.mxu0 %v259
    %2435 = vmatprep.subr.mxu0 %v257
    %2436 = vmatpush1.msra.mxu0 %v256
    %2437 = vmatprep.subr.mxu0 %v254
    %2438 = vmatpush1.msra.mxu0 %v253
    %2439 = vmatprep.subr.mxu0 %v251
    %2440 = vmatpush1.msra.mxu0 %v250
    %2441 = vmatprep.subr.mxu0 %v248
    %2442 = vmatpush1.msra.mxu0 %v247
    %2443 = vmatprep.subr.mxu0 %v245
    %2444 = vmatpush1.msra.mxu0 %v244
    %2445 = vmatprep.subr.mxu0 %v242
    %2446 = vmatpush1.msra.mxu0 %v241
    %2447 = vmatprep.subr.mxu0 %v239
    %2448 = vmatpush1.msra.mxu0 %v238
    %2449 = vmatprep.subr.mxu0 %v236
    %2450 = vmatpush1.msra.mxu0 %v235
    %2451 = vmatprep.subr.mxu0 %v233
    %2452 = vmatpush1.msra.mxu0 %v232
    %2453 = vmatprep.subr.mxu0 %v230
    %2454 = vmatpush1.msra.mxu0 %v229
    %2455 = vmatprep.subr.mxu0 %v227
    %2456 = vmatpush1.msra.mxu0 %v226
    %2457 = vmatprep.subr.mxu0 %v224
    %2458 = vmatpush1.msra.mxu0 %v223
    %2459 = vmatprep.subr.mxu0 0.0
    %2460 = vmatpush2.msra.mxu0 0.0
    %2461 = vmatprep.subr.mxu0 0.0
    %2462 = vmatpush2.msra.mxu0 0.0
    %2463 = vmatprep.subr.mxu0 0.0
    %2464 = vmatpush2.msra.mxu0 0.0
    %2465 = vmatprep.subr.mxu0 0.0
    %2466 = vmatpush2.msra.mxu0 0.0
    %2467 = vmatprep.subr.mxu0 0.0
    %2468 = vmatpush2.msra.mxu0 0.0
    %2469 = vmatprep.subr.mxu0 0.0
    %2470 = vmatpush2.msra.mxu0 0.0
    %2471 = vmatprep.subr.mxu0 0.0
    %2472 = vmatpush2.msra.mxu0 0.0
    %2473 = vmatprep.subr.mxu0 0.0
    %2474 = vmatpush2.msra.mxu0 0.0
    %2475 = vmatprep.subr.mxu0 0.0
    %2476 = vmatpush2.msra.mxu0 0.0
    %2477 = vmatprep.subr.mxu0 0.0
    %2478 = vmatpush2.msra.mxu0 0.0
    %2479 = vmatprep.subr.mxu0 0.0
    %2480 = vmatpush2.msra.mxu0 0.0
    %2481 = vmatprep.subr.mxu0 0.0
    %2482 = vmatpush2.msra.mxu0 0.0
    %2483 = vmatprep.subr.mxu0 0.0
    %2484 = vmatpush2.msra.mxu0 0.0
    %2485 = vmatprep.subr.mxu0 0.0
    %2486 = vmatpush2.msra.mxu0 0.0
    %2487 = vmatprep.subr.mxu0 0.0
    %2488 = vmatpush2.msra.mxu0 0.0
    %2489 = vmatprep.subr.mxu0 0.0
    %2490 = vmatpush2.msra.mxu0 0.0
    %2491 = vmatprep.mubr.f32.mxu0 0.0
    %2492 = vmatmul.mubr.f32.gmra.mxu0 %v2280
    %v2493 = vpop.f32.mrf.mxu0
    %v2494 = vadd.f32 0.0, %v2493
    %v2495 = vpop.f32.mrf.mxu0
    %v2496 = vadd.f32 0.0, %v2495
    %2497 = vdwg.mxu0
    %2498 = vmatprep.subr.mxu0 0.0
    %2499 = vmatpush1.msra.mxu0 %v270
    %2500 = vmatprep.subr.mxu0 0.0
    %2501 = vmatpush1.msra.mxu0 %v267
    %2502 = vmatprep.subr.mxu0 0.0
    %2503 = vmatpush1.msra.mxu0 %v264
    %2504 = vmatprep.subr.mxu0 0.0
    %2505 = vmatpush1.msra.mxu0 %v261
    %2506 = vmatprep.subr.mxu0 0.0
    %2507 = vmatpush1.msra.mxu0 %v258
    %2508 = vmatprep.subr.mxu0 0.0
    %2509 = vmatpush1.msra.mxu0 %v255
    %2510 = vmatprep.subr.mxu0 0.0
    %2511 = vmatpush1.msra.mxu0 %v252
    %2512 = vmatprep.subr.mxu0 0.0
    %2513 = vmatpush1.msra.mxu0 %v249
    %2514 = vmatprep.subr.mxu0 0.0
    %2515 = vmatpush1.msra.mxu0 %v246
    %2516 = vmatprep.subr.mxu0 0.0
    %2517 = vmatpush1.msra.mxu0 %v243
    %2518 = vmatprep.subr.mxu0 0.0
    %2519 = vmatpush1.msra.mxu0 %v240
    %2520 = vmatprep.subr.mxu0 0.0
    %2521 = vmatpush1.msra.mxu0 %v237
    %2522 = vmatprep.subr.mxu0 0.0
    %2523 = vmatpush1.msra.mxu0 %v234
    %2524 = vmatprep.subr.mxu0 0.0
    %2525 = vmatpush1.msra.mxu0 %v231
    %2526 = vmatprep.subr.mxu0 0.0
    %2527 = vmatpush1.msra.mxu0 %v228
    %2528 = vmatprep.subr.mxu0 0.0
    %2529 = vmatpush1.msra.mxu0 %v225
    %2530 = vmatprep.subr.mxu0 0.0
    %2531 = vmatpush2.msra.mxu0 0.0
    %2532 = vmatprep.subr.mxu0 0.0
    %2533 = vmatpush2.msra.mxu0 0.0
    %2534 = vmatprep.subr.mxu0 0.0
    %2535 = vmatpush2.msra.mxu0 0.0
    %2536 = vmatprep.subr.mxu0 0.0
    %2537 = vmatpush2.msra.mxu0 0.0
    %2538 = vmatprep.subr.mxu0 0.0
    %2539 = vmatpush2.msra.mxu0 0.0
    %2540 = vmatprep.subr.mxu0 0.0
    %2541 = vmatpush2.msra.mxu0 0.0
    %2542 = vmatprep.subr.mxu0 0.0
    %2543 = vmatpush2.msra.mxu0 0.0
    %2544 = vmatprep.subr.mxu0 0.0
    %2545 = vmatpush2.msra.mxu0 0.0
    %2546 = vmatprep.subr.mxu0 0.0
    %2547 = vmatpush2.msra.mxu0 0.0
    %2548 = vmatprep.subr.mxu0 0.0
    %2549 = vmatpush2.msra.mxu0 0.0
    %2550 = vmatprep.subr.mxu0 0.0
    %2551 = vmatpush2.msra.mxu0 0.0
    %2552 = vmatprep.subr.mxu0 0.0
    %2553 = vmatpush2.msra.mxu0 0.0
    %2554 = vmatprep.subr.mxu0 0.0
    %2555 = vmatpush2.msra.mxu0 0.0
    %2556 = vmatprep.subr.mxu0 0.0
    %2557 = vmatpush2.msra.mxu0 0.0
    %2558 = vmatprep.subr.mxu0 0.0
    %2559 = vmatpush2.msra.mxu0 0.0
    %2560 = vmatprep.subr.mxu0 0.0
    %2561 = vmatpush2.msra.mxu0 0.0
    %2562 = vmatprep.mubr.f32.mxu0 0.0
    %2563 = vmatmul.mubr.f32.gmra.mxu0 %v2280
    %v2564 = vpop.f32.mrf.mxu0
    %v2565 = vadd.f32 0.0, %v2564
    %v2566 = vpop.f32.mrf.mxu0
    %2567 = vdwg.mxu0
    %v2568 = vadd.f32 %v2353, %v2494
    %v2569 = vxor.u32 %v2568, 2147483648
    %v2570 = vmul.f32 %v2569, 1.442695
    %v2571 = vpow.pop %v2570
    %v2572 = vadd.f32 %v2571, 1.0
    %v2573 = vrcp.pop %v2572
    %v2574 = vmul.f32 1.0, %v2573
    %v2575 = vadd.f32 %v2355, %v2496
    %v2576 = vxor.u32 %v2575, 2147483648
    %v2577 = vmul.f32 %v2576, 1.442695
    %v2578 = vpow.pop %v2577
    %v2579 = vadd.f32 %v2578, 1.0
    %v2580 = vrcp.pop %v2579
    %v2581 = vmul.f32 1.0, %v2580
    %v2582 = vadd.f32 %v2565, %v63
    %v2583 = vmul.f32 %v2574, %v2582
    %v2584 = vadd.f32 %v2424, %v2583
    %v2585 = vtanh.pop %v2584
    %v2586 = vsub.f32 %v2280, %v2585
    %v2587 = vmul.f32 %v2581, %v2586
    %v2588 = vadd.f32 %v2585, %v2587
    %2589 = vst [vmem:[#allocation5] sm:$0xff] %v2588
    // Predicated region
    $region30: #{tpu_custom_call.1} parent=1 // pred_check
      _
    $region31: #{tpu_custom_call.1} parent=1 // pred_check_branch
      %2591 = sbr.rel (0) target = $region33
    $region32: #{tpu_custom_call.1} parent=1 // pred_region
      %s2593 = ssub.s32 128, 128
      %2594 = vsyncadd [#allocation4], %s2593
      %s2596 = sshll.u32 [#allocation5], 4
      %s2597 = int_to_ptr.vmem [resolvable:$true] %s2596
      %2599 = dma.vmem_to_hbm [thread:$0]  %s2597, 128, %s5, [#allocation4]
    $region33: #{tpu_custom_call.1} parent=1 // pred_fallthru
      _
    // Predicated region
    $region34: #{tpu_custom_call.1} parent=1 // pred_check
      _
    $region35: #{tpu_custom_call.1} parent=1 // pred_check_branch
      %2601 = sbr.rel (0) target = $region37
    $region36: #{tpu_custom_call.1} parent=1 // pred_region
      %2602 = dma.done [#allocation4], 128
    $region37: #{tpu_custom_call.1} parent=1 // pred_fallthru
      _
    %2603 = vsyncpa [#allocation3], 1
    %2604 = vsyncpa [#allocation4], 1

</llo_original>
